<compile_context>
chip_gen: v7x
topology: tpu7x:2x2x1
jax: 0.10.0
libtpu: 0.0.40
codegen_flags: <defaults>
</compile_context>

<pallas_src>
import functools
import math

import jax
import jax.numpy as jnp
from jax.experimental import pallas as pl
from jax.experimental.pallas import tpu as pltpu

_LN_EPS = 1e-5            # PyTorch nn.LayerNorm default
_NEG_INF = -1e9
_VMEM_LIMIT = 32 * 1024 * 1024   # explicit scoped-VMEM budget (safe on v5e/v6e/v7x)


# ----------------------- in-kernel building blocks --------------------------

def _layer_norm(z, g, b):
    mu = jnp.mean(z, axis=-1, keepdims=True)
    var = jnp.mean((z - mu) ** 2, axis=-1, keepdims=True)
    return (z - mu) * jax.lax.rsqrt(var + _LN_EPS) * g + b


def _mha(q, k, v, bias, wo, bo, *, H, Dh):
    """Multi-head attention core for ONE batch element (inside a Pallas kernel).

    q: (Sq, D) f32 (scale already folded in), k/v: (Sk, D) f32,
    bias: additive mask bias broadcastable to (Sq, Sk), computed once outside,
    wo: (D, D) bf16, bo: (1, D) f32.  Returns (Sq, D) f32.
    """
    qb = q.astype(jnp.bfloat16)
    kb = k.astype(jnp.bfloat16)
    vb = v.astype(jnp.bfloat16)
    ctxs = []
    for h in range(H):                      # static head loop; Sq/Sk live ranges are per-head
        qh = qb[:, h * Dh:(h + 1) * Dh]
        kh = kb[:, h * Dh:(h + 1) * Dh]
        vh = vb[:, h * Dh:(h + 1) * Dh]
        # contract along Dh of both operands (A @ B^T) without an explicit transpose
        s = jax.lax.dot_general(qh, kh, (((1,), (1,)), ((), ())),
                                preferred_element_type=jnp.float32)      # (Sq, Sk) f32
        s = s + bias                                                     # hoisted mask bias
        s = s - jnp.max(s, axis=-1, keepdims=True)
        e = jnp.exp(s)
        p = e * pl.reciprocal(jnp.sum(e, axis=-1, keepdims=True), approx=True)
        ctxs.append(jnp.dot(p.astype(jnp.bfloat16), vh,
                            preferred_element_type=jnp.float32))         # (Sq, Dh)
    ctx = jnp.concatenate(ctxs, axis=-1)                                 # (Sq, D) lane-contiguous
    # single full-depth (K = D) output projection
    return jnp.dot(ctx.astype(jnp.bfloat16), wo,
                   preferred_element_type=jnp.float32) + bo


def _ffn(x, w1, b1, w2, b2):
    h = jnp.maximum(jnp.dot(x.astype(jnp.bfloat16), w1,
                            preferred_element_type=jnp.float32) + b1, 0.0)
    return jnp.dot(h.astype(jnp.bfloat16), w2,
                   preferred_element_type=jnp.float32) + b2


# ------------------------------ fused kernels -------------------------------

def _encoder_layer_kernel(x_ref, keep_ref,
                          wqkv_ref, bqkv_ref, wo_ref, bo_ref,
                          ln1g_ref, ln1b_ref,
                          w1_ref, b1_ref, w2_ref, b2_ref,
                          ln2g_ref, ln2b_ref,
                          o_ref, *, H, Dh):
    D = H * Dh
    x = x_ref[0]                                        # (S, D) f32, this batch only
    keep = keep_ref[0]                                  # (1, S) f32, key-side padding keep
    bias = jnp.where(keep > 0.0, 0.0, _NEG_INF)         # additive bias, computed once

    qkv = jnp.dot(x.astype(jnp.bfloat16), wqkv_ref[...],
                  preferred_element_type=jnp.float32) + bqkv_ref[...]    # (S, 3D)
    attn = _mha(qkv[:, :D], qkv[:, D:2 * D], qkv[:, 2 * D:], bias,
                wo_ref[...], bo_ref[...], H=H, Dh=Dh)
    x1 = _layer_norm(x + attn, ln1g_ref[...], ln1b_ref[...])
    ff = _ffn(x1, w1_ref[...], b1_ref[...], w2_ref[...], b2_ref[...])
    o_ref[0] = _layer_norm(x1 + ff, ln2g_ref[...], ln2b_ref[...])


def _decoder_layer_kernel(x_ref, enc_ref, tkeep_ref, skeep_ref,
                          s_wqkv_ref, s_bqkv_ref, s_wo_ref, s_bo_ref,
                          ln1g_ref, ln1b_ref,
                          c_wq_ref, c_bq_ref, c_wkv_ref, c_bkv_ref, c_wo_ref, c_bo_ref,
                          ln2g_ref, ln2b_ref,
                          w1_ref, b1_ref, w2_ref, b2_ref,
                          ln3g_ref, ln3b_ref,
                          o_ref, *, H, Dh):
    D = H * Dh
    x = x_ref[0]                                        # (St, D) f32
    enc = enc_ref[0]                                    # (Ss, D) f32
    St = x.shape[0]

    # self-attn mask: (tgt != 0)[query] AND causal(col <= row); generated in-kernel
    tkeep_col = tkeep_ref[0]                            # (St, 1) f32
    qpos = jax.lax.broadcasted_iota(jnp.int32, (St, St), 0)
    kpos = jax.lax.broadcasted_iota(jnp.int32, (St, St), 1)
    self_bias = jnp.where((kpos <= qpos) & (tkeep_col > 0.0), 0.0, _NEG_INF)

    # cross-attn mask: (src != 0)[key]
    skeep = skeep_ref[0]                                # (1, Ss) f32
    cross_bias = jnp.where(skeep > 0.0, 0.0, _NEG_INF)

    # masked self attention
    qkv = jnp.dot(x.astype(jnp.bfloat16), s_wqkv_ref[...],
                  preferred_element_type=jnp.float32) + s_bqkv_ref[...]
    sa = _mha(qkv[:, :D], qkv[:, D:2 * D], qkv[:, 2 * D:], self_bias,
              s_wo_ref[...], s_bo_ref[...], H=H, Dh=Dh)
    x1 = _layer_norm(x + sa, ln1g_ref[...], ln1b_ref[...])

    # cross attention (queries from decoder stream, keys/values from encoder output)
    q = jnp.dot(x1.astype(jnp.bfloat16), c_wq_ref[...],
                preferred_element_type=jnp.float32) + c_bq_ref[...]
    kv = jnp.dot(enc.astype(jnp.bfloat16), c_wkv_ref[...],
                 preferred_element_type=jnp.float32) + c_bkv_ref[...]
    ca = _mha(q, kv[:, :D], kv[:, D:], cross_bias,
              c_wo_ref[...], c_bo_ref[...], H=H, Dh=Dh)
    x2 = _layer_norm(x1 + ca, ln2g_ref[...], ln2b_ref[...])

    # feed forward
    ff = _ffn(x2, w1_ref[...], b1_ref[...], w2_ref[...], b2_ref[...])
    o_ref[0] = _layer_norm(x2 + ff, ln3g_ref[...], ln3b_ref[...])


# ------------------------------ kernel wrappers ------------------------------

def _resident(a):
    """Full-array block, same block index every grid step (stays resident in VMEM)."""
    return pl.BlockSpec(a.shape, lambda b, _n=a.ndim: (0,) * _n)


def encoder_layer(x, src_keep_row, p, *, H, Dh):
    B, S, D = x.shape
    weights = (p["wqkv"], p["bqkv"], p["wo"], p["bo"],
               p["ln1_g"], p["ln1_b"],
               p["w1"], p["b1"], p["w2"], p["b2"],
               p["ln2_g"], p["ln2_b"])
    kernel = functools.partial(_encoder_layer_kernel, H=H, Dh=Dh)
    return pl.pallas_call(
        kernel,
        out_shape=jax.ShapeDtypeStruct((B, S, D), jnp.float32),
        grid=(B,),
        in_specs=[pl.BlockSpec((1, S, D), lambda b: (b, 0, 0)),
                  pl.BlockSpec((1, 1, S), lambda b: (b, 0, 0))]
                 + [_resident(w) for w in weights],
        out_specs=pl.BlockSpec((1, S, D), lambda b: (b, 0, 0)),
        compiler_params=pltpu.CompilerParams(
            dimension_semantics=("parallel",),
            vmem_limit_bytes=_VMEM_LIMIT),
    )(x, src_keep_row, *weights)


def decoder_layer(x, enc, tgt_keep_col, src_keep_row, p, *, H, Dh):
    B, St, D = x.shape
    Ss = enc.shape[1]
    weights = (p["s_wqkv"], p["s_bqkv"], p["s_wo"], p["s_bo"],
               p["ln1_g"], p["ln1_b"],
               p["c_wq"], p["c_bq"], p["c_wkv"], p["c_bkv"], p["c_wo"], p["c_bo"],
               p["ln2_g"], p["ln2_b"],
               p["w1"], p["b1"], p["w2"], p["b2"],
               p["ln3_g"], p["ln3_b"])
    kernel = functools.partial(_decoder_layer_kernel, H=H, Dh=Dh)
    return pl.pallas_call(
        kernel,
        out_shape=jax.ShapeDtypeStruct((B, St, D), jnp.float32),
        grid=(B,),
        in_specs=[pl.BlockSpec((1, St, D), lambda b: (b, 0, 0)),
                  pl.BlockSpec((1, Ss, D), lambda b: (b, 0, 0)),
                  pl.BlockSpec((1, St, 1), lambda b: (b, 0, 0)),
                  pl.BlockSpec((1, 1, Ss), lambda b: (b, 0, 0))]
                 + [_resident(w) for w in weights],
        out_specs=pl.BlockSpec((1, St, D), lambda b: (b, 0, 0)),
        compiler_params=pltpu.CompilerParams(
            dimension_semantics=("parallel",),
            vmem_limit_bytes=_VMEM_LIMIT),
    )(x, enc, tgt_keep_col, src_keep_row, *weights)


# --------------------------- model glue (plain JAX) --------------------------

def transformer_forward(params, src, tgt, *, num_heads):
    b, s = src.shape
    d = params["enc_emb"].shape[1]
    dh = d // num_heads

    # tiny keep vectors only (no (B*S, S) f32 masks materialized in HBM)
    src_keep_row = (src != 0).astype(jnp.float32)[:, None, :]   # (B, 1, S)  key-side keep
    tgt_keep_col = (tgt != 0).astype(jnp.float32)[:, :, None]   # (B, St, 1) query-side keep

    # embeddings (gather stays in plain JAX); reference quirk: decoder embeds `src`
    src_emb = jnp.take(params["enc_emb"], src, axis=0)          # (B, S, D)
    tgt_emb = jnp.take(params["dec_emb"], src, axis=0)          # quirk kept

    # positional encoding only on the encoder side; add fused with embedding path
    enc_x = src_emb + params["pe"][None, :s, :]

    for lp in params["encoder_layers"]:
        enc_x = encoder_layer(enc_x, src_keep_row, lp, H=num_heads, Dh=dh)

    dec_x = tgt_emb
    for lp in params["decoder_layers"]:
        dec_x = decoder_layer(dec_x, enc_x, tgt_keep_col, src_keep_row, lp,
                              H=num_heads, Dh=dh)
        break  # reference breaks after the first decoder layer
    return dec_x


# --------------------------- parameter creation ------------------------------

def init_params(key, src_vocab, tgt_vocab, num_layers, max_seq_len, d_model, d_ff):
    keys = iter(jax.random.split(key, 4096))

    def w(din, dout, scale=0.05):
        return jax.random.normal(next(keys), (din, dout), jnp.float32) * scale

    def attn_params():
        return dict(
            wq=w(d_model, d_model), bq=jnp.zeros((d_model,), jnp.float32),
            wk=w(d_model, d_model), bk=jnp.zeros((d_model,), jnp.float32),
            wv=w(d_model, d_model), bv=jnp.zeros((d_model,), jnp.float32),
            wo=w(d_model, d_model), bo=jnp.zeros((d_model,), jnp.float32),
        )

    def enc_layer_params():
        return dict(
            attn=attn_params(),
            w1=w(d_model, d_ff), b1=jnp.zeros((d_ff,), jnp.float32),
            w2=w(d_ff, d_model), b2=jnp.zeros((d_model,), jnp.float32),
            ln1_g=jnp.ones((d_model,), jnp.float32), ln1_b=jnp.zeros((d_model,), jnp.float32),
            ln2_g=jnp.ones((d_model,), jnp.float32), ln2_b=jnp.zeros((d_model,), jnp.float32),
        )

    def dec_layer_params():
        return dict(
            self_attn=attn_params(),
            cross_attn=attn_params(),
            w1=w(d_model, d_ff), b1=jnp.zeros((d_ff,), jnp.float32),
            w2=w(d_ff, d_model), b2=jnp.zeros((d_model,), jnp.float32),
            ln1_g=jnp.ones((d_model,), jnp.float32), ln1_b=jnp.zeros((d_model,), jnp.float32),
            ln2_g=jnp.ones((d_model,), jnp.float32), ln2_b=jnp.zeros((d_model,), jnp.float32),
            ln3_g=jnp.ones((d_model,), jnp.float32), ln3_b=jnp.zeros((d_model,), jnp.float32),
        )

    # sinusoidal positional encoding table
    pos = jnp.arange(max_seq_len, dtype=jnp.float32)[:, None]
    div = jnp.exp(jnp.arange(0, d_model, 2, dtype=jnp.float32)
                  * (-math.log(10000.0) / d_model))
    pe = jnp.zeros((max_seq_len, d_model), jnp.float32)
    pe = pe.at[:, 0::2].set(jnp.sin(pos * div))
    pe = pe.at[:, 1::2].set(jnp.cos(pos * div))

    return dict(
        enc_emb=jax.random.normal(next(keys), (src_vocab, d_model), jnp.float32),
        dec_emb=jax.random.normal(next(keys), (tgt_vocab, d_model), jnp.float32),
        pe=pe,
        encoder_layers=[enc_layer_params() for _ in range(num_layers)],
        decoder_layers=[dec_layer_params() for _ in range(num_layers)],
    )


def fuse_params(params, num_heads):
    """One-time prep: concat Q/K/V weights, fold 1/sqrt(Dh) into Q, cast matmul
    weights to bf16 (f32 accumulation in-kernel), reshape biases/LN to (1, N)."""
    d = params["enc_emb"].shape[1]
    scale = 1.0 / math.sqrt(d // num_heads)

    def row(v):
        return v.reshape(1, -1)

    def bf16(m):
        return m.astype(jnp.bfloat16)

    def fuse_self(a):
        return dict(
            wqkv=bf16(jnp.concatenate([a["wq"] * scale, a["wk"], a["wv"]], axis=1)),
            bqkv=row(jnp.concatenate([a["bq"] * scale, a["bk"], a["bv"]])),
            wo=bf16(a["wo"]), bo=row(a["bo"]),
        )

    def fuse_cross(a):
        return dict(
            wq=bf16(a["wq"] * scale), bq=row(a["bq"] * scale),
            wkv=bf16(jnp.concatenate([a["wk"], a["wv"]], axis=1)),
            bkv=row(jnp.concatenate([a["bk"], a["bv"]])),
            wo=bf16(a["wo"]), bo=row(a["bo"]),
        )

    enc_layers = []
    for lp in params["encoder_layers"]:
        fl = fuse_self(lp["attn"])
        fl.update(w1=bf16(lp["w1"]), b1=row(lp["b1"]),
                  w2=bf16(lp["w2"]), b2=row(lp["b2"]),
                  ln1_g=row(lp["ln1_g"]), ln1_b=row(lp["ln1_b"]),
                  ln2_g=row(lp["ln2_g"]), ln2_b=row(lp["ln2_b"]))
        enc_layers.append(fl)

    dec_layers = []
    for lp in params["decoder_layers"]:
        sa = fuse_self(lp["self_attn"])
        ca = fuse_cross(lp["cross_attn"])
        dec_layers.append(dict(
            s_wqkv=sa["wqkv"], s_bqkv=sa["bqkv"], s_wo=sa["wo"], s_bo=sa["bo"],
            c_wq=ca["wq"], c_bq=ca["bq"], c_wkv=ca["wkv"], c_bkv=ca["bkv"],
            c_wo=ca["wo"], c_bo=ca["bo"],
            w1=bf16(lp["w1"]), b1=row(lp["b1"]),
            w2=bf16(lp["w2"]), b2=row(lp["b2"]),
            ln1_g=row(lp["ln1_g"]), ln1_b=row(lp["ln1_b"]),
            ln2_g=row(lp["ln2_g"]), ln2_b=row(lp["ln2_b"]),
            ln3_g=row(lp["ln3_g"]), ln3_b=row(lp["ln3_b"]),
        ))

    return dict(enc_emb=params["enc_emb"], dec_emb=params["dec_emb"], pe=params["pe"],
                encoder_layers=enc_layers, decoder_layers=dec_layers)


# ---------------------------------- main -------------------------------------

if __name__ == "__main__":
    B, S = 2, 8
    d_model, num_heads, d_ff, num_layers = 32, 4, 64, 2
    src_vocab = tgt_vocab = 50
    max_seq_len = 16

    key = jax.random.PRNGKey(0)
    pkey, skey, tkey = jax.random.split(key, 3)

    params = init_params(pkey, src_vocab, tgt_vocab, num_layers,
                         max_seq_len, d_model, d_ff)
    params_fused = fuse_params(params, num_heads)

    src = jax.random.randint(skey, (B, S), 0, src_vocab, dtype=jnp.int32)
    tgt = jax.random.randint(tkey, (B, S), 0, tgt_vocab, dtype=jnp.int32)

    fwd = jax.jit(functools.partial(transformer_forward, num_heads=num_heads))
    out = fwd(params_fused, src, tgt)
    jax.block_until_ready(out)
    assert out.shape == (B, S, d_model)
    print("KERNEL_OK")
</pallas_src>

<mosaic_0001>
module attributes {stable_mosaic.version = 11 : i64} {
  func.func @_encoder_layer_kernel(%arg0: i32, %arg1: memref<1x8x32xf32, #tpu.memory_space<vmem>>, %arg2: memref<1x1x8xf32, #tpu.memory_space<vmem>>, %arg3: memref<32x96xbf16, #tpu.memory_space<vmem>>, %arg4: memref<1x96xf32, #tpu.memory_space<vmem>>, %arg5: memref<32x32xbf16, #tpu.memory_space<vmem>>, %arg6: memref<1x32xf32, #tpu.memory_space<vmem>>, %arg7: memref<1x32xf32, #tpu.memory_space<vmem>>, %arg8: memref<1x32xf32, #tpu.memory_space<vmem>>, %arg9: memref<32x64xbf16, #tpu.memory_space<vmem>>, %arg10: memref<1x64xf32, #tpu.memory_space<vmem>>, %arg11: memref<64x32xbf16, #tpu.memory_space<vmem>>, %arg12: memref<1x32xf32, #tpu.memory_space<vmem>>, %arg13: memref<1x32xf32, #tpu.memory_space<vmem>>, %arg14: memref<1x32xf32, #tpu.memory_space<vmem>>, %arg15: memref<1x8x32xf32, #tpu.memory_space<vmem>>) attributes {dimension_semantics = [#tpu.dimension_semantics<parallel>], iteration_bounds = array<i64: 2>, scalar_prefetch = 0 : i64, scratch_operands = 0 : i64, tpu.core_type = #tpu.core_type<tc>, window_params = [{transform_indices = @transform_0, window_bounds = array<i64: 1, 8, 32>}, {transform_indices = @transform_1, window_bounds = array<i64: 1, 1, 8>}, {pipeline_mode = #tpu.pipeline_mode<synchronous>, transform_indices = @transform_2, window_bounds = array<i64: 32, 96>}, {pipeline_mode = #tpu.pipeline_mode<synchronous>, transform_indices = @transform_3, window_bounds = array<i64: 1, 96>}, {pipeline_mode = #tpu.pipeline_mode<synchronous>, transform_indices = @transform_4, window_bounds = array<i64: 32, 32>}, {pipeline_mode = #tpu.pipeline_mode<synchronous>, transform_indices = @transform_5, window_bounds = array<i64: 1, 32>}, {pipeline_mode = #tpu.pipeline_mode<synchronous>, transform_indices = @transform_6, window_bounds = array<i64: 1, 32>}, {pipeline_mode = #tpu.pipeline_mode<synchronous>, transform_indices = @transform_7, window_bounds = array<i64: 1, 32>}, {pipeline_mode = #tpu.pipeline_mode<synchronous>, transform_indices = @transform_8, window_bounds = array<i64: 32, 64>}, {pipeline_mode = #tpu.pipeline_mode<synchronous>, transform_indices = @transform_9, window_bounds = array<i64: 1, 64>}, {pipeline_mode = #tpu.pipeline_mode<synchronous>, transform_indices = @transform_10, window_bounds = array<i64: 64, 32>}, {pipeline_mode = #tpu.pipeline_mode<synchronous>, transform_indices = @transform_11, window_bounds = array<i64: 1, 32>}, {pipeline_mode = #tpu.pipeline_mode<synchronous>, transform_indices = @transform_12, window_bounds = array<i64: 1, 32>}, {pipeline_mode = #tpu.pipeline_mode<synchronous>, transform_indices = @transform_13, window_bounds = array<i64: 1, 32>}, {transform_indices = @transform_14, window_bounds = array<i64: 1, 8, 32>}]} {
    %c0 = arith.constant 0 : index
    %c0_0 = arith.constant 0 : index
    %c0_1 = arith.constant 0 : index
    %0 = vector.load %arg1[%c0, %c0_0, %c0_1] : memref<1x8x32xf32, #tpu.memory_space<vmem>>, vector<1x8x32xf32>
    %1 = vector.shape_cast %0 : vector<1x8x32xf32> to vector<8x32xf32>
    %c0_2 = arith.constant 0 : index
    %c0_3 = arith.constant 0 : index
    %c0_4 = arith.constant 0 : index
    %2 = vector.load %arg2[%c0_2, %c0_3, %c0_4] : memref<1x1x8xf32, #tpu.memory_space<vmem>>, vector<1x1x8xf32>
    %3 = vector.shape_cast %2 : vector<1x1x8xf32> to vector<1x8xf32>
    %cst = arith.constant 0.000000e+00 : f32
    %4 = vector.broadcast %cst : f32 to vector<1x8xf32>
    %5 = arith.cmpf ogt, %3, %4 : vector<1x8xf32>
    %cst_5 = arith.constant 0.000000e+00 : f32
    %cst_6 = arith.constant -1.000000e+09 : f32
    %6 = vector.broadcast %cst_5 : f32 to vector<1x8xf32>
    %7 = vector.broadcast %cst_6 : f32 to vector<1x8xf32>
    %8 = arith.select %5, %6, %7 : vector<1x8xi1>, vector<1x8xf32>
    %9 = arith.truncf %1 : vector<8x32xf32> to vector<8x32xbf16>
    %c0_7 = arith.constant 0 : index
    %c0_8 = arith.constant 0 : index
    %10 = vector.load %arg3[%c0_7, %c0_8] : memref<32x96xbf16, #tpu.memory_space<vmem>>, vector<32x96xbf16>
    %cst_9 = arith.constant dense<0.000000e+00> : vector<8x96xf32>
    %11 = tpu.matmul %9, %10, %cst_9 {dimension_numbers = #tpu.dot_dimension_numbers<[1], [0], [0], [1], [0, 0, 1, 1], [], []>} : vector<8x32xbf16>, vector<32x96xbf16>, vector<8x96xf32> -> vector<8x96xf32>
    %c0_10 = arith.constant 0 : index
    %c0_11 = arith.constant 0 : index
    %12 = vector.load %arg4[%c0_10, %c0_11] : memref<1x96xf32, #tpu.memory_space<vmem>>, vector<1x96xf32>
    %13 = vector.broadcast %12 : vector<1x96xf32> to vector<8x96xf32>
    %14 = arith.addf %11, %13 : vector<8x96xf32>
    %15 = vector.extract_strided_slice %14 {offsets = [0, 0], sizes = [8, 32], strides = [1, 1]} : vector<8x96xf32> to vector<8x32xf32>
    %16 = vector.extract_strided_slice %14 {offsets = [0, 32], sizes = [8, 32], strides = [1, 1]} : vector<8x96xf32> to vector<8x32xf32>
    %17 = vector.extract_strided_slice %14 {offsets = [0, 64], sizes = [8, 32], strides = [1, 1]} : vector<8x96xf32> to vector<8x32xf32>
    %c0_12 = arith.constant 0 : index
    %c0_13 = arith.constant 0 : index
    %18 = vector.load %arg5[%c0_12, %c0_13] : memref<32x32xbf16, #tpu.memory_space<vmem>>, vector<32x32xbf16>
    %c0_14 = arith.constant 0 : index
    %c0_15 = arith.constant 0 : index
    %19 = vector.load %arg6[%c0_14, %c0_15] : memref<1x32xf32, #tpu.memory_space<vmem>>, vector<1x32xf32>
    %20 = arith.truncf %15 : vector<8x32xf32> to vector<8x32xbf16>
    %21 = arith.truncf %16 : vector<8x32xf32> to vector<8x32xbf16>
    %22 = arith.truncf %17 : vector<8x32xf32> to vector<8x32xbf16>
    %23 = vector.extract_strided_slice %20 {offsets = [0, 0], sizes = [8, 8], strides = [1, 1]} : vector<8x32xbf16> to vector<8x8xbf16>
    %24 = vector.extract_strided_slice %21 {offsets = [0, 0], sizes = [8, 8], strides = [1, 1]} : vector<8x32xbf16> to vector<8x8xbf16>
    %25 = vector.extract_strided_slice %22 {offsets = [0, 0], sizes = [8, 8], strides = [1, 1]} : vector<8x32xbf16> to vector<8x8xbf16>
    %cst_16 = arith.constant dense<0.000000e+00> : vector<8x8xf32>
    %26 = tpu.matmul %23, %24, %cst_16 {dimension_numbers = #tpu.dot_dimension_numbers<[1], [1], [0], [0], [0, 0, 1, 0], [], []>} : vector<8x8xbf16>, vector<8x8xbf16>, vector<8x8xf32> -> vector<8x8xf32>
    %27 = vector.broadcast %8 : vector<1x8xf32> to vector<8x8xf32>
    %28 = arith.addf %26, %27 : vector<8x8xf32>
    %cst_17 = arith.constant dense<0xFF800000> : vector<8xf32>
    %29 = vector.multi_reduction <maximumf>, %28, %cst_17 [1] : vector<8x8xf32> to vector<8xf32>
    %30 = vector.shape_cast %29 : vector<8xf32> to vector<8x1xf32>
    %31 = vector.broadcast %30 : vector<8x1xf32> to vector<8x8xf32>
    %32 = arith.subf %28, %31 : vector<8x8xf32>
    %33 = math.exp %32 : vector<8x8xf32>
    %cst_18 = arith.constant dense<0.000000e+00> : vector<8xf32>
    %34 = vector.multi_reduction <add>, %33, %cst_18 [1] : vector<8x8xf32> to vector<8xf32>
    %35 = vector.shape_cast %34 : vector<8xf32> to vector<8x1xf32>
    %36 = tpu.reciprocal %35 {approx = true} : vector<8x1xf32> -> vector<8x1xf32>
    %37 = vector.broadcast %36 : vector<8x1xf32> to vector<8x8xf32>
    %38 = arith.mulf %33, %37 : vector<8x8xf32>
    %39 = arith.truncf %38 : vector<8x8xf32> to vector<8x8xbf16>
    %cst_19 = arith.constant dense<0.000000e+00> : vector<8x8xf32>
    %40 = tpu.matmul %39, %25, %cst_19 {dimension_numbers = #tpu.dot_dimension_numbers<[1], [0], [0], [1], [0, 0, 1, 1], [], []>} : vector<8x8xbf16>, vector<8x8xbf16>, vector<8x8xf32> -> vector<8x8xf32>
    %41 = vector.extract_strided_slice %20 {offsets = [0, 8], sizes = [8, 8], strides = [1, 1]} : vector<8x32xbf16> to vector<8x8xbf16>
    %42 = vector.extract_strided_slice %21 {offsets = [0, 8], sizes = [8, 8], strides = [1, 1]} : vector<8x32xbf16> to vector<8x8xbf16>
    %43 = vector.extract_strided_slice %22 {offsets = [0, 8], sizes = [8, 8], strides = [1, 1]} : vector<8x32xbf16> to vector<8x8xbf16>
    %cst_20 = arith.constant dense<0.000000e+00> : vector<8x8xf32>
    %44 = tpu.matmul %41, %42, %cst_20 {dimension_numbers = #tpu.dot_dimension_numbers<[1], [1], [0], [0], [0, 0, 1, 0], [], []>} : vector<8x8xbf16>, vector<8x8xbf16>, vector<8x8xf32> -> vector<8x8xf32>
    %45 = vector.broadcast %8 : vector<1x8xf32> to vector<8x8xf32>
    %46 = arith.addf %44, %45 : vector<8x8xf32>
    %cst_21 = arith.constant dense<0xFF800000> : vector<8xf32>
    %47 = vector.multi_reduction <maximumf>, %46, %cst_21 [1] : vector<8x8xf32> to vector<8xf32>
    %48 = vector.shape_cast %47 : vector<8xf32> to vector<8x1xf32>
    %49 = vector.broadcast %48 : vector<8x1xf32> to vector<8x8xf32>
    %50 = arith.subf %46, %49 : vector<8x8xf32>
    %51 = math.exp %50 : vector<8x8xf32>
    %cst_22 = arith.constant dense<0.000000e+00> : vector<8xf32>
    %52 = vector.multi_reduction <add>, %51, %cst_22 [1] : vector<8x8xf32> to vector<8xf32>
    %53 = vector.shape_cast %52 : vector<8xf32> to vector<8x1xf32>
    %54 = tpu.reciprocal %53 {approx = true} : vector<8x1xf32> -> vector<8x1xf32>
    %55 = vector.broadcast %54 : vector<8x1xf32> to vector<8x8xf32>
    %56 = arith.mulf %51, %55 : vector<8x8xf32>
    %57 = arith.truncf %56 : vector<8x8xf32> to vector<8x8xbf16>
    %cst_23 = arith.constant dense<0.000000e+00> : vector<8x8xf32>
    %58 = tpu.matmul %57, %43, %cst_23 {dimension_numbers = #tpu.dot_dimension_numbers<[1], [0], [0], [1], [0, 0, 1, 1], [], []>} : vector<8x8xbf16>, vector<8x8xbf16>, vector<8x8xf32> -> vector<8x8xf32>
    %59 = vector.extract_strided_slice %20 {offsets = [0, 16], sizes = [8, 8], strides = [1, 1]} : vector<8x32xbf16> to vector<8x8xbf16>
    %60 = vector.extract_strided_slice %21 {offsets = [0, 16], sizes = [8, 8], strides = [1, 1]} : vector<8x32xbf16> to vector<8x8xbf16>
    %61 = vector.extract_strided_slice %22 {offsets = [0, 16], sizes = [8, 8], strides = [1, 1]} : vector<8x32xbf16> to vector<8x8xbf16>
    %cst_24 = arith.constant dense<0.000000e+00> : vector<8x8xf32>
    %62 = tpu.matmul %59, %60, %cst_24 {dimension_numbers = #tpu.dot_dimension_numbers<[1], [1], [0], [0], [0, 0, 1, 0], [], []>} : vector<8x8xbf16>, vector<8x8xbf16>, vector<8x8xf32> -> vector<8x8xf32>
    %63 = vector.broadcast %8 : vector<1x8xf32> to vector<8x8xf32>
    %64 = arith.addf %62, %63 : vector<8x8xf32>
    %cst_25 = arith.constant dense<0xFF800000> : vector<8xf32>
    %65 = vector.multi_reduction <maximumf>, %64, %cst_25 [1] : vector<8x8xf32> to vector<8xf32>
    %66 = vector.shape_cast %65 : vector<8xf32> to vector<8x1xf32>
    %67 = vector.broadcast %66 : vector<8x1xf32> to vector<8x8xf32>
    %68 = arith.subf %64, %67 : vector<8x8xf32>
    %69 = math.exp %68 : vector<8x8xf32>
    %cst_26 = arith.constant dense<0.000000e+00> : vector<8xf32>
    %70 = vector.multi_reduction <add>, %69, %cst_26 [1] : vector<8x8xf32> to vector<8xf32>
    %71 = vector.shape_cast %70 : vector<8xf32> to vector<8x1xf32>
    %72 = tpu.reciprocal %71 {approx = true} : vector<8x1xf32> -> vector<8x1xf32>
    %73 = vector.broadcast %72 : vector<8x1xf32> to vector<8x8xf32>
    %74 = arith.mulf %69, %73 : vector<8x8xf32>
    %75 = arith.truncf %74 : vector<8x8xf32> to vector<8x8xbf16>
    %cst_27 = arith.constant dense<0.000000e+00> : vector<8x8xf32>
    %76 = tpu.matmul %75, %61, %cst_27 {dimension_numbers = #tpu.dot_dimension_numbers<[1], [0], [0], [1], [0, 0, 1, 1], [], []>} : vector<8x8xbf16>, vector<8x8xbf16>, vector<8x8xf32> -> vector<8x8xf32>
    %77 = vector.extract_strided_slice %20 {offsets = [0, 24], sizes = [8, 8], strides = [1, 1]} : vector<8x32xbf16> to vector<8x8xbf16>
    %78 = vector.extract_strided_slice %21 {offsets = [0, 24], sizes = [8, 8], strides = [1, 1]} : vector<8x32xbf16> to vector<8x8xbf16>
    %79 = vector.extract_strided_slice %22 {offsets = [0, 24], sizes = [8, 8], strides = [1, 1]} : vector<8x32xbf16> to vector<8x8xbf16>
    %cst_28 = arith.constant dense<0.000000e+00> : vector<8x8xf32>
    %80 = tpu.matmul %77, %78, %cst_28 {dimension_numbers = #tpu.dot_dimension_numbers<[1], [1], [0], [0], [0, 0, 1, 0], [], []>} : vector<8x8xbf16>, vector<8x8xbf16>, vector<8x8xf32> -> vector<8x8xf32>
    %81 = vector.broadcast %8 : vector<1x8xf32> to vector<8x8xf32>
    %82 = arith.addf %80, %81 : vector<8x8xf32>
    %cst_29 = arith.constant dense<0xFF800000> : vector<8xf32>
    %83 = vector.multi_reduction <maximumf>, %82, %cst_29 [1] : vector<8x8xf32> to vector<8xf32>
    %84 = vector.shape_cast %83 : vector<8xf32> to vector<8x1xf32>
    %85 = vector.broadcast %84 : vector<8x1xf32> to vector<8x8xf32>
    %86 = arith.subf %82, %85 : vector<8x8xf32>
    %87 = math.exp %86 : vector<8x8xf32>
    %cst_30 = arith.constant dense<0.000000e+00> : vector<8xf32>
    %88 = vector.multi_reduction <add>, %87, %cst_30 [1] : vector<8x8xf32> to vector<8xf32>
    %89 = vector.shape_cast %88 : vector<8xf32> to vector<8x1xf32>
    %90 = tpu.reciprocal %89 {approx = true} : vector<8x1xf32> -> vector<8x1xf32>
    %91 = vector.broadcast %90 : vector<8x1xf32> to vector<8x8xf32>
    %92 = arith.mulf %87, %91 : vector<8x8xf32>
    %93 = arith.truncf %92 : vector<8x8xf32> to vector<8x8xbf16>
    %cst_31 = arith.constant dense<0.000000e+00> : vector<8x8xf32>
    %94 = tpu.matmul %93, %79, %cst_31 {dimension_numbers = #tpu.dot_dimension_numbers<[1], [0], [0], [1], [0, 0, 1, 1], [], []>} : vector<8x8xbf16>, vector<8x8xbf16>, vector<8x8xf32> -> vector<8x8xf32>
    %95 = tpu.concatenate %40, %58, %76, %94 in 1 : vector<8x8xf32>, vector<8x8xf32>, vector<8x8xf32>, vector<8x8xf32> -> vector<8x32xf32>
    %96 = arith.truncf %95 : vector<8x32xf32> to vector<8x32xbf16>
    %cst_32 = arith.constant dense<0.000000e+00> : vector<8x32xf32>
    %97 = tpu.matmul %96, %18, %cst_32 {dimension_numbers = #tpu.dot_dimension_numbers<[1], [0], [0], [1], [0, 0, 1, 1], [], []>} : vector<8x32xbf16>, vector<32x32xbf16>, vector<8x32xf32> -> vector<8x32xf32>
    %98 = vector.broadcast %19 : vector<1x32xf32> to vector<8x32xf32>
    %99 = arith.addf %97, %98 : vector<8x32xf32>
    %100 = arith.addf %1, %99 : vector<8x32xf32>
    %c0_33 = arith.constant 0 : index
    %c0_34 = arith.constant 0 : index
    %101 = vector.load %arg7[%c0_33, %c0_34] : memref<1x32xf32, #tpu.memory_space<vmem>>, vector<1x32xf32>
    %c0_35 = arith.constant 0 : index
    %c0_36 = arith.constant 0 : index
    %102 = vector.load %arg8[%c0_35, %c0_36] : memref<1x32xf32, #tpu.memory_space<vmem>>, vector<1x32xf32>
    %cst_37 = arith.constant dense<0.000000e+00> : vector<8xf32>
    %103 = vector.multi_reduction <add>, %100, %cst_37 [1] : vector<8x32xf32> to vector<8xf32>
    %104 = vector.shape_cast %103 : vector<8xf32> to vector<8x1xf32>
    %cst_38 = arith.constant 3.200000e+01 : f32
    %105 = vector.broadcast %cst_38 : f32 to vector<8x1xf32>
    %106 = arith.divf %104, %105 : vector<8x1xf32>
    %107 = vector.broadcast %106 : vector<8x1xf32> to vector<8x32xf32>
    %108 = arith.subf %100, %107 : vector<8x32xf32>
    %109 = arith.mulf %108, %108 : vector<8x32xf32>
    %cst_39 = arith.constant dense<0.000000e+00> : vector<8xf32>
    %110 = vector.multi_reduction <add>, %109, %cst_39 [1] : vector<8x32xf32> to vector<8xf32>
    %111 = vector.shape_cast %110 : vector<8xf32> to vector<8x1xf32>
    %cst_40 = arith.constant 3.200000e+01 : f32
    %112 = vector.broadcast %cst_40 : f32 to vector<8x1xf32>
    %113 = arith.divf %111, %112 : vector<8x1xf32>
    %114 = vector.broadcast %106 : vector<8x1xf32> to vector<8x32xf32>
    %115 = arith.subf %100, %114 : vector<8x32xf32>
    %cst_41 = arith.constant 9.99999974E-6 : f32
    %116 = vector.broadcast %cst_41 : f32 to vector<8x1xf32>
    %117 = arith.addf %113, %116 : vector<8x1xf32>
    %118 = math.rsqrt %117 : vector<8x1xf32>
    %119 = vector.broadcast %118 : vector<8x1xf32> to vector<8x32xf32>
    %120 = arith.mulf %115, %119 : vector<8x32xf32>
    %121 = vector.broadcast %101 : vector<1x32xf32> to vector<8x32xf32>
    %122 = arith.mulf %120, %121 : vector<8x32xf32>
    %123 = vector.broadcast %102 : vector<1x32xf32> to vector<8x32xf32>
    %124 = arith.addf %122, %123 : vector<8x32xf32>
    %c0_42 = arith.constant 0 : index
    %c0_43 = arith.constant 0 : index
    %125 = vector.load %arg9[%c0_42, %c0_43] : memref<32x64xbf16, #tpu.memory_space<vmem>>, vector<32x64xbf16>
    %c0_44 = arith.constant 0 : index
    %c0_45 = arith.constant 0 : index
    %126 = vector.load %arg10[%c0_44, %c0_45] : memref<1x64xf32, #tpu.memory_space<vmem>>, vector<1x64xf32>
    %c0_46 = arith.constant 0 : index
    %c0_47 = arith.constant 0 : index
    %127 = vector.load %arg11[%c0_46, %c0_47] : memref<64x32xbf16, #tpu.memory_space<vmem>>, vector<64x32xbf16>
    %c0_48 = arith.constant 0 : index
    %c0_49 = arith.constant 0 : index
    %128 = vector.load %arg12[%c0_48, %c0_49] : memref<1x32xf32, #tpu.memory_space<vmem>>, vector<1x32xf32>
    %129 = arith.truncf %124 : vector<8x32xf32> to vector<8x32xbf16>
    %cst_50 = arith.constant dense<0.000000e+00> : vector<8x64xf32>
    %130 = tpu.matmul %129, %125, %cst_50 {dimension_numbers = #tpu.dot_dimension_numbers<[1], [0], [0], [1], [0, 0, 1, 1], [], []>} : vector<8x32xbf16>, vector<32x64xbf16>, vector<8x64xf32> -> vector<8x64xf32>
    %131 = vector.broadcast %126 : vector<1x64xf32> to vector<8x64xf32>
    %132 = arith.addf %130, %131 : vector<8x64xf32>
    %cst_51 = arith.constant 0.000000e+00 : f32
    %133 = vector.broadcast %cst_51 : f32 to vector<8x64xf32>
    %134 = arith.maximumf %132, %133 : vector<8x64xf32>
    %135 = arith.truncf %134 : vector<8x64xf32> to vector<8x64xbf16>
    %cst_52 = arith.constant dense<0.000000e+00> : vector<8x32xf32>
    %136 = tpu.matmul %135, %127, %cst_52 {dimension_numbers = #tpu.dot_dimension_numbers<[1], [0], [0], [1], [0, 0, 1, 1], [], []>} : vector<8x64xbf16>, vector<64x32xbf16>, vector<8x32xf32> -> vector<8x32xf32>
    %137 = vector.broadcast %128 : vector<1x32xf32> to vector<8x32xf32>
    %138 = arith.addf %136, %137 : vector<8x32xf32>
    %139 = arith.addf %124, %138 : vector<8x32xf32>
    %c0_53 = arith.constant 0 : index
    %c0_54 = arith.constant 0 : index
    %140 = vector.load %arg13[%c0_53, %c0_54] : memref<1x32xf32, #tpu.memory_space<vmem>>, vector<1x32xf32>
    %c0_55 = arith.constant 0 : index
    %c0_56 = arith.constant 0 : index
    %141 = vector.load %arg14[%c0_55, %c0_56] : memref<1x32xf32, #tpu.memory_space<vmem>>, vector<1x32xf32>
    %cst_57 = arith.constant dense<0.000000e+00> : vector<8xf32>
    %142 = vector.multi_reduction <add>, %139, %cst_57 [1] : vector<8x32xf32> to vector<8xf32>
    %143 = vector.shape_cast %142 : vector<8xf32> to vector<8x1xf32>
    %cst_58 = arith.constant 3.200000e+01 : f32
    %144 = vector.broadcast %cst_58 : f32 to vector<8x1xf32>
    %145 = arith.divf %143, %144 : vector<8x1xf32>
    %146 = vector.broadcast %145 : vector<8x1xf32> to vector<8x32xf32>
    %147 = arith.subf %139, %146 : vector<8x32xf32>
    %148 = arith.mulf %147, %147 : vector<8x32xf32>
    %cst_59 = arith.constant dense<0.000000e+00> : vector<8xf32>
    %149 = vector.multi_reduction <add>, %148, %cst_59 [1] : vector<8x32xf32> to vector<8xf32>
    %150 = vector.shape_cast %149 : vector<8xf32> to vector<8x1xf32>
    %cst_60 = arith.constant 3.200000e+01 : f32
    %151 = vector.broadcast %cst_60 : f32 to vector<8x1xf32>
    %152 = arith.divf %150, %151 : vector<8x1xf32>
    %153 = vector.broadcast %145 : vector<8x1xf32> to vector<8x32xf32>
    %154 = arith.subf %139, %153 : vector<8x32xf32>
    %cst_61 = arith.constant 9.99999974E-6 : f32
    %155 = vector.broadcast %cst_61 : f32 to vector<8x1xf32>
    %156 = arith.addf %152, %155 : vector<8x1xf32>
    %157 = math.rsqrt %156 : vector<8x1xf32>
    %158 = vector.broadcast %157 : vector<8x1xf32> to vector<8x32xf32>
    %159 = arith.mulf %154, %158 : vector<8x32xf32>
    %160 = vector.broadcast %140 : vector<1x32xf32> to vector<8x32xf32>
    %161 = arith.mulf %159, %160 : vector<8x32xf32>
    %162 = vector.broadcast %141 : vector<1x32xf32> to vector<8x32xf32>
    %163 = arith.addf %161, %162 : vector<8x32xf32>
    %c0_62 = arith.constant 0 : index
    %c0_63 = arith.constant 0 : index
    %c0_64 = arith.constant 0 : index
    %164 = vector.load %arg15[%c0_62, %c0_63, %c0_64] : memref<1x8x32xf32, #tpu.memory_space<vmem>>, vector<1x8x32xf32>
    %165 = vector.shape_cast %164 : vector<1x8x32xf32> to vector<8x32xf32>
    %166 = vector.shape_cast %163 : vector<8x32xf32> to vector<1x8x32xf32>
    tpu.vector_store %arg15[%c0_62, %c0_63, %c0_64], %166 {strides = array<i32>} : memref<1x8x32xf32, #tpu.memory_space<vmem>>, vector<1x8x32xf32>,
    return
  }
  func.func @transform_0(%arg0: i32) -> (i32, i32, i32) {
    %c0_i32 = arith.constant 0 : i32
    %c0_i32_0 = arith.constant 0 : i32
    %c0_i32_1 = arith.constant 0 : i32
    return %arg0, %c0_i32, %c0_i32_0 : i32, i32, i32
  }
  func.func @transform_1(%arg0: i32) -> (i32, i32, i32) {
    %c0_i32 = arith.constant 0 : i32
    %c0_i32_0 = arith.constant 0 : i32
    %c0_i32_1 = arith.constant 0 : i32
    return %arg0, %c0_i32, %c0_i32_0 : i32, i32, i32
  }
  func.func @transform_2(%arg0: i32) -> (i32, i32) {
    %c0_i32 = arith.constant 0 : i32
    %c0_i32_0 = arith.constant 0 : i32
    %c0_i32_1 = arith.constant 0 : i32
    return %c0_i32, %c0_i32_0 : i32, i32
  }
  func.func @transform_3(%arg0: i32) -> (i32, i32) {
    %c0_i32 = arith.constant 0 : i32
    %c0_i32_0 = arith.constant 0 : i32
    %c0_i32_1 = arith.constant 0 : i32
    return %c0_i32, %c0_i32_0 : i32, i32
  }
  func.func @transform_4(%arg0: i32) -> (i32, i32) {
    %c0_i32 = arith.constant 0 : i32
    %c0_i32_0 = arith.constant 0 : i32
    %c0_i32_1 = arith.constant 0 : i32
    return %c0_i32, %c0_i32_0 : i32, i32
  }
  func.func @transform_5(%arg0: i32) -> (i32, i32) {
    %c0_i32 = arith.constant 0 : i32
    %c0_i32_0 = arith.constant 0 : i32
    %c0_i32_1 = arith.constant 0 : i32
    return %c0_i32, %c0_i32_0 : i32, i32
  }
  func.func @transform_6(%arg0: i32) -> (i32, i32) {
    %c0_i32 = arith.constant 0 : i32
    %c0_i32_0 = arith.constant 0 : i32
    %c0_i32_1 = arith.constant 0 : i32
    return %c0_i32, %c0_i32_0 : i32, i32
  }
  func.func @transform_7(%arg0: i32) -> (i32, i32) {
    %c0_i32 = arith.constant 0 : i32
    %c0_i32_0 = arith.constant 0 : i32
    %c0_i32_1 = arith.constant 0 : i32
    return %c0_i32, %c0_i32_0 : i32, i32
  }
  func.func @transform_8(%arg0: i32) -> (i32, i32) {
    %c0_i32 = arith.constant 0 : i32
    %c0_i32_0 = arith.constant 0 : i32
    %c0_i32_1 = arith.constant 0 : i32
    return %c0_i32, %c0_i32_0 : i32, i32
  }
  func.func @transform_9(%arg0: i32) -> (i32, i32) {
    %c0_i32 = arith.constant 0 : i32
    %c0_i32_0 = arith.constant 0 : i32
    %c0_i32_1 = arith.constant 0 : i32
    return %c0_i32, %c0_i32_0 : i32, i32
  }
  func.func @transform_10(%arg0: i32) -> (i32, i32) {
    %c0_i32 = arith.constant 0 : i32
    %c0_i32_0 = arith.constant 0 : i32
    %c0_i32_1 = arith.constant 0 : i32
    return %c0_i32, %c0_i32_0 : i32, i32
  }
  func.func @transform_11(%arg0: i32) -> (i32, i32) {
    %c0_i32 = arith.constant 0 : i32
    %c0_i32_0 = arith.constant 0 : i32
    %c0_i32_1 = arith.constant 0 : i32
    return %c0_i32, %c0_i32_0 : i32, i32
  }
  func.func @transform_12(%arg0: i32) -> (i32, i32) {
    %c0_i32 = arith.constant 0 : i32
    %c0_i32_0 = arith.constant 0 : i32
    %c0_i32_1 = arith.constant 0 : i32
    return %c0_i32, %c0_i32_0 : i32, i32
  }
  func.func @transform_13(%arg0: i32) -> (i32, i32) {
    %c0_i32 = arith.constant 0 : i32
    %c0_i32_0 = arith.constant 0 : i32
    %c0_i32_1 = arith.constant 0 : i32
    return %c0_i32, %c0_i32_0 : i32, i32
  }
  func.func @transform_14(%arg0: i32) -> (i32, i32, i32) {
    %c0_i32 = arith.constant 0 : i32
    %c0_i32_0 = arith.constant 0 : i32
    %c0_i32_1 = arith.constant 0 : i32
    return %arg0, %c0_i32, %c0_i32_0 : i32, i32, i32
  }
}

module attributes {stable_mosaic.version = 11 : i64} {
  func.func @_decoder_layer_kernel(%arg0: i32, %arg1: memref<1x8x32xf32, #tpu.memory_space<vmem>>, %arg2: memref<1x8x32xf32, #tpu.memory_space<vmem>>, %arg3: memref<1x8x1xf32, #tpu.memory_space<vmem>>, %arg4: memref<1x1x8xf32, #tpu.memory_space<vmem>>, %arg5: memref<32x96xbf16, #tpu.memory_space<vmem>>, %arg6: memref<1x96xf32, #tpu.memory_space<vmem>>, %arg7: memref<32x32xbf16, #tpu.memory_space<vmem>>, %arg8: memref<1x32xf32, #tpu.memory_space<vmem>>, %arg9: memref<1x32xf32, #tpu.memory_space<vmem>>, %arg10: memref<1x32xf32, #tpu.memory_space<vmem>>, %arg11: memref<32x32xbf16, #tpu.memory_space<vmem>>, %arg12: memref<1x32xf32, #tpu.memory_space<vmem>>, %arg13: memref<32x64xbf16, #tpu.memory_space<vmem>>, %arg14: memref<1x64xf32, #tpu.memory_space<vmem>>, %arg15: memref<32x32xbf16, #tpu.memory_space<vmem>>, %arg16: memref<1x32xf32, #tpu.memory_space<vmem>>, %arg17: memref<1x32xf32, #tpu.memory_space<vmem>>, %arg18: memref<1x32xf32, #tpu.memory_space<vmem>>, %arg19: memref<32x64xbf16, #tpu.memory_space<vmem>>, %arg20: memref<1x64xf32, #tpu.memory_space<vmem>>, %arg21: memref<64x32xbf16, #tpu.memory_space<vmem>>, %arg22: memref<1x32xf32, #tpu.memory_space<vmem>>, %arg23: memref<1x32xf32, #tpu.memory_space<vmem>>, %arg24: memref<1x32xf32, #tpu.memory_space<vmem>>, %arg25: memref<1x8x32xf32, #tpu.memory_space<vmem>>) attributes {dimension_semantics = [#tpu.dimension_semantics<parallel>], iteration_bounds = array<i64: 2>, scalar_prefetch = 0 : i64, scratch_operands = 0 : i64, tpu.core_type = #tpu.core_type<tc>, window_params = [{transform_indices = @transform_0, window_bounds = array<i64: 1, 8, 32>}, {transform_indices = @transform_1, window_bounds = array<i64: 1, 8, 32>}, {transform_indices = @transform_2, window_bounds = array<i64: 1, 8, 1>}, {transform_indices = @transform_3, window_bounds = array<i64: 1, 1, 8>}, {pipeline_mode = #tpu.pipeline_mode<synchronous>, transform_indices = @transform_4, window_bounds = array<i64: 32, 96>}, {pipeline_mode = #tpu.pipeline_mode<synchronous>, transform_indices = @transform_5, window_bounds = array<i64: 1, 96>}, {pipeline_mode = #tpu.pipeline_mode<synchronous>, transform_indices = @transform_6, window_bounds = array<i64: 32, 32>}, {pipeline_mode = #tpu.pipeline_mode<synchronous>, transform_indices = @transform_7, window_bounds = array<i64: 1, 32>}, {pipeline_mode = #tpu.pipeline_mode<synchronous>, transform_indices = @transform_8, window_bounds = array<i64: 1, 32>}, {pipeline_mode = #tpu.pipeline_mode<synchronous>, transform_indices = @transform_9, window_bounds = array<i64: 1, 32>}, {pipeline_mode = #tpu.pipeline_mode<synchronous>, transform_indices = @transform_10, window_bounds = array<i64: 32, 32>}, {pipeline_mode = #tpu.pipeline_mode<synchronous>, transform_indices = @transform_11, window_bounds = array<i64: 1, 32>}, {pipeline_mode = #tpu.pipeline_mode<synchronous>, transform_indices = @transform_12, window_bounds = array<i64: 32, 64>}, {pipeline_mode = #tpu.pipeline_mode<synchronous>, transform_indices = @transform_13, window_bounds = array<i64: 1, 64>}, {pipeline_mode = #tpu.pipeline_mode<synchronous>, transform_indices = @transform_14, window_bounds = array<i64: 32, 32>}, {pipeline_mode = #tpu.pipeline_mode<synchronous>, transform_indices = @transform_15, window_bounds = array<i64: 1, 32>}, {pipeline_mode = #tpu.pipeline_mode<synchronous>, transform_indices = @transform_16, window_bounds = array<i64: 1, 32>}, {pipeline_mode = #tpu.pipeline_mode<synchronous>, transform_indices = @transform_17, window_bounds = array<i64: 1, 32>}, {pipeline_mode = #tpu.pipeline_mode<synchronous>, transform_indices = @transform_18, window_bounds = array<i64: 32, 64>}, {pipeline_mode = #tpu.pipeline_mode<synchronous>, transform_indices = @transform_19, window_bounds = array<i64: 1, 64>}, {pipeline_mode = #tpu.pipeline_mode<synchronous>, transform_indices = @transform_20, window_bounds = array<i64: 64, 32>}, {pipeline_mode = #tpu.pipeline_mode<synchronous>, transform_indices = @transform_21, window_bounds = array<i64: 1, 32>}, {pipeline_mode = #tpu.pipeline_mode<synchronous>, transform_indices = @transform_22, window_bounds = array<i64: 1, 32>}, {pipeline_mode = #tpu.pipeline_mode<synchronous>, transform_indices = @transform_23, window_bounds = array<i64: 1, 32>}, {transform_indices = @transform_24, window_bounds = array<i64: 1, 8, 32>}]} {
    %c0 = arith.constant 0 : index
    %c0_0 = arith.constant 0 : index
    %c0_1 = arith.constant 0 : index
    %0 = vector.load %arg1[%c0, %c0_0, %c0_1] : memref<1x8x32xf32, #tpu.memory_space<vmem>>, vector<1x8x32xf32>
    %1 = vector.shape_cast %0 : vector<1x8x32xf32> to vector<8x32xf32>
    %c0_2 = arith.constant 0 : index
    %c0_3 = arith.constant 0 : index
    %c0_4 = arith.constant 0 : index
    %2 = vector.load %arg2[%c0_2, %c0_3, %c0_4] : memref<1x8x32xf32, #tpu.memory_space<vmem>>, vector<1x8x32xf32>
    %3 = vector.shape_cast %2 : vector<1x8x32xf32> to vector<8x32xf32>
    %c0_5 = arith.constant 0 : index
    %c0_6 = arith.constant 0 : index
    %c0_7 = arith.constant 0 : index
    %4 = vector.load %arg3[%c0_5, %c0_6, %c0_7] : memref<1x8x1xf32, #tpu.memory_space<vmem>>, vector<1x8x1xf32>
    %5 = vector.shape_cast %4 : vector<1x8x1xf32> to vector<8x1xf32>
    %6 = tpu.iota {dimensions = array<i32: 0>} : vector<8x8xi32>
    %7 = tpu.iota {dimensions = array<i32: 1>} : vector<8x8xi32>
    %8 = arith.cmpi sle, %7, %6 : vector<8x8xi32>
    %cst = arith.constant 0.000000e+00 : f32
    %9 = vector.broadcast %cst : f32 to vector<8x1xf32>
    %10 = arith.cmpf ogt, %5, %9 : vector<8x1xf32>
    %11 = vector.broadcast %10 : vector<8x1xi1> to vector<8x8xi1>
    %12 = arith.andi %8, %11 : vector<8x8xi1>
    %cst_8 = arith.constant 0.000000e+00 : f32
    %cst_9 = arith.constant -1.000000e+09 : f32
    %13 = vector.broadcast %cst_8 : f32 to vector<8x8xf32>
    %14 = vector.broadcast %cst_9 : f32 to vector<8x8xf32>
    %15 = arith.select %12, %13, %14 : vector<8x8xi1>, vector<8x8xf32>
    %c0_10 = arith.constant 0 : index
    %c0_11 = arith.constant 0 : index
    %c0_12 = arith.constant 0 : index
    %16 = vector.load %arg4[%c0_10, %c0_11, %c0_12] : memref<1x1x8xf32, #tpu.memory_space<vmem>>, vector<1x1x8xf32>
    %17 = vector.shape_cast %16 : vector<1x1x8xf32> to vector<1x8xf32>
    %cst_13 = arith.constant 0.000000e+00 : f32
    %18 = vector.broadcast %cst_13 : f32 to vector<1x8xf32>
    %19 = arith.cmpf ogt, %17, %18 : vector<1x8xf32>
    %cst_14 = arith.constant 0.000000e+00 : f32
    %cst_15 = arith.constant -1.000000e+09 : f32
    %20 = vector.broadcast %cst_14 : f32 to vector<1x8xf32>
    %21 = vector.broadcast %cst_15 : f32 to vector<1x8xf32>
    %22 = arith.select %19, %20, %21 : vector<1x8xi1>, vector<1x8xf32>
    %23 = arith.truncf %1 : vector<8x32xf32> to vector<8x32xbf16>
    %c0_16 = arith.constant 0 : index
    %c0_17 = arith.constant 0 : index
    %24 = vector.load %arg5[%c0_16, %c0_17] : memref<32x96xbf16, #tpu.memory_space<vmem>>, vector<32x96xbf16>
    %cst_18 = arith.constant dense<0.000000e+00> : vector<8x96xf32>
    %25 = tpu.matmul %23, %24, %cst_18 {dimension_numbers = #tpu.dot_dimension_numbers<[1], [0], [0], [1], [0, 0, 1, 1], [], []>} : vector<8x32xbf16>, vector<32x96xbf16>, vector<8x96xf32> -> vector<8x96xf32>
    %c0_19 = arith.constant 0 : index
    %c0_20 = arith.constant 0 : index
    %26 = vector.load %arg6[%c0_19, %c0_20] : memref<1x96xf32, #tpu.memory_space<vmem>>, vector<1x96xf32>
    %27 = vector.broadcast %26 : vector<1x96xf32> to vector<8x96xf32>
    %28 = arith.addf %25, %27 : vector<8x96xf32>
    %29 = vector.extract_strided_slice %28 {offsets = [0, 0], sizes = [8, 32], strides = [1, 1]} : vector<8x96xf32> to vector<8x32xf32>
    %30 = vector.extract_strided_slice %28 {offsets = [0, 32], sizes = [8, 32], strides = [1, 1]} : vector<8x96xf32> to vector<8x32xf32>
    %31 = vector.extract_strided_slice %28 {offsets = [0, 64], sizes = [8, 32], strides = [1, 1]} : vector<8x96xf32> to vector<8x32xf32>
    %c0_21 = arith.constant 0 : index
    %c0_22 = arith.constant 0 : index
    %32 = vector.load %arg7[%c0_21, %c0_22] : memref<32x32xbf16, #tpu.memory_space<vmem>>, vector<32x32xbf16>
    %c0_23 = arith.constant 0 : index
    %c0_24 = arith.constant 0 : index
    %33 = vector.load %arg8[%c0_23, %c0_24] : memref<1x32xf32, #tpu.memory_space<vmem>>, vector<1x32xf32>
    %34 = arith.truncf %29 : vector<8x32xf32> to vector<8x32xbf16>
    %35 = arith.truncf %30 : vector<8x32xf32> to vector<8x32xbf16>
    %36 = arith.truncf %31 : vector<8x32xf32> to vector<8x32xbf16>
    %37 = vector.extract_strided_slice %34 {offsets = [0, 0], sizes = [8, 8], strides = [1, 1]} : vector<8x32xbf16> to vector<8x8xbf16>
    %38 = vector.extract_strided_slice %35 {offsets = [0, 0], sizes = [8, 8], strides = [1, 1]} : vector<8x32xbf16> to vector<8x8xbf16>
    %39 = vector.extract_strided_slice %36 {offsets = [0, 0], sizes = [8, 8], strides = [1, 1]} : vector<8x32xbf16> to vector<8x8xbf16>
    %cst_25 = arith.constant dense<0.000000e+00> : vector<8x8xf32>
    %40 = tpu.matmul %37, %38, %cst_25 {dimension_numbers = #tpu.dot_dimension_numbers<[1], [1], [0], [0], [0, 0, 1, 0], [], []>} : vector<8x8xbf16>, vector<8x8xbf16>, vector<8x8xf32> -> vector<8x8xf32>
    %41 = arith.addf %40, %15 : vector<8x8xf32>
    %cst_26 = arith.constant dense<0xFF800000> : vector<8xf32>
    %42 = vector.multi_reduction <maximumf>, %41, %cst_26 [1] : vector<8x8xf32> to vector<8xf32>
    %43 = vector.shape_cast %42 : vector<8xf32> to vector<8x1xf32>
    %44 = vector.broadcast %43 : vector<8x1xf32> to vector<8x8xf32>
    %45 = arith.subf %41, %44 : vector<8x8xf32>
    %46 = math.exp %45 : vector<8x8xf32>
    %cst_27 = arith.constant dense<0.000000e+00> : vector<8xf32>
    %47 = vector.multi_reduction <add>, %46, %cst_27 [1] : vector<8x8xf32> to vector<8xf32>
    %48 = vector.shape_cast %47 : vector<8xf32> to vector<8x1xf32>
    %49 = tpu.reciprocal %48 {approx = true} : vector<8x1xf32> -> vector<8x1xf32>
    %50 = vector.broadcast %49 : vector<8x1xf32> to vector<8x8xf32>
    %51 = arith.mulf %46, %50 : vector<8x8xf32>
    %52 = arith.truncf %51 : vector<8x8xf32> to vector<8x8xbf16>
    %cst_28 = arith.constant dense<0.000000e+00> : vector<8x8xf32>
    %53 = tpu.matmul %52, %39, %cst_28 {dimension_numbers = #tpu.dot_dimension_numbers<[1], [0], [0], [1], [0, 0, 1, 1], [], []>} : vector<8x8xbf16>, vector<8x8xbf16>, vector<8x8xf32> -> vector<8x8xf32>
    %54 = vector.extract_strided_slice %34 {offsets = [0, 8], sizes = [8, 8], strides = [1, 1]} : vector<8x32xbf16> to vector<8x8xbf16>
    %55 = vector.extract_strided_slice %35 {offsets = [0, 8], sizes = [8, 8], strides = [1, 1]} : vector<8x32xbf16> to vector<8x8xbf16>
    %56 = vector.extract_strided_slice %36 {offsets = [0, 8], sizes = [8, 8], strides = [1, 1]} : vector<8x32xbf16> to vector<8x8xbf16>
    %cst_29 = arith.constant dense<0.000000e+00> : vector<8x8xf32>
    %57 = tpu.matmul %54, %55, %cst_29 {dimension_numbers = #tpu.dot_dimension_numbers<[1], [1], [0], [0], [0, 0, 1, 0], [], []>} : vector<8x8xbf16>, vector<8x8xbf16>, vector<8x8xf32> -> vector<8x8xf32>
    %58 = arith.addf %57, %15 : vector<8x8xf32>
    %cst_30 = arith.constant dense<0xFF800000> : vector<8xf32>
    %59 = vector.multi_reduction <maximumf>, %58, %cst_30 [1] : vector<8x8xf32> to vector<8xf32>
    %60 = vector.shape_cast %59 : vector<8xf32> to vector<8x1xf32>
    %61 = vector.broadcast %60 : vector<8x1xf32> to vector<8x8xf32>
    %62 = arith.subf %58, %61 : vector<8x8xf32>
    %63 = math.exp %62 : vector<8x8xf32>
    %cst_31 = arith.constant dense<0.000000e+00> : vector<8xf32>
    %64 = vector.multi_reduction <add>, %63, %cst_31 [1] : vector<8x8xf32> to vector<8xf32>
    %65 = vector.shape_cast %64 : vector<8xf32> to vector<8x1xf32>
    %66 = tpu.reciprocal %65 {approx = true} : vector<8x1xf32> -> vector<8x1xf32>
    %67 = vector.broadcast %66 : vector<8x1xf32> to vector<8x8xf32>
    %68 = arith.mulf %63, %67 : vector<8x8xf32>
    %69 = arith.truncf %68 : vector<8x8xf32> to vector<8x8xbf16>
    %cst_32 = arith.constant dense<0.000000e+00> : vector<8x8xf32>
    %70 = tpu.matmul %69, %56, %cst_32 {dimension_numbers = #tpu.dot_dimension_numbers<[1], [0], [0], [1], [0, 0, 1, 1], [], []>} : vector<8x8xbf16>, vector<8x8xbf16>, vector<8x8xf32> -> vector<8x8xf32>
    %71 = vector.extract_strided_slice %34 {offsets = [0, 16], sizes = [8, 8], strides = [1, 1]} : vector<8x32xbf16> to vector<8x8xbf16>
    %72 = vector.extract_strided_slice %35 {offsets = [0, 16], sizes = [8, 8], strides = [1, 1]} : vector<8x32xbf16> to vector<8x8xbf16>
    %73 = vector.extract_strided_slice %36 {offsets = [0, 16], sizes = [8, 8], strides = [1, 1]} : vector<8x32xbf16> to vector<8x8xbf16>
    %cst_33 = arith.constant dense<0.000000e+00> : vector<8x8xf32>
    %74 = tpu.matmul %71, %72, %cst_33 {dimension_numbers = #tpu.dot_dimension_numbers<[1], [1], [0], [0], [0, 0, 1, 0], [], []>} : vector<8x8xbf16>, vector<8x8xbf16>, vector<8x8xf32> -> vector<8x8xf32>
    %75 = arith.addf %74, %15 : vector<8x8xf32>
    %cst_34 = arith.constant dense<0xFF800000> : vector<8xf32>
    %76 = vector.multi_reduction <maximumf>, %75, %cst_34 [1] : vector<8x8xf32> to vector<8xf32>
    %77 = vector.shape_cast %76 : vector<8xf32> to vector<8x1xf32>
    %78 = vector.broadcast %77 : vector<8x1xf32> to vector<8x8xf32>
    %79 = arith.subf %75, %78 : vector<8x8xf32>
    %80 = math.exp %79 : vector<8x8xf32>
    %cst_35 = arith.constant dense<0.000000e+00> : vector<8xf32>
    %81 = vector.multi_reduction <add>, %80, %cst_35 [1] : vector<8x8xf32> to vector<8xf32>
    %82 = vector.shape_cast %81 : vector<8xf32> to vector<8x1xf32>
    %83 = tpu.reciprocal %82 {approx = true} : vector<8x1xf32> -> vector<8x1xf32>
    %84 = vector.broadcast %83 : vector<8x1xf32> to vector<8x8xf32>
    %85 = arith.mulf %80, %84 : vector<8x8xf32>
    %86 = arith.truncf %85 : vector<8x8xf32> to vector<8x8xbf16>
    %cst_36 = arith.constant dense<0.000000e+00> : vector<8x8xf32>
    %87 = tpu.matmul %86, %73, %cst_36 {dimension_numbers = #tpu.dot_dimension_numbers<[1], [0], [0], [1], [0, 0, 1, 1], [], []>} : vector<8x8xbf16>, vector<8x8xbf16>, vector<8x8xf32> -> vector<8x8xf32>
    %88 = vector.extract_strided_slice %34 {offsets = [0, 24], sizes = [8, 8], strides = [1, 1]} : vector<8x32xbf16> to vector<8x8xbf16>
    %89 = vector.extract_strided_slice %35 {offsets = [0, 24], sizes = [8, 8], strides = [1, 1]} : vector<8x32xbf16> to vector<8x8xbf16>
    %90 = vector.extract_strided_slice %36 {offsets = [0, 24], sizes = [8, 8], strides = [1, 1]} : vector<8x32xbf16> to vector<8x8xbf16>
    %cst_37 = arith.constant dense<0.000000e+00> : vector<8x8xf32>
    %91 = tpu.matmul %88, %89, %cst_37 {dimension_numbers = #tpu.dot_dimension_numbers<[1], [1], [0], [0], [0, 0, 1, 0], [], []>} : vector<8x8xbf16>, vector<8x8xbf16>, vector<8x8xf32> -> vector<8x8xf32>
    %92 = arith.addf %91, %15 : vector<8x8xf32>
    %cst_38 = arith.constant dense<0xFF800000> : vector<8xf32>
    %93 = vector.multi_reduction <maximumf>, %92, %cst_38 [1] : vector<8x8xf32> to vector<8xf32>
    %94 = vector.shape_cast %93 : vector<8xf32> to vector<8x1xf32>
    %95 = vector.broadcast %94 : vector<8x1xf32> to vector<8x8xf32>
    %96 = arith.subf %92, %95 : vector<8x8xf32>
    %97 = math.exp %96 : vector<8x8xf32>
    %cst_39 = arith.constant dense<0.000000e+00> : vector<8xf32>
    %98 = vector.multi_reduction <add>, %97, %cst_39 [1] : vector<8x8xf32> to vector<8xf32>
    %99 = vector.shape_cast %98 : vector<8xf32> to vector<8x1xf32>
    %100 = tpu.reciprocal %99 {approx = true} : vector<8x1xf32> -> vector<8x1xf32>
    %101 = vector.broadcast %100 : vector<8x1xf32> to vector<8x8xf32>
    %102 = arith.mulf %97, %101 : vector<8x8xf32>
    %103 = arith.truncf %102 : vector<8x8xf32> to vector<8x8xbf16>
    %cst_40 = arith.constant dense<0.000000e+00> : vector<8x8xf32>
    %104 = tpu.matmul %103, %90, %cst_40 {dimension_numbers = #tpu.dot_dimension_numbers<[1], [0], [0], [1], [0, 0, 1, 1], [], []>} : vector<8x8xbf16>, vector<8x8xbf16>, vector<8x8xf32> -> vector<8x8xf32>
    %105 = tpu.concatenate %53, %70, %87, %104 in 1 : vector<8x8xf32>, vector<8x8xf32>, vector<8x8xf32>, vector<8x8xf32> -> vector<8x32xf32>
    %106 = arith.truncf %105 : vector<8x32xf32> to vector<8x32xbf16>
    %cst_41 = arith.constant dense<0.000000e+00> : vector<8x32xf32>
    %107 = tpu.matmul %106, %32, %cst_41 {dimension_numbers = #tpu.dot_dimension_numbers<[1], [0], [0], [1], [0, 0, 1, 1], [], []>} : vector<8x32xbf16>, vector<32x32xbf16>, vector<8x32xf32> -> vector<8x32xf32>
    %108 = vector.broadcast %33 : vector<1x32xf32> to vector<8x32xf32>
    %109 = arith.addf %107, %108 : vector<8x32xf32>
    %110 = arith.addf %1, %109 : vector<8x32xf32>
    %c0_42 = arith.constant 0 : index
    %c0_43 = arith.constant 0 : index
    %111 = vector.load %arg9[%c0_42, %c0_43] : memref<1x32xf32, #tpu.memory_space<vmem>>, vector<1x32xf32>
    %c0_44 = arith.constant 0 : index
    %c0_45 = arith.constant 0 : index
    %112 = vector.load %arg10[%c0_44, %c0_45] : memref<1x32xf32, #tpu.memory_space<vmem>>, vector<1x32xf32>
    %cst_46 = arith.constant dense<0.000000e+00> : vector<8xf32>
    %113 = vector.multi_reduction <add>, %110, %cst_46 [1] : vector<8x32xf32> to vector<8xf32>
    %114 = vector.shape_cast %113 : vector<8xf32> to vector<8x1xf32>
    %cst_47 = arith.constant 3.200000e+01 : f32
    %115 = vector.broadcast %cst_47 : f32 to vector<8x1xf32>
    %116 = arith.divf %114, %115 : vector<8x1xf32>
    %117 = vector.broadcast %116 : vector<8x1xf32> to vector<8x32xf32>
    %118 = arith.subf %110, %117 : vector<8x32xf32>
    %119 = arith.mulf %118, %118 : vector<8x32xf32>
    %cst_48 = arith.constant dense<0.000000e+00> : vector<8xf32>
    %120 = vector.multi_reduction <add>, %119, %cst_48 [1] : vector<8x32xf32> to vector<8xf32>
    %121 = vector.shape_cast %120 : vector<8xf32> to vector<8x1xf32>
    %cst_49 = arith.constant 3.200000e+01 : f32
    %122 = vector.broadcast %cst_49 : f32 to vector<8x1xf32>
    %123 = arith.divf %121, %122 : vector<8x1xf32>
    %124 = vector.broadcast %116 : vector<8x1xf32> to vector<8x32xf32>
    %125 = arith.subf %110, %124 : vector<8x32xf32>
    %cst_50 = arith.constant 9.99999974E-6 : f32
    %126 = vector.broadcast %cst_50 : f32 to vector<8x1xf32>
    %127 = arith.addf %123, %126 : vector<8x1xf32>
    %128 = math.rsqrt %127 : vector<8x1xf32>
    %129 = vector.broadcast %128 : vector<8x1xf32> to vector<8x32xf32>
    %130 = arith.mulf %125, %129 : vector<8x32xf32>
    %131 = vector.broadcast %111 : vector<1x32xf32> to vector<8x32xf32>
    %132 = arith.mulf %130, %131 : vector<8x32xf32>
    %133 = vector.broadcast %112 : vector<1x32xf32> to vector<8x32xf32>
    %134 = arith.addf %132, %133 : vector<8x32xf32>
    %135 = arith.truncf %134 : vector<8x32xf32> to vector<8x32xbf16>
    %c0_51 = arith.constant 0 : index
    %c0_52 = arith.constant 0 : index
    %136 = vector.load %arg11[%c0_51, %c0_52] : memref<32x32xbf16, #tpu.memory_space<vmem>>, vector<32x32xbf16>
    %cst_53 = arith.constant dense<0.000000e+00> : vector<8x32xf32>
    %137 = tpu.matmul %135, %136, %cst_53 {dimension_numbers = #tpu.dot_dimension_numbers<[1], [0], [0], [1], [0, 0, 1, 1], [], []>} : vector<8x32xbf16>, vector<32x32xbf16>, vector<8x32xf32> -> vector<8x32xf32>
    %c0_54 = arith.constant 0 : index
    %c0_55 = arith.constant 0 : index
    %138 = vector.load %arg12[%c0_54, %c0_55] : memref<1x32xf32, #tpu.memory_space<vmem>>, vector<1x32xf32>
    %139 = vector.broadcast %138 : vector<1x32xf32> to vector<8x32xf32>
    %140 = arith.addf %137, %139 : vector<8x32xf32>
    %141 = arith.truncf %3 : vector<8x32xf32> to vector<8x32xbf16>
    %c0_56 = arith.constant 0 : index
    %c0_57 = arith.constant 0 : index
    %142 = vector.load %arg13[%c0_56, %c0_57] : memref<32x64xbf16, #tpu.memory_space<vmem>>, vector<32x64xbf16>
    %cst_58 = arith.constant dense<0.000000e+00> : vector<8x64xf32>
    %143 = tpu.matmul %141, %142, %cst_58 {dimension_numbers = #tpu.dot_dimension_numbers<[1], [0], [0], [1], [0, 0, 1, 1], [], []>} : vector<8x32xbf16>, vector<32x64xbf16>, vector<8x64xf32> -> vector<8x64xf32>
    %c0_59 = arith.constant 0 : index
    %c0_60 = arith.constant 0 : index
    %144 = vector.load %arg14[%c0_59, %c0_60] : memref<1x64xf32, #tpu.memory_space<vmem>>, vector<1x64xf32>
    %145 = vector.broadcast %144 : vector<1x64xf32> to vector<8x64xf32>
    %146 = arith.addf %143, %145 : vector<8x64xf32>
    %147 = vector.extract_strided_slice %146 {offsets = [0, 0], sizes = [8, 32], strides = [1, 1]} : vector<8x64xf32> to vector<8x32xf32>
    %148 = vector.extract_strided_slice %146 {offsets = [0, 32], sizes = [8, 32], strides = [1, 1]} : vector<8x64xf32> to vector<8x32xf32>
    %c0_61 = arith.constant 0 : index
    %c0_62 = arith.constant 0 : index
    %149 = vector.load %arg15[%c0_61, %c0_62] : memref<32x32xbf16, #tpu.memory_space<vmem>>, vector<32x32xbf16>
    %c0_63 = arith.constant 0 : index
    %c0_64 = arith.constant 0 : index
    %150 = vector.load %arg16[%c0_63, %c0_64] : memref<1x32xf32, #tpu.memory_space<vmem>>, vector<1x32xf32>
    %151 = arith.truncf %140 : vector<8x32xf32> to vector<8x32xbf16>
    %152 = arith.truncf %147 : vector<8x32xf32> to vector<8x32xbf16>
    %153 = arith.truncf %148 : vector<8x32xf32> to vector<8x32xbf16>
    %154 = vector.extract_strided_slice %151 {offsets = [0, 0], sizes = [8, 8], strides = [1, 1]} : vector<8x32xbf16> to vector<8x8xbf16>
    %155 = vector.extract_strided_slice %152 {offsets = [0, 0], sizes = [8, 8], strides = [1, 1]} : vector<8x32xbf16> to vector<8x8xbf16>
    %156 = vector.extract_strided_slice %153 {offsets = [0, 0], sizes = [8, 8], strides = [1, 1]} : vector<8x32xbf16> to vector<8x8xbf16>
    %cst_65 = arith.constant dense<0.000000e+00> : vector<8x8xf32>
    %157 = tpu.matmul %154, %155, %cst_65 {dimension_numbers = #tpu.dot_dimension_numbers<[1], [1], [0], [0], [0, 0, 1, 0], [], []>} : vector<8x8xbf16>, vector<8x8xbf16>, vector<8x8xf32> -> vector<8x8xf32>
    %158 = vector.broadcast %22 : vector<1x8xf32> to vector<8x8xf32>
    %159 = arith.addf %157, %158 : vector<8x8xf32>
    %cst_66 = arith.constant dense<0xFF800000> : vector<8xf32>
    %160 = vector.multi_reduction <maximumf>, %159, %cst_66 [1] : vector<8x8xf32> to vector<8xf32>
    %161 = vector.shape_cast %160 : vector<8xf32> to vector<8x1xf32>
    %162 = vector.broadcast %161 : vector<8x1xf32> to vector<8x8xf32>
    %163 = arith.subf %159, %162 : vector<8x8xf32>
    %164 = math.exp %163 : vector<8x8xf32>
    %cst_67 = arith.constant dense<0.000000e+00> : vector<8xf32>
    %165 = vector.multi_reduction <add>, %164, %cst_67 [1] : vector<8x8xf32> to vector<8xf32>
    %166 = vector.shape_cast %165 : vector<8xf32> to vector<8x1xf32>
    %167 = tpu.reciprocal %166 {approx = true} : vector<8x1xf32> -> vector<8x1xf32>
    %168 = vector.broadcast %167 : vector<8x1xf32> to vector<8x8xf32>
    %169 = arith.mulf %164, %168 : vector<8x8xf32>
    %170 = arith.truncf %169 : vector<8x8xf32> to vector<8x8xbf16>
    %cst_68 = arith.constant dense<0.000000e+00> : vector<8x8xf32>
    %171 = tpu.matmul %170, %156, %cst_68 {dimension_numbers = #tpu.dot_dimension_numbers<[1], [0], [0], [1], [0, 0, 1, 1], [], []>} : vector<8x8xbf16>, vector<8x8xbf16>, vector<8x8xf32> -> vector<8x8xf32>
    %172 = vector.extract_strided_slice %151 {offsets = [0, 8], sizes = [8, 8], strides = [1, 1]} : vector<8x32xbf16> to vector<8x8xbf16>
    %173 = vector.extract_strided_slice %152 {offsets = [0, 8], sizes = [8, 8], strides = [1, 1]} : vector<8x32xbf16> to vector<8x8xbf16>
    %174 = vector.extract_strided_slice %153 {offsets = [0, 8], sizes = [8, 8], strides = [1, 1]} : vector<8x32xbf16> to vector<8x8xbf16>
    %cst_69 = arith.constant dense<0.000000e+00> : vector<8x8xf32>
    %175 = tpu.matmul %172, %173, %cst_69 {dimension_numbers = #tpu.dot_dimension_numbers<[1], [1], [0], [0], [0, 0, 1, 0], [], []>} : vector<8x8xbf16>, vector<8x8xbf16>, vector<8x8xf32> -> vector<8x8xf32>
    %176 = vector.broadcast %22 : vector<1x8xf32> to vector<8x8xf32>
    %177 = arith.addf %175, %176 : vector<8x8xf32>
    %cst_70 = arith.constant dense<0xFF800000> : vector<8xf32>
    %178 = vector.multi_reduction <maximumf>, %177, %cst_70 [1] : vector<8x8xf32> to vector<8xf32>
    %179 = vector.shape_cast %178 : vector<8xf32> to vector<8x1xf32>
    %180 = vector.broadcast %179 : vector<8x1xf32> to vector<8x8xf32>
    %181 = arith.subf %177, %180 : vector<8x8xf32>
    %182 = math.exp %181 : vector<8x8xf32>
    %cst_71 = arith.constant dense<0.000000e+00> : vector<8xf32>
    %183 = vector.multi_reduction <add>, %182, %cst_71 [1] : vector<8x8xf32> to vector<8xf32>
    %184 = vector.shape_cast %183 : vector<8xf32> to vector<8x1xf32>
    %185 = tpu.reciprocal %184 {approx = true} : vector<8x1xf32> -> vector<8x1xf32>
    %186 = vector.broadcast %185 : vector<8x1xf32> to vector<8x8xf32>
    %187 = arith.mulf %182, %186 : vector<8x8xf32>
    %188 = arith.truncf %187 : vector<8x8xf32> to vector<8x8xbf16>
    %cst_72 = arith.constant dense<0.000000e+00> : vector<8x8xf32>
    %189 = tpu.matmul %188, %174, %cst_72 {dimension_numbers = #tpu.dot_dimension_numbers<[1], [0], [0], [1], [0, 0, 1, 1], [], []>} : vector<8x8xbf16>, vector<8x8xbf16>, vector<8x8xf32> -> vector<8x8xf32>
    %190 = vector.extract_strided_slice %151 {offsets = [0, 16], sizes = [8, 8], strides = [1, 1]} : vector<8x32xbf16> to vector<8x8xbf16>
    %191 = vector.extract_strided_slice %152 {offsets = [0, 16], sizes = [8, 8], strides = [1, 1]} : vector<8x32xbf16> to vector<8x8xbf16>
    %192 = vector.extract_strided_slice %153 {offsets = [0, 16], sizes = [8, 8], strides = [1, 1]} : vector<8x32xbf16> to vector<8x8xbf16>
    %cst_73 = arith.constant dense<0.000000e+00> : vector<8x8xf32>
    %193 = tpu.matmul %190, %191, %cst_73 {dimension_numbers = #tpu.dot_dimension_numbers<[1], [1], [0], [0], [0, 0, 1, 0], [], []>} : vector<8x8xbf16>, vector<8x8xbf16>, vector<8x8xf32> -> vector<8x8xf32>
    %194 = vector.broadcast %22 : vector<1x8xf32> to vector<8x8xf32>
    %195 = arith.addf %193, %194 : vector<8x8xf32>
    %cst_74 = arith.constant dense<0xFF800000> : vector<8xf32>
    %196 = vector.multi_reduction <maximumf>, %195, %cst_74 [1] : vector<8x8xf32> to vector<8xf32>
    %197 = vector.shape_cast %196 : vector<8xf32> to vector<8x1xf32>
    %198 = vector.broadcast %197 : vector<8x1xf32> to vector<8x8xf32>
    %199 = arith.subf %195, %198 : vector<8x8xf32>
    %200 = math.exp %199 : vector<8x8xf32>
    %cst_75 = arith.constant dense<0.000000e+00> : vector<8xf32>
    %201 = vector.multi_reduction <add>, %200, %cst_75 [1] : vector<8x8xf32> to vector<8xf32>
    %202 = vector.shape_cast %201 : vector<8xf32> to vector<8x1xf32>
    %203 = tpu.reciprocal %202 {approx = true} : vector<8x1xf32> -> vector<8x1xf32>
    %204 = vector.broadcast %203 : vector<8x1xf32> to vector<8x8xf32>
    %205 = arith.mulf %200, %204 : vector<8x8xf32>
    %206 = arith.truncf %205 : vector<8x8xf32> to vector<8x8xbf16>
    %cst_76 = arith.constant dense<0.000000e+00> : vector<8x8xf32>
    %207 = tpu.matmul %206, %192, %cst_76 {dimension_numbers = #tpu.dot_dimension_numbers<[1], [0], [0], [1], [0, 0, 1, 1], [], []>} : vector<8x8xbf16>, vector<8x8xbf16>, vector<8x8xf32> -> vector<8x8xf32>
    %208 = vector.extract_strided_slice %151 {offsets = [0, 24], sizes = [8, 8], strides = [1, 1]} : vector<8x32xbf16> to vector<8x8xbf16>
    %209 = vector.extract_strided_slice %152 {offsets = [0, 24], sizes = [8, 8], strides = [1, 1]} : vector<8x32xbf16> to vector<8x8xbf16>
    %210 = vector.extract_strided_slice %153 {offsets = [0, 24], sizes = [8, 8], strides = [1, 1]} : vector<8x32xbf16> to vector<8x8xbf16>
    %cst_77 = arith.constant dense<0.000000e+00> : vector<8x8xf32>
    %211 = tpu.matmul %208, %209, %cst_77 {dimension_numbers = #tpu.dot_dimension_numbers<[1], [1], [0], [0], [0, 0, 1, 0], [], []>} : vector<8x8xbf16>, vector<8x8xbf16>, vector<8x8xf32> -> vector<8x8xf32>
    %212 = vector.broadcast %22 : vector<1x8xf32> to vector<8x8xf32>
    %213 = arith.addf %211, %212 : vector<8x8xf32>
    %cst_78 = arith.constant dense<0xFF800000> : vector<8xf32>
    %214 = vector.multi_reduction <maximumf>, %213, %cst_78 [1] : vector<8x8xf32> to vector<8xf32>
    %215 = vector.shape_cast %214 : vector<8xf32> to vector<8x1xf32>
    %216 = vector.broadcast %215 : vector<8x1xf32> to vector<8x8xf32>
    %217 = arith.subf %213, %216 : vector<8x8xf32>
    %218 = math.exp %217 : vector<8x8xf32>
    %cst_79 = arith.constant dense<0.000000e+00> : vector<8xf32>
    %219 = vector.multi_reduction <add>, %218, %cst_79 [1] : vector<8x8xf32> to vector<8xf32>
    %220 = vector.shape_cast %219 : vector<8xf32> to vector<8x1xf32>
    %221 = tpu.reciprocal %220 {approx = true} : vector<8x1xf32> -> vector<8x1xf32>
    %222 = vector.broadcast %221 : vector<8x1xf32> to vector<8x8xf32>
    %223 = arith.mulf %218, %222 : vector<8x8xf32>
    %224 = arith.truncf %223 : vector<8x8xf32> to vector<8x8xbf16>
    %cst_80 = arith.constant dense<0.000000e+00> : vector<8x8xf32>
    %225 = tpu.matmul %224, %210, %cst_80 {dimension_numbers = #tpu.dot_dimension_numbers<[1], [0], [0], [1], [0, 0, 1, 1], [], []>} : vector<8x8xbf16>, vector<8x8xbf16>, vector<8x8xf32> -> vector<8x8xf32>
    %226 = tpu.concatenate %171, %189, %207, %225 in 1 : vector<8x8xf32>, vector<8x8xf32>, vector<8x8xf32>, vector<8x8xf32> -> vector<8x32xf32>
    %227 = arith.truncf %226 : vector<8x32xf32> to vector<8x32xbf16>
    %cst_81 = arith.constant dense<0.000000e+00> : vector<8x32xf32>
    %228 = tpu.matmul %227, %149, %cst_81 {dimension_numbers = #tpu.dot_dimension_numbers<[1], [0], [0], [1], [0, 0, 1, 1], [], []>} : vector<8x32xbf16>, vector<32x32xbf16>, vector<8x32xf32> -> vector<8x32xf32>
    %229 = vector.broadcast %150 : vector<1x32xf32> to vector<8x32xf32>
    %230 = arith.addf %228, %229 : vector<8x32xf32>
    %231 = arith.addf %134, %230 : vector<8x32xf32>
    %c0_82 = arith.constant 0 : index
    %c0_83 = arith.constant 0 : index
    %232 = vector.load %arg17[%c0_82, %c0_83] : memref<1x32xf32, #tpu.memory_space<vmem>>, vector<1x32xf32>
    %c0_84 = arith.constant 0 : index
    %c0_85 = arith.constant 0 : index
    %233 = vector.load %arg18[%c0_84, %c0_85] : memref<1x32xf32, #tpu.memory_space<vmem>>, vector<1x32xf32>
    %cst_86 = arith.constant dense<0.000000e+00> : vector<8xf32>
    %234 = vector.multi_reduction <add>, %231, %cst_86 [1] : vector<8x32xf32> to vector<8xf32>
    %235 = vector.shape_cast %234 : vector<8xf32> to vector<8x1xf32>
    %cst_87 = arith.constant 3.200000e+01 : f32
    %236 = vector.broadcast %cst_87 : f32 to vector<8x1xf32>
    %237 = arith.divf %235, %236 : vector<8x1xf32>
    %238 = vector.broadcast %237 : vector<8x1xf32> to vector<8x32xf32>
    %239 = arith.subf %231, %238 : vector<8x32xf32>
    %240 = arith.mulf %239, %239 : vector<8x32xf32>
    %cst_88 = arith.constant dense<0.000000e+00> : vector<8xf32>
    %241 = vector.multi_reduction <add>, %240, %cst_88 [1] : vector<8x32xf32> to vector<8xf32>
    %242 = vector.shape_cast %241 : vector<8xf32> to vector<8x1xf32>
    %cst_89 = arith.constant 3.200000e+01 : f32
    %243 = vector.broadcast %cst_89 : f32 to vector<8x1xf32>
    %244 = arith.divf %242, %243 : vector<8x1xf32>
    %245 = vector.broadcast %237 : vector<8x1xf32> to vector<8x32xf32>
    %246 = arith.subf %231, %245 : vector<8x32xf32>
    %cst_90 = arith.constant 9.99999974E-6 : f32
    %247 = vector.broadcast %cst_90 : f32 to vector<8x1xf32>
    %248 = arith.addf %244, %247 : vector<8x1xf32>
    %249 = math.rsqrt %248 : vector<8x1xf32>
    %250 = vector.broadcast %249 : vector<8x1xf32> to vector<8x32xf32>
    %251 = arith.mulf %246, %250 : vector<8x32xf32>
    %252 = vector.broadcast %232 : vector<1x32xf32> to vector<8x32xf32>
    %253 = arith.mulf %251, %252 : vector<8x32xf32>
    %254 = vector.broadcast %233 : vector<1x32xf32> to vector<8x32xf32>
    %255 = arith.addf %253, %254 : vector<8x32xf32>
    %c0_91 = arith.constant 0 : index
    %c0_92 = arith.constant 0 : index
    %256 = vector.load %arg19[%c0_91, %c0_92] : memref<32x64xbf16, #tpu.memory_space<vmem>>, vector<32x64xbf16>
    %c0_93 = arith.constant 0 : index
    %c0_94 = arith.constant 0 : index
    %257 = vector.load %arg20[%c0_93, %c0_94] : memref<1x64xf32, #tpu.memory_space<vmem>>, vector<1x64xf32>
    %c0_95 = arith.constant 0 : index
    %c0_96 = arith.constant 0 : index
    %258 = vector.load %arg21[%c0_95, %c0_96] : memref<64x32xbf16, #tpu.memory_space<vmem>>, vector<64x32xbf16>
    %c0_97 = arith.constant 0 : index
    %c0_98 = arith.constant 0 : index
    %259 = vector.load %arg22[%c0_97, %c0_98] : memref<1x32xf32, #tpu.memory_space<vmem>>, vector<1x32xf32>
    %260 = arith.truncf %255 : vector<8x32xf32> to vector<8x32xbf16>
    %cst_99 = arith.constant dense<0.000000e+00> : vector<8x64xf32>
    %261 = tpu.matmul %260, %256, %cst_99 {dimension_numbers = #tpu.dot_dimension_numbers<[1], [0], [0], [1], [0, 0, 1, 1], [], []>} : vector<8x32xbf16>, vector<32x64xbf16>, vector<8x64xf32> -> vector<8x64xf32>
    %262 = vector.broadcast %257 : vector<1x64xf32> to vector<8x64xf32>
    %263 = arith.addf %261, %262 : vector<8x64xf32>
    %cst_100 = arith.constant 0.000000e+00 : f32
    %264 = vector.broadcast %cst_100 : f32 to vector<8x64xf32>
    %265 = arith.maximumf %263, %264 : vector<8x64xf32>
    %266 = arith.truncf %265 : vector<8x64xf32> to vector<8x64xbf16>
    %cst_101 = arith.constant dense<0.000000e+00> : vector<8x32xf32>
    %267 = tpu.matmul %266, %258, %cst_101 {dimension_numbers = #tpu.dot_dimension_numbers<[1], [0], [0], [1], [0, 0, 1, 1], [], []>} : vector<8x64xbf16>, vector<64x32xbf16>, vector<8x32xf32> -> vector<8x32xf32>
    %268 = vector.broadcast %259 : vector<1x32xf32> to vector<8x32xf32>
    %269 = arith.addf %267, %268 : vector<8x32xf32>
    %270 = arith.addf %255, %269 : vector<8x32xf32>
    %c0_102 = arith.constant 0 : index
    %c0_103 = arith.constant 0 : index
    %271 = vector.load %arg23[%c0_102, %c0_103] : memref<1x32xf32, #tpu.memory_space<vmem>>, vector<1x32xf32>
    %c0_104 = arith.constant 0 : index
    %c0_105 = arith.constant 0 : index
    %272 = vector.load %arg24[%c0_104, %c0_105] : memref<1x32xf32, #tpu.memory_space<vmem>>, vector<1x32xf32>
    %cst_106 = arith.constant dense<0.000000e+00> : vector<8xf32>
    %273 = vector.multi_reduction <add>, %270, %cst_106 [1] : vector<8x32xf32> to vector<8xf32>
    %274 = vector.shape_cast %273 : vector<8xf32> to vector<8x1xf32>
    %cst_107 = arith.constant 3.200000e+01 : f32
    %275 = vector.broadcast %cst_107 : f32 to vector<8x1xf32>
    %276 = arith.divf %274, %275 : vector<8x1xf32>
    %277 = vector.broadcast %276 : vector<8x1xf32> to vector<8x32xf32>
    %278 = arith.subf %270, %277 : vector<8x32xf32>
    %279 = arith.mulf %278, %278 : vector<8x32xf32>
    %cst_108 = arith.constant dense<0.000000e+00> : vector<8xf32>
    %280 = vector.multi_reduction <add>, %279, %cst_108 [1] : vector<8x32xf32> to vector<8xf32>
    %281 = vector.shape_cast %280 : vector<8xf32> to vector<8x1xf32>
    %cst_109 = arith.constant 3.200000e+01 : f32
    %282 = vector.broadcast %cst_109 : f32 to vector<8x1xf32>
    %283 = arith.divf %281, %282 : vector<8x1xf32>
    %284 = vector.broadcast %276 : vector<8x1xf32> to vector<8x32xf32>
    %285 = arith.subf %270, %284 : vector<8x32xf32>
    %cst_110 = arith.constant 9.99999974E-6 : f32
    %286 = vector.broadcast %cst_110 : f32 to vector<8x1xf32>
    %287 = arith.addf %283, %286 : vector<8x1xf32>
    %288 = math.rsqrt %287 : vector<8x1xf32>
    %289 = vector.broadcast %288 : vector<8x1xf32> to vector<8x32xf32>
    %290 = arith.mulf %285, %289 : vector<8x32xf32>
    %291 = vector.broadcast %271 : vector<1x32xf32> to vector<8x32xf32>
    %292 = arith.mulf %290, %291 : vector<8x32xf32>
    %293 = vector.broadcast %272 : vector<1x32xf32> to vector<8x32xf32>
    %294 = arith.addf %292, %293 : vector<8x32xf32>
    %c0_111 = arith.constant 0 : index
    %c0_112 = arith.constant 0 : index
    %c0_113 = arith.constant 0 : index
    %295 = vector.load %arg25[%c0_111, %c0_112, %c0_113] : memref<1x8x32xf32, #tpu.memory_space<vmem>>, vector<1x8x32xf32>
    %296 = vector.shape_cast %295 : vector<1x8x32xf32> to vector<8x32xf32>
    %297 = vector.shape_cast %294 : vector<8x32xf32> to vector<1x8x32xf32>
    tpu.vector_store %arg25[%c0_111, %c0_112, %c0_113], %297 {strides = array<i32>} : memref<1x8x32xf32, #tpu.memory_space<vmem>>, vector<1x8x32xf32>,
    return
  }
  func.func @transform_0(%arg0: i32) -> (i32, i32, i32) {
    %c0_i32 = arith.constant 0 : i32
    %c0_i32_0 = arith.constant 0 : i32
    %c0_i32_1 = arith.constant 0 : i32
    return %arg0, %c0_i32, %c0_i32_0 : i32, i32, i32
  }
  func.func @transform_1(%arg0: i32) -> (i32, i32, i32) {
    %c0_i32 = arith.constant 0 : i32
    %c0_i32_0 = arith.constant 0 : i32
    %c0_i32_1 = arith.constant 0 : i32
    return %arg0, %c0_i32, %c0_i32_0 : i32, i32, i32
  }
  func.func @transform_2(%arg0: i32) -> (i32, i32, i32) {
    %c0_i32 = arith.constant 0 : i32
    %c0_i32_0 = arith.constant 0 : i32
    %c0_i32_1 = arith.constant 0 : i32
    return %arg0, %c0_i32, %c0_i32_0 : i32, i32, i32
  }
  func.func @transform_3(%arg0: i32) -> (i32, i32, i32) {
    %c0_i32 = arith.constant 0 : i32
    %c0_i32_0 = arith.constant 0 : i32
    %c0_i32_1 = arith.constant 0 : i32
    return %arg0, %c0_i32, %c0_i32_0 : i32, i32, i32
  }
  func.func @transform_4(%arg0: i32) -> (i32, i32) {
    %c0_i32 = arith.constant 0 : i32
    %c0_i32_0 = arith.constant 0 : i32
    %c0_i32_1 = arith.constant 0 : i32
    return %c0_i32, %c0_i32_0 : i32, i32
  }
  func.func @transform_5(%arg0: i32) -> (i32, i32) {
    %c0_i32 = arith.constant 0 : i32
    %c0_i32_0 = arith.constant 0 : i32
    %c0_i32_1 = arith.constant 0 : i32
    return %c0_i32, %c0_i32_0 : i32, i32
  }
  func.func @transform_6(%arg0: i32) -> (i32, i32) {
    %c0_i32 = arith.constant 0 : i32
    %c0_i32_0 = arith.constant 0 : i32
    %c0_i32_1 = arith.constant 0 : i32
    return %c0_i32, %c0_i32_0 : i32, i32
  }
  func.func @transform_7(%arg0: i32) -> (i32, i32) {
    %c0_i32 = arith.constant 0 : i32
    %c0_i32_0 = arith.constant 0 : i32
    %c0_i32_1 = arith.constant 0 : i32
    return %c0_i32, %c0_i32_0 : i32, i32
  }
  func.func @transform_8(%arg0: i32) -> (i32, i32) {
    %c0_i32 = arith.constant 0 : i32
    %c0_i32_0 = arith.constant 0 : i32
    %c0_i32_1 = arith.constant 0 : i32
    return %c0_i32, %c0_i32_0 : i32, i32
  }
  func.func @transform_9(%arg0: i32) -> (i32, i32) {
    %c0_i32 = arith.constant 0 : i32
    %c0_i32_0 = arith.constant 0 : i32
    %c0_i32_1 = arith.constant 0 : i32
    return %c0_i32, %c0_i32_0 : i32, i32
  }
  func.func @transform_10(%arg0: i32) -> (i32, i32) {
    %c0_i32 = arith.constant 0 : i32
    %c0_i32_0 = arith.constant 0 : i32
    %c0_i32_1 = arith.constant 0 : i32
    return %c0_i32, %c0_i32_0 : i32, i32
  }
  func.func @transform_11(%arg0: i32) -> (i32, i32) {
    %c0_i32 = arith.constant 0 : i32
    %c0_i32_0 = arith.constant 0 : i32
    %c0_i32_1 = arith.constant 0 : i32
    return %c0_i32, %c0_i32_0 : i32, i32
  }
  func.func @transform_12(%arg0: i32) -> (i32, i32) {
    %c0_i32 = arith.constant 0 : i32
    %c0_i32_0 = arith.constant 0 : i32
    %c0_i32_1 = arith.constant 0 : i32
    return %c0_i32, %c0_i32_0 : i32, i32
  }
  func.func @transform_13(%arg0: i32) -> (i32, i32) {
    %c0_i32 = arith.constant 0 : i32
    %c0_i32_0 = arith.constant 0 : i32
    %c0_i32_1 = arith.constant 0 : i32
    return %c0_i32, %c0_i32_0 : i32, i32
  }
  func.func @transform_14(%arg0: i32) -> (i32, i32) {
    %c0_i32 = arith.constant 0 : i32
    %c0_i32_0 = arith.constant 0 : i32
    %c0_i32_1 = arith.constant 0 : i32
    return %c0_i32, %c0_i32_0 : i32, i32
  }
  func.func @transform_15(%arg0: i32) -> (i32, i32) {
    %c0_i32 = arith.constant 0 : i32
    %c0_i32_0 = arith.constant 0 : i32
    %c0_i32_1 = arith.constant 0 : i32
    return %c0_i32, %c0_i32_0 : i32, i32
  }
  func.func @transform_16(%arg0: i32) -> (i32, i32) {
    %c0_i32 = arith.constant 0 : i32
    %c0_i32_0 = arith.constant 0 : i32
    %c0_i32_1 = arith.constant 0 : i32
    return %c0_i32, %c0_i32_0 : i32, i32
  }
  func.func @transform_17(%arg0: i32) -> (i32, i32) {
    %c0_i32 = arith.constant 0 : i32
    %c0_i32_0 = arith.constant 0 : i32
    %c0_i32_1 = arith.constant 0 : i32
    return %c0_i32, %c0_i32_0 : i32, i32
  }
  func.func @transform_18(%arg0: i32) -> (i32, i32) {
    %c0_i32 = arith.constant 0 : i32
    %c0_i32_0 = arith.constant 0 : i32
    %c0_i32_1 = arith.constant 0 : i32
    return %c0_i32, %c0_i32_0 : i32, i32
  }
  func.func @transform_19(%arg0: i32) -> (i32, i32) {
    %c0_i32 = arith.constant 0 : i32
    %c0_i32_0 = arith.constant 0 : i32
    %c0_i32_1 = arith.constant 0 : i32
    return %c0_i32, %c0_i32_0 : i32, i32
  }
  func.func @transform_20(%arg0: i32) -> (i32, i32) {
    %c0_i32 = arith.constant 0 : i32
    %c0_i32_0 = arith.constant 0 : i32
    %c0_i32_1 = arith.constant 0 : i32
    return %c0_i32, %c0_i32_0 : i32, i32
  }
  func.func @transform_21(%arg0: i32) -> (i32, i32) {
    %c0_i32 = arith.constant 0 : i32
    %c0_i32_0 = arith.constant 0 : i32
    %c0_i32_1 = arith.constant 0 : i32
    return %c0_i32, %c0_i32_0 : i32, i32
  }
  func.func @transform_22(%arg0: i32) -> (i32, i32) {
    %c0_i32 = arith.constant 0 : i32
    %c0_i32_0 = arith.constant 0 : i32
    %c0_i32_1 = arith.constant 0 : i32
    return %c0_i32, %c0_i32_0 : i32, i32
  }
  func.func @transform_23(%arg0: i32) -> (i32, i32) {
    %c0_i32 = arith.constant 0 : i32
    %c0_i32_0 = arith.constant 0 : i32
    %c0_i32_1 = arith.constant 0 : i32
    return %c0_i32, %c0_i32_0 : i32, i32
  }
  func.func @transform_24(%arg0: i32) -> (i32, i32, i32) {
    %c0_i32 = arith.constant 0 : i32
    %c0_i32_0 = arith.constant 0 : i32
    %c0_i32_1 = arith.constant 0 : i32
    return %arg0, %c0_i32, %c0_i32_0 : i32, i32, i32
  }
}

</mosaic_0001>

<llo_original>
// kernel: transformer_forward.3
$region0: #{transformer_forward.3}
  #allocation0 [shape = 'u32[]', space=smem, size = 0x4, offset = 0x4, fixed_abs, tag = 'smem constant byte address 0x4 - core index']
  #allocation1 [shape = 'u32[144,128]{1,0:T(1,128)}', space=vmem, size = 0x12000, scoped, tag = 'internal scratch']
  %s0 = inlined_call_operand.vmem [shape: f32[2,8,32], index: 0, kind: input, shape index: {}]
  %s1 = inlined_call_operand.vmem [shape: f32[2,1,8], index: 1, kind: input, shape index: {}]
  %s2 = inlined_call_operand.vmem [shape: bf16[32,96], index: 2, kind: input, shape index: {}]
  %s3 = inlined_call_operand.vmem [shape: f32[1,96], index: 3, kind: input, shape index: {}]
  %s4 = inlined_call_operand.vmem [shape: bf16[32,32], index: 4, kind: input, shape index: {}]
  %s5 = inlined_call_operand.vmem [shape: f32[1,32], index: 5, kind: input, shape index: {}]
  %s6 = inlined_call_operand.vmem [shape: f32[1,32], index: 6, kind: input, shape index: {}]
  %s7 = inlined_call_operand.vmem [shape: f32[1,32], index: 7, kind: input, shape index: {}]
  %s8 = inlined_call_operand.vmem [shape: bf16[32,64], index: 8, kind: input, shape index: {}]
  %s9 = inlined_call_operand.vmem [shape: f32[1,64], index: 9, kind: input, shape index: {}]
  %s10 = inlined_call_operand.vmem [shape: bf16[64,32], index: 10, kind: input, shape index: {}]
  %s11 = inlined_call_operand.vmem [shape: f32[1,32], index: 11, kind: input, shape index: {}]
  %s12 = inlined_call_operand.vmem [shape: f32[1,32], index: 12, kind: input, shape index: {}]
  %s13 = inlined_call_operand.vmem [shape: f32[1,32], index: 13, kind: input, shape index: {}]
  %s14 = inlined_call_operand.vmem [shape: f32[2,8,32], index: 14, kind: output, shape index: {}]
  %s15 = sld [smem:[#allocation0]]
  $region89: #{transformer_forward.3} parent=0
    _
  %s17 = ssub.s32 1, %s15
  %s18 = scalar_select 0, %s17, %s15
  loop: start=0, step=1, limit=4
  $region2: #{transformer_forward.3} parent=0 // loop_pre_header
    _
  $region3: #{transformer_forward.3} parent=0 // loop_header
    %s20 = sphi 0, %s24
    %p21 = scmp.ge.s32.totalorder %s20, 4
    %s30 = sphi 0, %s32
    %s33 = sphi 0, %s30
    %s34 = sphi 0, %s33
    %s50 = sphi 0, %s34
    %s56 = sphi 0, %s58
    %s59 = sphi 0, %s56
    %s60 = sphi 0, %s59
    %s76 = sphi 0, %s60
    %s80 = sphi 0, %s80
    %s82 = sphi 0, %s80
    %s83 = sphi 0, %s82
    %s97 = sphi 0, %s83
    %s101 = sphi 0, %s101
    %s103 = sphi 0, %s101
    %s104 = sphi 0, %s103
    %s118 = sphi 0, %s104
    %s122 = sphi 0, %s122
    %s124 = sphi 0, %s122
    %s125 = sphi 0, %s124
    %s139 = sphi 0, %s125
    %s143 = sphi 0, %s143
    %s145 = sphi 0, %s143
    %s146 = sphi 0, %s145
    %s160 = sphi 0, %s146
    %s164 = sphi 0, %s164
    %s166 = sphi 0, %s164
    %s167 = sphi 0, %s166
    %s181 = sphi 0, %s167
    %s185 = sphi 0, %s185
    %s187 = sphi 0, %s185
    %s188 = sphi 0, %s187
    %s202 = sphi 0, %s188
    %s206 = sphi 0, %s206
    %s208 = sphi 0, %s206
    %s209 = sphi 0, %s208
    %s223 = sphi 0, %s209
    %s227 = sphi 0, %s227
    %s229 = sphi 0, %s227
    %s230 = sphi 0, %s229
    %s244 = sphi 0, %s230
    %s248 = sphi 0, %s248
    %s250 = sphi 0, %s248
    %s251 = sphi 0, %s250
    %s265 = sphi 0, %s251
    %s269 = sphi 0, %s269
    %s271 = sphi 0, %s269
    %s272 = sphi 0, %s271
    %s286 = sphi 0, %s272
    %s290 = sphi 0, %s290
    %s292 = sphi 0, %s290
    %s293 = sphi 0, %s292
    %s307 = sphi 0, %s293
    %s311 = sphi 0, %s311
    %s313 = sphi 0, %s311
    %s314 = sphi 0, %s313
    %s328 = sphi 0, %s314
    %s334 = sphi 0, %s336
    %s337 = sphi 0, %s334
    %s338 = sphi 0, %s337
    %s354 = sphi 0, %s338
  $region4: #{transformer_forward.3} parent=0 // loop_header_branch
    %23 = sbr.rel (%p21) target = $region8
  $region5: #{transformer_forward.3} parent=0 // loop_body
    %s25 = ssub.s32 %s20, 1
    %s26 = ssub.s32 %s20, 2
    %s27 = sadd.s32 %s20, 1
    %s28 = ssub.s32 %s20, %s27
    %p29 = scmp.eq.s32.totalorder %s28, 0
    %s31 = sadd.s32 %s30, 1
    %s32 = scalar_select %p29, %s30, %s31
    %p35 = pneg %p29
    %p36 = scmp.eq.s32.totalorder %s20, 1
    %p37 = por %p35, %p36
    %p38 = scmp.ne.s32.totalorder %s30, %s33
    %p39 = scmp.eq.s32.totalorder %s20, 0
    %p40 = por %p38, %p39
    %p41 = scmp.ne.s32.totalorder %s30, %s33
    %p42 = scmp.eq.s32.totalorder %s25, 1
    %p43 = por %p41, %p42
    %p44 = scmp.ne.s32.totalorder %s33, %s34
    %p45 = scmp.eq.s32.totalorder %s25, 0
    %p46 = por %p44, %p45
    %p47 = scmp.ne.s32.totalorder %s33, %s34
    %p48 = scmp.eq.s32.totalorder %s26, 1
    %p49 = por %p47, %p48
    %p51 = scmp.ne.s32.totalorder %s34, %s50
    %p52 = scmp.eq.s32.totalorder %s26, 0
    %p53 = por %p51, %p52
    %s54 = ssub.s32 %s20, %s27
    %p55 = scmp.eq.s32.totalorder %s54, 0
    %s57 = sadd.s32 %s56, 1
    %s58 = scalar_select %p55, %s56, %s57
    %p61 = pneg %p55
    %p62 = scmp.eq.s32.totalorder %s20, 1
    %p63 = por %p61, %p62
    %p64 = scmp.ne.s32.totalorder %s56, %s59
    %p65 = scmp.eq.s32.totalorder %s20, 0
    %p66 = por %p64, %p65
    %p67 = scmp.ne.s32.totalorder %s56, %s59
    %p68 = scmp.eq.s32.totalorder %s25, 1
    %p69 = por %p67, %p68
    %p70 = scmp.ne.s32.totalorder %s59, %s60
    %p71 = scmp.eq.s32.totalorder %s25, 0
    %p72 = por %p70, %p71
    %p73 = scmp.ne.s32.totalorder %s59, %s60
    %p74 = scmp.eq.s32.totalorder %s26, 1
    %p75 = por %p73, %p74
    %p77 = scmp.ne.s32.totalorder %s60, %s76
    %p78 = scmp.eq.s32.totalorder %s26, 0
    %p79 = por %p77, %p78
    %s81 = sadd.s32 %s80, 1
    %p84 = scmp.eq.s32.totalorder %s20, 1
    %p85 = scmp.ne.s32.totalorder %s80, %s82
    %p86 = scmp.eq.s32.totalorder %s20, 0
    %p87 = por %p85, %p86
    %p88 = scmp.ne.s32.totalorder %s80, %s82
    %p89 = scmp.eq.s32.totalorder %s25, 1
    %p90 = por %p88, %p89
    %p91 = scmp.ne.s32.totalorder %s82, %s83
    %p92 = scmp.eq.s32.totalorder %s25, 0
    %p93 = por %p91, %p92
    %p94 = scmp.ne.s32.totalorder %s82, %s83
    %p95 = scmp.eq.s32.totalorder %s26, 1
    %p96 = por %p94, %p95
    %p98 = scmp.ne.s32.totalorder %s83, %s97
    %p99 = scmp.eq.s32.totalorder %s26, 0
    %p100 = por %p98, %p99
    %s102 = sadd.s32 %s101, 1
    %p105 = scmp.eq.s32.totalorder %s20, 1
    %p106 = scmp.ne.s32.totalorder %s101, %s103
    %p107 = scmp.eq.s32.totalorder %s20, 0
    %p108 = por %p106, %p107
    %p109 = scmp.ne.s32.totalorder %s101, %s103
    %p110 = scmp.eq.s32.totalorder %s25, 1
    %p111 = por %p109, %p110
    %p112 = scmp.ne.s32.totalorder %s103, %s104
    %p113 = scmp.eq.s32.totalorder %s25, 0
    %p114 = por %p112, %p113
    %p115 = scmp.ne.s32.totalorder %s103, %s104
    %p116 = scmp.eq.s32.totalorder %s26, 1
    %p117 = por %p115, %p116
    %p119 = scmp.ne.s32.totalorder %s104, %s118
    %p120 = scmp.eq.s32.totalorder %s26, 0
    %p121 = por %p119, %p120
    %s123 = sadd.s32 %s122, 1
    %p126 = scmp.eq.s32.totalorder %s20, 1
    %p127 = scmp.ne.s32.totalorder %s122, %s124
    %p128 = scmp.eq.s32.totalorder %s20, 0
    %p129 = por %p127, %p128
    %p130 = scmp.ne.s32.totalorder %s122, %s124
    %p131 = scmp.eq.s32.totalorder %s25, 1
    %p132 = por %p130, %p131
    %p133 = scmp.ne.s32.totalorder %s124, %s125
    %p134 = scmp.eq.s32.totalorder %s25, 0
    %p135 = por %p133, %p134
    %p136 = scmp.ne.s32.totalorder %s124, %s125
    %p137 = scmp.eq.s32.totalorder %s26, 1
    %p138 = por %p136, %p137
    %p140 = scmp.ne.s32.totalorder %s125, %s139
    %p141 = scmp.eq.s32.totalorder %s26, 0
    %p142 = por %p140, %p141
    %s144 = sadd.s32 %s143, 1
    %p147 = scmp.eq.s32.totalorder %s20, 1
    %p148 = scmp.ne.s32.totalorder %s143, %s145
    %p149 = scmp.eq.s32.totalorder %s20, 0
    %p150 = por %p148, %p149
    %p151 = scmp.ne.s32.totalorder %s143, %s145
    %p152 = scmp.eq.s32.totalorder %s25, 1
    %p153 = por %p151, %p152
    %p154 = scmp.ne.s32.totalorder %s145, %s146
    %p155 = scmp.eq.s32.totalorder %s25, 0
    %p156 = por %p154, %p155
    %p157 = scmp.ne.s32.totalorder %s145, %s146
    %p158 = scmp.eq.s32.totalorder %s26, 1
    %p159 = por %p157, %p158
    %p161 = scmp.ne.s32.totalorder %s146, %s160
    %p162 = scmp.eq.s32.totalorder %s26, 0
    %p163 = por %p161, %p162
    %s165 = sadd.s32 %s164, 1
    %p168 = scmp.eq.s32.totalorder %s20, 1
    %p169 = scmp.ne.s32.totalorder %s164, %s166
    %p170 = scmp.eq.s32.totalorder %s20, 0
    %p171 = por %p169, %p170
    %p172 = scmp.ne.s32.totalorder %s164, %s166
    %p173 = scmp.eq.s32.totalorder %s25, 1
    %p174 = por %p172, %p173
    %p175 = scmp.ne.s32.totalorder %s166, %s167
    %p176 = scmp.eq.s32.totalorder %s25, 0
    %p177 = por %p175, %p176
    %p178 = scmp.ne.s32.totalorder %s166, %s167
    %p179 = scmp.eq.s32.totalorder %s26, 1
    %p180 = por %p178, %p179
    %p182 = scmp.ne.s32.totalorder %s167, %s181
    %p183 = scmp.eq.s32.totalorder %s26, 0
    %p184 = por %p182, %p183
    %s186 = sadd.s32 %s185, 1
    %p189 = scmp.eq.s32.totalorder %s20, 1
    %p190 = scmp.ne.s32.totalorder %s185, %s187
    %p191 = scmp.eq.s32.totalorder %s20, 0
    %p192 = por %p190, %p191
    %p193 = scmp.ne.s32.totalorder %s185, %s187
    %p194 = scmp.eq.s32.totalorder %s25, 1
    %p195 = por %p193, %p194
    %p196 = scmp.ne.s32.totalorder %s187, %s188
    %p197 = scmp.eq.s32.totalorder %s25, 0
    %p198 = por %p196, %p197
    %p199 = scmp.ne.s32.totalorder %s187, %s188
    %p200 = scmp.eq.s32.totalorder %s26, 1
    %p201 = por %p199, %p200
    %p203 = scmp.ne.s32.totalorder %s188, %s202
    %p204 = scmp.eq.s32.totalorder %s26, 0
    %p205 = por %p203, %p204
    %s207 = sadd.s32 %s206, 1
    %p210 = scmp.eq.s32.totalorder %s20, 1
    %p211 = scmp.ne.s32.totalorder %s206, %s208
    %p212 = scmp.eq.s32.totalorder %s20, 0
    %p213 = por %p211, %p212
    %p214 = scmp.ne.s32.totalorder %s206, %s208
    %p215 = scmp.eq.s32.totalorder %s25, 1
    %p216 = por %p214, %p215
    %p217 = scmp.ne.s32.totalorder %s208, %s209
    %p218 = scmp.eq.s32.totalorder %s25, 0
    %p219 = por %p217, %p218
    %p220 = scmp.ne.s32.totalorder %s208, %s209
    %p221 = scmp.eq.s32.totalorder %s26, 1
    %p222 = por %p220, %p221
    %p224 = scmp.ne.s32.totalorder %s209, %s223
    %p225 = scmp.eq.s32.totalorder %s26, 0
    %p226 = por %p224, %p225
    %s228 = sadd.s32 %s227, 1
    %p231 = scmp.eq.s32.totalorder %s20, 1
    %p232 = scmp.ne.s32.totalorder %s227, %s229
    %p233 = scmp.eq.s32.totalorder %s20, 0
    %p234 = por %p232, %p233
    %p235 = scmp.ne.s32.totalorder %s227, %s229
    %p236 = scmp.eq.s32.totalorder %s25, 1
    %p237 = por %p235, %p236
    %p238 = scmp.ne.s32.totalorder %s229, %s230
    %p239 = scmp.eq.s32.totalorder %s25, 0
    %p240 = por %p238, %p239
    %p241 = scmp.ne.s32.totalorder %s229, %s230
    %p242 = scmp.eq.s32.totalorder %s26, 1
    %p243 = por %p241, %p242
    %p245 = scmp.ne.s32.totalorder %s230, %s244
    %p246 = scmp.eq.s32.totalorder %s26, 0
    %p247 = por %p245, %p246
    %s249 = sadd.s32 %s248, 1
    %p252 = scmp.eq.s32.totalorder %s20, 1
    %p253 = scmp.ne.s32.totalorder %s248, %s250
    %p254 = scmp.eq.s32.totalorder %s20, 0
    %p255 = por %p253, %p254
    %p256 = scmp.ne.s32.totalorder %s248, %s250
    %p257 = scmp.eq.s32.totalorder %s25, 1
    %p258 = por %p256, %p257
    %p259 = scmp.ne.s32.totalorder %s250, %s251
    %p260 = scmp.eq.s32.totalorder %s25, 0
    %p261 = por %p259, %p260
    %p262 = scmp.ne.s32.totalorder %s250, %s251
    %p263 = scmp.eq.s32.totalorder %s26, 1
    %p264 = por %p262, %p263
    %p266 = scmp.ne.s32.totalorder %s251, %s265
    %p267 = scmp.eq.s32.totalorder %s26, 0
    %p268 = por %p266, %p267
    %s270 = sadd.s32 %s269, 1
    %p273 = scmp.eq.s32.totalorder %s20, 1
    %p274 = scmp.ne.s32.totalorder %s269, %s271
    %p275 = scmp.eq.s32.totalorder %s20, 0
    %p276 = por %p274, %p275
    %p277 = scmp.ne.s32.totalorder %s269, %s271
    %p278 = scmp.eq.s32.totalorder %s25, 1
    %p279 = por %p277, %p278
    %p280 = scmp.ne.s32.totalorder %s271, %s272
    %p281 = scmp.eq.s32.totalorder %s25, 0
    %p282 = por %p280, %p281
    %p283 = scmp.ne.s32.totalorder %s271, %s272
    %p284 = scmp.eq.s32.totalorder %s26, 1
    %p285 = por %p283, %p284
    %p287 = scmp.ne.s32.totalorder %s272, %s286
    %p288 = scmp.eq.s32.totalorder %s26, 0
    %p289 = por %p287, %p288
    %s291 = sadd.s32 %s290, 1
    %p294 = scmp.eq.s32.totalorder %s20, 1
    %p295 = scmp.ne.s32.totalorder %s290, %s292
    %p296 = scmp.eq.s32.totalorder %s20, 0
    %p297 = por %p295, %p296
    %p298 = scmp.ne.s32.totalorder %s290, %s292
    %p299 = scmp.eq.s32.totalorder %s25, 1
    %p300 = por %p298, %p299
    %p301 = scmp.ne.s32.totalorder %s292, %s293
    %p302 = scmp.eq.s32.totalorder %s25, 0
    %p303 = por %p301, %p302
    %p304 = scmp.ne.s32.totalorder %s292, %s293
    %p305 = scmp.eq.s32.totalorder %s26, 1
    %p306 = por %p304, %p305
    %p308 = scmp.ne.s32.totalorder %s293, %s307
    %p309 = scmp.eq.s32.totalorder %s26, 0
    %p310 = por %p308, %p309
    %s312 = sadd.s32 %s311, 1
    %p315 = scmp.eq.s32.totalorder %s20, 1
    %p316 = scmp.ne.s32.totalorder %s311, %s313
    %p317 = scmp.eq.s32.totalorder %s20, 0
    %p318 = por %p316, %p317
    %p319 = scmp.ne.s32.totalorder %s311, %s313
    %p320 = scmp.eq.s32.totalorder %s25, 1
    %p321 = por %p319, %p320
    %p322 = scmp.ne.s32.totalorder %s313, %s314
    %p323 = scmp.eq.s32.totalorder %s25, 0
    %p324 = por %p322, %p323
    %p325 = scmp.ne.s32.totalorder %s313, %s314
    %p326 = scmp.eq.s32.totalorder %s26, 1
    %p327 = por %p325, %p326
    %p329 = scmp.ne.s32.totalorder %s314, %s328
    %p330 = scmp.eq.s32.totalorder %s26, 0
    %p331 = por %p329, %p330
    %s332 = ssub.s32 %s20, %s27
    %p333 = scmp.eq.s32.totalorder %s332, 0
    %s335 = sadd.s32 %s334, 1
    %s336 = scalar_select %p333, %s334, %s335
    %p339 = pneg %p333
    %p340 = scmp.eq.s32.totalorder %s20, 1
    %p341 = por %p339, %p340
    %p342 = scmp.ne.s32.totalorder %s334, %s337
    %p343 = scmp.eq.s32.totalorder %s20, 0
    %p344 = por %p342, %p343
    %p345 = scmp.ne.s32.totalorder %s334, %s337
    %p346 = scmp.eq.s32.totalorder %s25, 1
    %p347 = por %p345, %p346
    %p348 = scmp.ne.s32.totalorder %s337, %s338
    %p349 = scmp.eq.s32.totalorder %s25, 0
    %p350 = por %p348, %p349
    %p351 = scmp.ne.s32.totalorder %s337, %s338
    %p352 = scmp.eq.s32.totalorder %s26, 1
    %p353 = por %p351, %p352
    %p355 = scmp.ne.s32.totalorder %s338, %s354
    %p356 = scmp.eq.s32.totalorder %s26, 0
    %p357 = por %p355, %p356
    %p358 = scmp.le.s32.totalorder 1, %s20
    %p359 = scmp.lt.s32.totalorder %s20, 3
    %p360 = pnand %p358, %p359
    %p361 = pneg %p360
    // Predicated region
    $region9: #{transformer_forward.3} parent=5 // pred_check
      _
    $region10: #{transformer_forward.3} parent=5 // pred_check_branch
      %363 = sbr.rel (%p360) target = $region12
    $region11: #{transformer_forward.3} parent=5 // pred_region
      %s364 = ssub.s32 %s20, 1
      // Predicated region
      $region13: #{transformer_forward.3} parent=11 // pred_check
        %p365 = pneg %p93
      $region14: #{transformer_forward.3} parent=11 // pred_check_branch
        %367 = sbr.rel (%p365) target = $region16
      $region15: #{transformer_forward.3} parent=11 // pred_region
        _
      $region16: #{transformer_forward.3} parent=11 // pred_fallthru
        _
      // Predicated region
      $region17: #{transformer_forward.3} parent=11 // pred_check
        %p368 = pneg %p114
      $region18: #{transformer_forward.3} parent=11 // pred_check_branch
        %370 = sbr.rel (%p368) target = $region20
      $region19: #{transformer_forward.3} parent=11 // pred_region
        _
      $region20: #{transformer_forward.3} parent=11 // pred_fallthru
        _
      // Predicated region
      $region21: #{transformer_forward.3} parent=11 // pred_check
        %p371 = pneg %p135
      $region22: #{transformer_forward.3} parent=11 // pred_check_branch
        %373 = sbr.rel (%p371) target = $region24
      $region23: #{transformer_forward.3} parent=11 // pred_region
        _
      $region24: #{transformer_forward.3} parent=11 // pred_fallthru
        _
      // Predicated region
      $region25: #{transformer_forward.3} parent=11 // pred_check
        %p374 = pneg %p156
      $region26: #{transformer_forward.3} parent=11 // pred_check_branch
        %376 = sbr.rel (%p374) target = $region28
      $region27: #{transformer_forward.3} parent=11 // pred_region
        _
      $region28: #{transformer_forward.3} parent=11 // pred_fallthru
        _
      // Predicated region
      $region29: #{transformer_forward.3} parent=11 // pred_check
        %p377 = pneg %p177
      $region30: #{transformer_forward.3} parent=11 // pred_check_branch
        %379 = sbr.rel (%p377) target = $region32
      $region31: #{transformer_forward.3} parent=11 // pred_region
        _
      $region32: #{transformer_forward.3} parent=11 // pred_fallthru
        _
      // Predicated region
      $region33: #{transformer_forward.3} parent=11 // pred_check
        %p380 = pneg %p198
      $region34: #{transformer_forward.3} parent=11 // pred_check_branch
        %382 = sbr.rel (%p380) target = $region36
      $region35: #{transformer_forward.3} parent=11 // pred_region
        _
      $region36: #{transformer_forward.3} parent=11 // pred_fallthru
        _
      // Predicated region
      $region37: #{transformer_forward.3} parent=11 // pred_check
        %p383 = pneg %p219
      $region38: #{transformer_forward.3} parent=11 // pred_check_branch
        %385 = sbr.rel (%p383) target = $region40
      $region39: #{transformer_forward.3} parent=11 // pred_region
        _
      $region40: #{transformer_forward.3} parent=11 // pred_fallthru
        _
      // Predicated region
      $region41: #{transformer_forward.3} parent=11 // pred_check
        %p386 = pneg %p240
      $region42: #{transformer_forward.3} parent=11 // pred_check_branch
        %388 = sbr.rel (%p386) target = $region44
      $region43: #{transformer_forward.3} parent=11 // pred_region
        _
      $region44: #{transformer_forward.3} parent=11 // pred_fallthru
        _
      // Predicated region
      $region45: #{transformer_forward.3} parent=11 // pred_check
        %p389 = pneg %p261
      $region46: #{transformer_forward.3} parent=11 // pred_check_branch
        %391 = sbr.rel (%p389) target = $region48
      $region47: #{transformer_forward.3} parent=11 // pred_region
        _
      $region48: #{transformer_forward.3} parent=11 // pred_fallthru
        _
      // Predicated region
      $region49: #{transformer_forward.3} parent=11 // pred_check
        %p392 = pneg %p282
      $region50: #{transformer_forward.3} parent=11 // pred_check_branch
        %394 = sbr.rel (%p392) target = $region52
      $region51: #{transformer_forward.3} parent=11 // pred_region
        _
      $region52: #{transformer_forward.3} parent=11 // pred_fallthru
        _
      // Predicated region
      $region53: #{transformer_forward.3} parent=11 // pred_check
        %p395 = pneg %p303
      $region54: #{transformer_forward.3} parent=11 // pred_check_branch
        %397 = sbr.rel (%p395) target = $region56
      $region55: #{transformer_forward.3} parent=11 // pred_region
        _
      $region56: #{transformer_forward.3} parent=11 // pred_fallthru
        _
      // Predicated region
      $region57: #{transformer_forward.3} parent=11 // pred_check
        %p398 = pneg %p324
      $region58: #{transformer_forward.3} parent=11 // pred_check_branch
        %400 = sbr.rel (%p398) target = $region60
      $region59: #{transformer_forward.3} parent=11 // pred_region
        _
      $region60: #{transformer_forward.3} parent=11 // pred_fallthru
        _
    $region12: #{transformer_forward.3} parent=5 // pred_fallthru
      _
    %p401 = scmp.lt.s32.totalorder %s20, 2
    // Predicated region
    $region61: #{transformer_forward.3} parent=5 // pred_check
      %p402 = pneg %p401
    $region62: #{transformer_forward.3} parent=5 // pred_check_branch
      %404 = sbr.rel (%p402) target = $region64
    $region63: #{transformer_forward.3} parent=5 // pred_region
      // Predicated region
      $region65: #{transformer_forward.3} parent=63 // pred_check
        %p405 = pneg %p40
      $region66: #{transformer_forward.3} parent=63 // pred_check_branch
        %407 = sbr.rel (%p405) target = $region68
      $region67: #{transformer_forward.3} parent=63 // pred_region
        %p408 = scmp.lt.s32.totalorder %s20, 1
        %s409 = scalar_select %p408, %s20, 1
        %s410 = smul.addr %s409, 8
        %s411 = scalar_lea.vmem %s0, %s410
      $region68: #{transformer_forward.3} parent=63 // pred_fallthru
        _
      // Predicated region
      $region69: #{transformer_forward.3} parent=63 // pred_check
        %p412 = pneg %p66
      $region70: #{transformer_forward.3} parent=63 // pred_check_branch
        %414 = sbr.rel (%p412) target = $region72
      $region71: #{transformer_forward.3} parent=63 // pred_region
        %p415 = scmp.lt.s32.totalorder %s20, 1
        %s416 = scalar_select %p415, %s20, 1
        %s417 = scalar_lea.vmem %s1, %s416
      $region72: #{transformer_forward.3} parent=63 // pred_fallthru
        _
    $region64: #{transformer_forward.3} parent=5 // pred_fallthru
      _
    %p418 = scmp.le.s32.totalorder 1, %s20
    %p419 = scmp.lt.s32.totalorder %s20, 3
    %p420 = pnand %p418, %p419
    %p421 = pneg %p420
    // Predicated region
    $region73: #{transformer_forward.3} parent=5 // pred_check
      _
    $region74: #{transformer_forward.3} parent=5 // pred_check_branch
      %423 = sbr.rel (%p420) target = $region76
    $region75: #{transformer_forward.3} parent=5 // pred_region
      %s424 = ssub.s32 %s20, 1
      %p425 = scmp.lt.s32.totalorder %s25, 1
      %s426 = scalar_select %p425, %s25, 1
      %s427 = smul.addr %s426, 8
      %s428 = scalar_lea.vmem %s0, %s427
      %p429 = pneg %p46
      %p430 = pneg %p43
      %p431 = scmp.lt.s32.totalorder %s25, 1
      %s432 = scalar_select %p431, %s25, 1
      %s433 = scalar_lea.vmem %s1, %s432
      %p434 = pneg %p72
      %p435 = pneg %p69
      %p436 = pneg %p93
      %p437 = pneg %p90
      %p438 = pneg %p114
      %p439 = pneg %p111
      %p440 = pneg %p135
      %p441 = pneg %p132
      %p442 = pneg %p156
      %p443 = pneg %p153
      %p444 = pneg %p177
      %p445 = pneg %p174
      %p446 = pneg %p198
      %p447 = pneg %p195
      %p448 = pneg %p219
      %p449 = pneg %p216
      %p450 = pneg %p240
      %p451 = pneg %p237
      %p452 = pneg %p261
      %p453 = pneg %p258
      %p454 = pneg %p282
      %p455 = pneg %p279
      %p456 = pneg %p303
      %p457 = pneg %p300
      %p458 = pneg %p324
      %p459 = pneg %p321
      %p460 = pneg %p350
      %p461 = pneg %p347
      %p462 = scmp.lt.s32.totalorder %s25, 1
      %s463 = scalar_select %p462, %s25, 1
      %s464 = smul.addr %s463, 8
      %s465 = scalar_lea.vmem %s14, %s464
      %p466 = scmp.lt.s32.totalorder %s25, 1
      %s467 = scalar_select %p466, %s25, 1
      %s468 = smul.addr %s467, 8
      %s469 = scalar_lea.vmem %s0, %s468
      %p470 = scmp.lt.s32.totalorder %s25, 1
      %s471 = scalar_select %p470, %s25, 1
      %s472 = scalar_lea.vmem %s1, %s471
      %p473 = scmp.lt.s32.totalorder %s25, 1
      %s474 = scalar_select %p473, %s25, 1
      %s475 = smul.addr %s474, 8
      %s476 = scalar_lea.vmem %s14, %s475
      %v478 = vld [vmem:[%s469] sm:$0xff]
      %v479 = vld [vmem:[%s472] sm:$0x1]
      %vm480 = vcmp.gt.f32.partialorder %v479, 0.0
      %v481 = vsel %vm480, 0.0, -1e+09
      %v482 = vpack.c.bf16 %v478, %v478
      %v483 = vld [vmem:[%s2] sm:$0xf]
      %v484 = vld [vmem:[%s2 + $0x4] sm:$0xf]
      %v485 = vld [vmem:[%s2 + $0x8] sm:$0xf]
      %v486 = vld [vmem:[%s2 + $0xc] sm:$0xf]
      %v487 = vld [vmem:[%s3] sm:$0x1]
      %v489 = vlaneseq
      %v490 = vshrl.u32 %v489, 7
      %v491 = vsub.s32 0, %v490
      %v492 = vrot.slane %v487, %v491
      %v498 = vunpack.c.l.b16 %v483
      %v499 = vunpack.c.l.b16 %v484
      %v500 = vunpack.c.l.b16 %v485
      %v501 = vunpack.c.l.b16 %v486
      %v502 = vpack.c.b16 %v499, %v498
      %v503 = vpack.c.b16 %v501, %v500
      %vm506 = vcmask 261120
      %v508 = vsel %vm506, %v482, 0
      %510 = vmatprep.subr.bf16.mxu0 0
      %511 = vmatpush1.bf16.msra.mxu0 %v502
      %512 = vmatprep.subr.bf16.mxu0 0
      %513 = vmatpush1.bf16.msra.mxu0 %v503
      %514 = vmatprep.subr.bf16.mxu0 0
      %515 = vmatpush1.bf16.msra.mxu0 0
      %516 = vmatprep.subr.bf16.mxu0 0
      %517 = vmatpush1.bf16.msra.mxu0 0
      %518 = vmatprep.subr.bf16.mxu0 0
      %519 = vmatpush1.bf16.msra.mxu0 0
      %520 = vmatprep.subr.bf16.mxu0 0
      %521 = vmatpush1.bf16.msra.mxu0 0
      %522 = vmatprep.subr.bf16.mxu0 0
      %523 = vmatpush1.bf16.msra.mxu0 0
      %524 = vmatprep.subr.bf16.mxu0 0
      %525 = vmatpush1.bf16.msra.mxu0 0
      %526 = vmatprep.subr.bf16.mxu0 0
      %527 = vmatpush1.bf16.msra.mxu0 0
      %528 = vmatprep.subr.bf16.mxu0 0
      %529 = vmatpush1.bf16.msra.mxu0 0
      %530 = vmatprep.subr.bf16.mxu0 0
      %531 = vmatpush1.bf16.msra.mxu0 0
      %532 = vmatprep.subr.bf16.mxu0 0
      %533 = vmatpush1.bf16.msra.mxu0 0
      %534 = vmatprep.subr.bf16.mxu0 0
      %535 = vmatpush1.bf16.msra.mxu0 0
      %536 = vmatprep.subr.bf16.mxu0 0
      %537 = vmatpush1.bf16.msra.mxu0 0
      %538 = vmatprep.subr.bf16.mxu0 0
      %539 = vmatpush1.bf16.msra.mxu0 0
      %540 = vmatprep.subr.bf16.mxu0 0
      %541 = vmatpush1.bf16.msra.mxu0 0
      %542 = vmatprep.mubr.bf16.mxu0 0
      %543 = vmatmul.mubr.bf16.gmra.mrb[0].mxu0 %v508
      %v544 = vpop.f32.mrb[0].mxu0
      %v545 = vadd.f32 %v492, %v544
      %v546 = vpop.f32.mrb[0].mxu0
      %v547 = vpop.f32.mrb[0].mxu0
      %v548 = vpop.f32.mrb[0].mxu0
      %549 = vdwg.mxu0
      %v550 = vld [vmem:[%s4] sm:$0xf]
      %v551 = vld [vmem:[%s4 + $0x4] sm:$0xf]
      %v552 = vld [vmem:[%s4 + $0x8] sm:$0xf]
      %v553 = vld [vmem:[%s4 + $0xc] sm:$0xf]
      %v554 = vld [vmem:[%s5] sm:$0x1]
      %v555 = vpack.c.bf16 %v545, %v545
      %v557 = vlaneseq
      %v558 = vshrl.u32 %v557, 7
      %v559 = vsub.s32 0, %v558
      %v560 = vrot.slane %v481, %v559
      %563 = vrot.lane.b32.xlu0 %v555, 96
      %v564 = vpop.permute.xlu0 %563
      %vm565 = vcmask 64512
      %v567 = vsel %vm565, %v555, 0
      %v570 = vsel %vm565, %v564, 0
      %572 = vmatprep.subr.bf16.mxu0 0
      %573 = vmatpush1.bf16.xpose.msra.mxu0 %v570
      %574 = vmatprep.subr.bf16.mxu0 0
      %575 = vmatpush1.bf16.xpose.msra.mxu0 0
      %576 = vmatprep.subr.bf16.mxu0 0
      %577 = vmatpush1.bf16.xpose.msra.mxu0 0
      %578 = vmatprep.subr.bf16.mxu0 0
      %579 = vmatpush1.bf16.xpose.msra.mxu0 0
      %580 = vmatprep.subr.bf16.mxu0 0
      %581 = vmatpush1.bf16.xpose.msra.mxu0 0
      %582 = vmatprep.subr.bf16.mxu0 0
      %583 = vmatpush1.bf16.xpose.msra.mxu0 0
      %584 = vmatprep.subr.bf16.mxu0 0
      %585 = vmatpush1.bf16.xpose.msra.mxu0 0
      %586 = vmatprep.subr.bf16.mxu0 0
      %587 = vmatpush1.bf16.xpose.msra.mxu0 0
      %588 = vmatprep.subr.bf16.mxu0 0
      %589 = vmatpush1.bf16.xpose.msra.mxu0 0
      %590 = vmatprep.subr.bf16.mxu0 0
      %591 = vmatpush1.bf16.xpose.msra.mxu0 0
      %592 = vmatprep.subr.bf16.mxu0 0
      %593 = vmatpush1.bf16.xpose.msra.mxu0 0
      %594 = vmatprep.subr.bf16.mxu0 0
      %595 = vmatpush1.bf16.xpose.msra.mxu0 0
      %596 = vmatprep.subr.bf16.mxu0 0
      %597 = vmatpush1.bf16.xpose.msra.mxu0 0
      %598 = vmatprep.subr.bf16.mxu0 0
      %599 = vmatpush1.bf16.xpose.msra.mxu0 0
      %600 = vmatprep.subr.bf16.mxu0 0
      %601 = vmatpush1.bf16.xpose.msra.mxu0 0
      %602 = vmatprep.subr.bf16.mxu0 0
      %603 = vmatpush1.bf16.xpose.msra.mxu0 0
      %604 = vmatprep.mubr.bf16.mxu0 0
      %605 = vmatmul.mubr.bf16.gmra.mrb[0].mxu0 %v567
      %v606 = vpop.f32.mrb[0].mxu0
      %v607 = vadd.f32 %v560, %v606
      %v608 = vpop.f32.mrb[0].mxu0
      %v609 = vpop.f32.mrb[0].mxu0
      %v610 = vpop.f32.mrb[0].mxu0
      %611 = vdwg.mxu0
      %v612 = vsel %vm565, %v607, -inf
      %613 = vmax.xlane.f32.xlu0 %v612
      %v614 = vpop.xlane.xlu0 %613
      %v615 = vsub.f32 %v607, %v614
      %v616 = vmul.f32 %v615, 1.442695
      %v617 = vpow.pop %v616
      %v618 = vsel %vm565, %v617, 0.0
      %619 = vadd.xlane.f32.xlu0 %v618
      %v620 = vpop.xlane.xlu0 %619
      %v621 = vrcp.pop %v620
      %v622 = vmul.f32 %v617, %v621
      %v623 = vpack.c.bf16 %v622, %v622
      %624 = vrot.lane.b32.xlu0 %v555, 64
      %v625 = vpop.permute.xlu0 %624
      %v627 = vsel %vm565, %v623, 0
      %vm629 = vcmask 1043456
      %v631 = vsel %vm629, %v625, 0
      %633 = vmatprep.subr.bf16.mxu0 0
      %634 = vmatpush1.bf16.msra.mxu0 %v631
      %635 = vmatprep.subr.bf16.mxu0 0
      %636 = vmatpush1.bf16.msra.mxu0 0
      %637 = vmatprep.subr.bf16.mxu0 0
      %638 = vmatpush1.bf16.msra.mxu0 0
      %639 = vmatprep.subr.bf16.mxu0 0
      %640 = vmatpush1.bf16.msra.mxu0 0
      %641 = vmatprep.subr.bf16.mxu0 0
      %642 = vmatpush1.bf16.msra.mxu0 0
      %643 = vmatprep.subr.bf16.mxu0 0
      %644 = vmatpush1.bf16.msra.mxu0 0
      %645 = vmatprep.subr.bf16.mxu0 0
      %646 = vmatpush1.bf16.msra.mxu0 0
      %647 = vmatprep.subr.bf16.mxu0 0
      %648 = vmatpush1.bf16.msra.mxu0 0
      %649 = vmatprep.subr.bf16.mxu0 0
      %650 = vmatpush1.bf16.msra.mxu0 0
      %651 = vmatprep.subr.bf16.mxu0 0
      %652 = vmatpush1.bf16.msra.mxu0 0
      %653 = vmatprep.subr.bf16.mxu0 0
      %654 = vmatpush1.bf16.msra.mxu0 0
      %655 = vmatprep.subr.bf16.mxu0 0
      %656 = vmatpush1.bf16.msra.mxu0 0
      %657 = vmatprep.subr.bf16.mxu0 0
      %658 = vmatpush1.bf16.msra.mxu0 0
      %659 = vmatprep.subr.bf16.mxu0 0
      %660 = vmatpush1.bf16.msra.mxu0 0
      %661 = vmatprep.subr.bf16.mxu0 0
      %662 = vmatpush1.bf16.msra.mxu0 0
      %663 = vmatprep.subr.bf16.mxu0 0
      %664 = vmatpush1.bf16.msra.mxu0 0
      %665 = vmatprep.mubr.bf16.mxu0 0
      %666 = vmatmul.mubr.bf16.gmra.mrb[0].mxu0 %v627
      %v667 = vpop.f32.mrb[0].mxu0
      %v668 = vadd.f32 0.0, %v667
      %v669 = vpop.f32.mrb[0].mxu0
      %v670 = vpop.f32.mrb[0].mxu0
      %v671 = vpop.f32.mrb[0].mxu0
      %672 = vdwg.mxu0
      %673 = vrot.lane.b32.xlu0 %v555, 120
      %v674 = vpop.permute.xlu0 %673
      %675 = vrot.lane.b32.xlu0 %v555, 88
      %v676 = vpop.permute.xlu0 %675
      %v678 = vsel %vm565, %v674, 0
      %v681 = vsel %vm565, %v676, 0
      %683 = vmatprep.subr.bf16.mxu0 0
      %684 = vmatpush1.bf16.xpose.msra.mxu0 %v681
      %685 = vmatprep.subr.bf16.mxu0 0
      %686 = vmatpush1.bf16.xpose.msra.mxu0 0
      %687 = vmatprep.subr.bf16.mxu0 0
      %688 = vmatpush1.bf16.xpose.msra.mxu0 0
      %689 = vmatprep.subr.bf16.mxu0 0
      %690 = vmatpush1.bf16.xpose.msra.mxu0 0
      %691 = vmatprep.subr.bf16.mxu0 0
      %692 = vmatpush1.bf16.xpose.msra.mxu0 0
      %693 = vmatprep.subr.bf16.mxu0 0
      %694 = vmatpush1.bf16.xpose.msra.mxu0 0
      %695 = vmatprep.subr.bf16.mxu0 0
      %696 = vmatpush1.bf16.xpose.msra.mxu0 0
      %697 = vmatprep.subr.bf16.mxu0 0
      %698 = vmatpush1.bf16.xpose.msra.mxu0 0
      %699 = vmatprep.subr.bf16.mxu0 0
      %700 = vmatpush1.bf16.xpose.msra.mxu0 0
      %701 = vmatprep.subr.bf16.mxu0 0
      %702 = vmatpush1.bf16.xpose.msra.mxu0 0
      %703 = vmatprep.subr.bf16.mxu0 0
      %704 = vmatpush1.bf16.xpose.msra.mxu0 0
      %705 = vmatprep.subr.bf16.mxu0 0
      %706 = vmatpush1.bf16.xpose.msra.mxu0 0
      %707 = vmatprep.subr.bf16.mxu0 0
      %708 = vmatpush1.bf16.xpose.msra.mxu0 0
      %709 = vmatprep.subr.bf16.mxu0 0
      %710 = vmatpush1.bf16.xpose.msra.mxu0 0
      %711 = vmatprep.subr.bf16.mxu0 0
      %712 = vmatpush1.bf16.xpose.msra.mxu0 0
      %713 = vmatprep.subr.bf16.mxu0 0
      %714 = vmatpush1.bf16.xpose.msra.mxu0 0
      %715 = vmatprep.mubr.bf16.mxu0 0
      %716 = vmatmul.mubr.bf16.gmra.mrb[0].mxu0 %v678
      %v717 = vpop.f32.mrb[0].mxu0
      %v718 = vadd.f32 %v560, %v717
      %v719 = vpop.f32.mrb[0].mxu0
      %v720 = vpop.f32.mrb[0].mxu0
      %v721 = vpop.f32.mrb[0].mxu0
      %722 = vdwg.mxu0
      %v723 = vsel %vm565, %v718, -inf
      %724 = vmax.xlane.f32.xlu0 %v723
      %v725 = vpop.xlane.xlu0 %724
      %v726 = vsub.f32 %v718, %v725
      %v727 = vmul.f32 %v726, 1.442695
      %v728 = vpow.pop %v727
      %v729 = vsel %vm565, %v728, 0.0
      %730 = vadd.xlane.f32.xlu0 %v729
      %v731 = vpop.xlane.xlu0 %730
      %v732 = vrcp.pop %v731
      %v733 = vmul.f32 %v728, %v732
      %v734 = vpack.c.bf16 %v733, %v733
      %735 = vrot.lane.b32.xlu0 %v555, 56
      %v736 = vpop.permute.xlu0 %735
      %v738 = vsel %vm565, %v734, 0
      %v741 = vsel %vm629, %v736, 0
      %743 = vmatprep.subr.bf16.mxu0 0
      %744 = vmatpush1.bf16.msra.mxu0 %v741
      %745 = vmatprep.subr.bf16.mxu0 0
      %746 = vmatpush1.bf16.msra.mxu0 0
      %747 = vmatprep.subr.bf16.mxu0 0
      %748 = vmatpush1.bf16.msra.mxu0 0
      %749 = vmatprep.subr.bf16.mxu0 0
      %750 = vmatpush1.bf16.msra.mxu0 0
      %751 = vmatprep.subr.bf16.mxu0 0
      %752 = vmatpush1.bf16.msra.mxu0 0
      %753 = vmatprep.subr.bf16.mxu0 0
      %754 = vmatpush1.bf16.msra.mxu0 0
      %755 = vmatprep.subr.bf16.mxu0 0
      %756 = vmatpush1.bf16.msra.mxu0 0
      %757 = vmatprep.subr.bf16.mxu0 0
      %758 = vmatpush1.bf16.msra.mxu0 0
      %759 = vmatprep.subr.bf16.mxu0 0
      %760 = vmatpush1.bf16.msra.mxu0 0
      %761 = vmatprep.subr.bf16.mxu0 0
      %762 = vmatpush1.bf16.msra.mxu0 0
      %763 = vmatprep.subr.bf16.mxu0 0
      %764 = vmatpush1.bf16.msra.mxu0 0
      %765 = vmatprep.subr.bf16.mxu0 0
      %766 = vmatpush1.bf16.msra.mxu0 0
      %767 = vmatprep.subr.bf16.mxu0 0
      %768 = vmatpush1.bf16.msra.mxu0 0
      %769 = vmatprep.subr.bf16.mxu0 0
      %770 = vmatpush1.bf16.msra.mxu0 0
      %771 = vmatprep.subr.bf16.mxu0 0
      %772 = vmatpush1.bf16.msra.mxu0 0
      %773 = vmatprep.subr.bf16.mxu0 0
      %774 = vmatpush1.bf16.msra.mxu0 0
      %775 = vmatprep.mubr.bf16.mxu0 0
      %776 = vmatmul.mubr.bf16.gmra.mrb[0].mxu0 %v738
      %v777 = vpop.f32.mrb[0].mxu0
      %v778 = vadd.f32 0.0, %v777
      %v779 = vpop.f32.mrb[0].mxu0
      %v780 = vpop.f32.mrb[0].mxu0
      %v781 = vpop.f32.mrb[0].mxu0
      %782 = vdwg.mxu0
      %783 = vrot.lane.b32.xlu0 %v555, 112
      %v784 = vpop.permute.xlu0 %783
      %785 = vrot.lane.b32.xlu0 %v555, 80
      %v786 = vpop.permute.xlu0 %785
      %v788 = vsel %vm565, %v784, 0
      %v791 = vsel %vm565, %v786, 0
      %793 = vmatprep.subr.bf16.mxu0 0
      %794 = vmatpush1.bf16.xpose.msra.mxu0 %v791
      %795 = vmatprep.subr.bf16.mxu0 0
      %796 = vmatpush1.bf16.xpose.msra.mxu0 0
      %797 = vmatprep.subr.bf16.mxu0 0
      %798 = vmatpush1.bf16.xpose.msra.mxu0 0
      %799 = vmatprep.subr.bf16.mxu0 0
      %800 = vmatpush1.bf16.xpose.msra.mxu0 0
      %801 = vmatprep.subr.bf16.mxu0 0
      %802 = vmatpush1.bf16.xpose.msra.mxu0 0
      %803 = vmatprep.subr.bf16.mxu0 0
      %804 = vmatpush1.bf16.xpose.msra.mxu0 0
      %805 = vmatprep.subr.bf16.mxu0 0
      %806 = vmatpush1.bf16.xpose.msra.mxu0 0
      %807 = vmatprep.subr.bf16.mxu0 0
      %808 = vmatpush1.bf16.xpose.msra.mxu0 0
      %809 = vmatprep.subr.bf16.mxu0 0
      %810 = vmatpush1.bf16.xpose.msra.mxu0 0
      %811 = vmatprep.subr.bf16.mxu0 0
      %812 = vmatpush1.bf16.xpose.msra.mxu0 0
      %813 = vmatprep.subr.bf16.mxu0 0
      %814 = vmatpush1.bf16.xpose.msra.mxu0 0
      %815 = vmatprep.subr.bf16.mxu0 0
      %816 = vmatpush1.bf16.xpose.msra.mxu0 0
      %817 = vmatprep.subr.bf16.mxu0 0
      %818 = vmatpush1.bf16.xpose.msra.mxu0 0
      %819 = vmatprep.subr.bf16.mxu0 0
      %820 = vmatpush1.bf16.xpose.msra.mxu0 0
      %821 = vmatprep.subr.bf16.mxu0 0
      %822 = vmatpush1.bf16.xpose.msra.mxu0 0
      %823 = vmatprep.subr.bf16.mxu0 0
      %824 = vmatpush1.bf16.xpose.msra.mxu0 0
      %825 = vmatprep.mubr.bf16.mxu0 0
      %826 = vmatmul.mubr.bf16.gmra.mrb[0].mxu0 %v788
      %v827 = vpop.f32.mrb[0].mxu0
      %v828 = vadd.f32 %v560, %v827
      %v829 = vpop.f32.mrb[0].mxu0
      %v830 = vpop.f32.mrb[0].mxu0
      %v831 = vpop.f32.mrb[0].mxu0
      %832 = vdwg.mxu0
      %v833 = vsel %vm565, %v828, -inf
      %834 = vmax.xlane.f32.xlu0 %v833
      %v835 = vpop.xlane.xlu0 %834
      %v836 = vsub.f32 %v828, %v835
      %v837 = vmul.f32 %v836, 1.442695
      %v838 = vpow.pop %v837
      %v839 = vsel %vm565, %v838, 0.0
      %840 = vadd.xlane.f32.xlu0 %v839
      %v841 = vpop.xlane.xlu0 %840
      %v842 = vrcp.pop %v841
      %v843 = vmul.f32 %v838, %v842
      %v844 = vpack.c.bf16 %v843, %v843
      %845 = vrot.lane.b32.xlu0 %v555, 48
      %v846 = vpop.permute.xlu0 %845
      %v848 = vsel %vm565, %v844, 0
      %v851 = vsel %vm629, %v846, 0
      %853 = vmatprep.subr.bf16.mxu0 0
      %854 = vmatpush1.bf16.msra.mxu0 %v851
      %855 = vmatprep.subr.bf16.mxu0 0
      %856 = vmatpush1.bf16.msra.mxu0 0
      %857 = vmatprep.subr.bf16.mxu0 0
      %858 = vmatpush1.bf16.msra.mxu0 0
      %859 = vmatprep.subr.bf16.mxu0 0
      %860 = vmatpush1.bf16.msra.mxu0 0
      %861 = vmatprep.subr.bf16.mxu0 0
      %862 = vmatpush1.bf16.msra.mxu0 0
      %863 = vmatprep.subr.bf16.mxu0 0
      %864 = vmatpush1.bf16.msra.mxu0 0
      %865 = vmatprep.subr.bf16.mxu0 0
      %866 = vmatpush1.bf16.msra.mxu0 0
      %867 = vmatprep.subr.bf16.mxu0 0
      %868 = vmatpush1.bf16.msra.mxu0 0
      %869 = vmatprep.subr.bf16.mxu0 0
      %870 = vmatpush1.bf16.msra.mxu0 0
      %871 = vmatprep.subr.bf16.mxu0 0
      %872 = vmatpush1.bf16.msra.mxu0 0
      %873 = vmatprep.subr.bf16.mxu0 0
      %874 = vmatpush1.bf16.msra.mxu0 0
      %875 = vmatprep.subr.bf16.mxu0 0
      %876 = vmatpush1.bf16.msra.mxu0 0
      %877 = vmatprep.subr.bf16.mxu0 0
      %878 = vmatpush1.bf16.msra.mxu0 0
      %879 = vmatprep.subr.bf16.mxu0 0
      %880 = vmatpush1.bf16.msra.mxu0 0
      %881 = vmatprep.subr.bf16.mxu0 0
      %882 = vmatpush1.bf16.msra.mxu0 0
      %883 = vmatprep.subr.bf16.mxu0 0
      %884 = vmatpush1.bf16.msra.mxu0 0
      %885 = vmatprep.mubr.bf16.mxu0 0
      %886 = vmatmul.mubr.bf16.gmra.mrb[0].mxu0 %v848
      %v887 = vpop.f32.mrb[0].mxu0
      %v888 = vadd.f32 0.0, %v887
      %v889 = vpop.f32.mrb[0].mxu0
      %v890 = vpop.f32.mrb[0].mxu0
      %v891 = vpop.f32.mrb[0].mxu0
      %892 = vdwg.mxu0
      %893 = vrot.lane.b32.xlu0 %v555, 104
      %v894 = vpop.permute.xlu0 %893
      %895 = vrot.lane.b32.xlu0 %v555, 72
      %v896 = vpop.permute.xlu0 %895
      %v898 = vsel %vm565, %v894, 0
      %v901 = vsel %vm565, %v896, 0
      %903 = vmatprep.subr.bf16.mxu0 0
      %904 = vmatpush1.bf16.xpose.msra.mxu0 %v901
      %905 = vmatprep.subr.bf16.mxu0 0
      %906 = vmatpush1.bf16.xpose.msra.mxu0 0
      %907 = vmatprep.subr.bf16.mxu0 0
      %908 = vmatpush1.bf16.xpose.msra.mxu0 0
      %909 = vmatprep.subr.bf16.mxu0 0
      %910 = vmatpush1.bf16.xpose.msra.mxu0 0
      %911 = vmatprep.subr.bf16.mxu0 0
      %912 = vmatpush1.bf16.xpose.msra.mxu0 0
      %913 = vmatprep.subr.bf16.mxu0 0
      %914 = vmatpush1.bf16.xpose.msra.mxu0 0
      %915 = vmatprep.subr.bf16.mxu0 0
      %916 = vmatpush1.bf16.xpose.msra.mxu0 0
      %917 = vmatprep.subr.bf16.mxu0 0
      %918 = vmatpush1.bf16.xpose.msra.mxu0 0
      %919 = vmatprep.subr.bf16.mxu0 0
      %920 = vmatpush1.bf16.xpose.msra.mxu0 0
      %921 = vmatprep.subr.bf16.mxu0 0
      %922 = vmatpush1.bf16.xpose.msra.mxu0 0
      %923 = vmatprep.subr.bf16.mxu0 0
      %924 = vmatpush1.bf16.xpose.msra.mxu0 0
      %925 = vmatprep.subr.bf16.mxu0 0
      %926 = vmatpush1.bf16.xpose.msra.mxu0 0
      %927 = vmatprep.subr.bf16.mxu0 0
      %928 = vmatpush1.bf16.xpose.msra.mxu0 0
      %929 = vmatprep.subr.bf16.mxu0 0
      %930 = vmatpush1.bf16.xpose.msra.mxu0 0
      %931 = vmatprep.subr.bf16.mxu0 0
      %932 = vmatpush1.bf16.xpose.msra.mxu0 0
      %933 = vmatprep.subr.bf16.mxu0 0
      %934 = vmatpush1.bf16.xpose.msra.mxu0 0
      %935 = vmatprep.mubr.bf16.mxu0 0
      %936 = vmatmul.mubr.bf16.gmra.mrb[0].mxu0 %v898
      %v937 = vpop.f32.mrb[0].mxu0
      %v938 = vadd.f32 %v560, %v937
      %v939 = vpop.f32.mrb[0].mxu0
      %v940 = vpop.f32.mrb[0].mxu0
      %v941 = vpop.f32.mrb[0].mxu0
      %942 = vdwg.mxu0
      %v943 = vsel %vm565, %v938, -inf
      %944 = vmax.xlane.f32.xlu0 %v943
      %v945 = vpop.xlane.xlu0 %944
      %v946 = vsub.f32 %v938, %v945
      %v947 = vmul.f32 %v946, 1.442695
      %v948 = vpow.pop %v947
      %v949 = vsel %vm565, %v948, 0.0
      %950 = vadd.xlane.f32.xlu0 %v949
      %v951 = vpop.xlane.xlu0 %950
      %v952 = vrcp.pop %v951
      %v953 = vmul.f32 %v948, %v952
      %v954 = vpack.c.bf16 %v953, %v953
      %955 = vrot.lane.b32.xlu0 %v555, 40
      %v956 = vpop.permute.xlu0 %955
      %v958 = vsel %vm565, %v954, 0
      %v961 = vsel %vm629, %v956, 0
      %963 = vmatprep.subr.bf16.mxu0 0
      %964 = vmatpush1.bf16.msra.mxu0 %v961
      %965 = vmatprep.subr.bf16.mxu0 0
      %966 = vmatpush1.bf16.msra.mxu0 0
      %967 = vmatprep.subr.bf16.mxu0 0
      %968 = vmatpush1.bf16.msra.mxu0 0
      %969 = vmatprep.subr.bf16.mxu0 0
      %970 = vmatpush1.bf16.msra.mxu0 0
      %971 = vmatprep.subr.bf16.mxu0 0
      %972 = vmatpush1.bf16.msra.mxu0 0
      %973 = vmatprep.subr.bf16.mxu0 0
      %974 = vmatpush1.bf16.msra.mxu0 0
      %975 = vmatprep.subr.bf16.mxu0 0
      %976 = vmatpush1.bf16.msra.mxu0 0
      %977 = vmatprep.subr.bf16.mxu0 0
      %978 = vmatpush1.bf16.msra.mxu0 0
      %979 = vmatprep.subr.bf16.mxu0 0
      %980 = vmatpush1.bf16.msra.mxu0 0
      %981 = vmatprep.subr.bf16.mxu0 0
      %982 = vmatpush1.bf16.msra.mxu0 0
      %983 = vmatprep.subr.bf16.mxu0 0
      %984 = vmatpush1.bf16.msra.mxu0 0
      %985 = vmatprep.subr.bf16.mxu0 0
      %986 = vmatpush1.bf16.msra.mxu0 0
      %987 = vmatprep.subr.bf16.mxu0 0
      %988 = vmatpush1.bf16.msra.mxu0 0
      %989 = vmatprep.subr.bf16.mxu0 0
      %990 = vmatpush1.bf16.msra.mxu0 0
      %991 = vmatprep.subr.bf16.mxu0 0
      %992 = vmatpush1.bf16.msra.mxu0 0
      %993 = vmatprep.subr.bf16.mxu0 0
      %994 = vmatpush1.bf16.msra.mxu0 0
      %995 = vmatprep.mubr.bf16.mxu0 0
      %996 = vmatmul.mubr.bf16.gmra.mrb[0].mxu0 %v958
      %v997 = vpop.f32.mrb[0].mxu0
      %v998 = vadd.f32 0.0, %v997
      %v999 = vpop.f32.mrb[0].mxu0
      %v1000 = vpop.f32.mrb[0].mxu0
      %v1001 = vpop.f32.mrb[0].mxu0
      %1002 = vdwg.mxu0
      %1004 = vrot.lane.b32.xlu0 %v778, 8
      %v1005 = vpop.permute.xlu0 %1004
      %1008 = vrot.lane.b32.xlu0 %v888, 16
      %v1009 = vpop.permute.xlu0 %1008
      %1012 = vrot.lane.b32.xlu0 %v998, 24
      %v1013 = vpop.permute.xlu0 %1012
      %v1015 = vsel %vm565, %v668, %v1005
      %vm1016 = vcmask 130048
      %v1017 = vsel %vm1016, %v1015, %v1009
      %vm1018 = vcmask 195584
      %v1019 = vsel %vm1018, %v1017, %v1013
      %v1020 = vpack.c.bf16 %v1019, %v1019
      %v1022 = vlaneseq
      %v1023 = vshrl.u32 %v1022, 7
      %v1024 = vsub.s32 0, %v1023
      %v1025 = vrot.slane %v554, %v1024
      %v1031 = vunpack.c.l.b16 %v550
      %v1032 = vunpack.c.l.b16 %v551
      %v1033 = vunpack.c.l.b16 %v552
      %v1034 = vunpack.c.l.b16 %v553
      %v1035 = vpack.c.b16 %v1032, %v1031
      %v1036 = vpack.c.b16 %v1034, %v1033
      %v1040 = vsel %vm506, %v1020, 0
      %1042 = vmatprep.subr.bf16.mxu0 0
      %1043 = vmatpush1.bf16.msra.mxu0 %v1035
      %1044 = vmatprep.subr.bf16.mxu0 0
      %1045 = vmatpush1.bf16.msra.mxu0 %v1036
      %1046 = vmatprep.subr.bf16.mxu0 0
      %1047 = vmatpush1.bf16.msra.mxu0 0
      %1048 = vmatprep.subr.bf16.mxu0 0
      %1049 = vmatpush1.bf16.msra.mxu0 0
      %1050 = vmatprep.subr.bf16.mxu0 0
      %1051 = vmatpush1.bf16.msra.mxu0 0
      %1052 = vmatprep.subr.bf16.mxu0 0
      %1053 = vmatpush1.bf16.msra.mxu0 0
      %1054 = vmatprep.subr.bf16.mxu0 0
      %1055 = vmatpush1.bf16.msra.mxu0 0
      %1056 = vmatprep.subr.bf16.mxu0 0
      %1057 = vmatpush1.bf16.msra.mxu0 0
      %1058 = vmatprep.subr.bf16.mxu0 0
      %1059 = vmatpush1.bf16.msra.mxu0 0
      %1060 = vmatprep.subr.bf16.mxu0 0
      %1061 = vmatpush1.bf16.msra.mxu0 0
      %1062 = vmatprep.subr.bf16.mxu0 0
      %1063 = vmatpush1.bf16.msra.mxu0 0
      %1064 = vmatprep.subr.bf16.mxu0 0
      %1065 = vmatpush1.bf16.msra.mxu0 0
      %1066 = vmatprep.subr.bf16.mxu0 0
      %1067 = vmatpush1.bf16.msra.mxu0 0
      %1068 = vmatprep.subr.bf16.mxu0 0
      %1069 = vmatpush1.bf16.msra.mxu0 0
      %1070 = vmatprep.subr.bf16.mxu0 0
      %1071 = vmatpush1.bf16.msra.mxu0 0
      %1072 = vmatprep.subr.bf16.mxu0 0
      %1073 = vmatpush1.bf16.msra.mxu0 0
      %1074 = vmatprep.mubr.bf16.mxu0 0
      %1075 = vmatmul.mubr.bf16.gmra.mrb[0].mxu0 %v1040
      %v1076 = vpop.f32.mrb[0].mxu0
      %v1077 = vadd.f32 %v1025, %v1076
      %v1078 = vpop.f32.mrb[0].mxu0
      %v1079 = vpop.f32.mrb[0].mxu0
      %v1080 = vpop.f32.mrb[0].mxu0
      %1081 = vdwg.mxu0
      %v1082 = vadd.f32 %v478, %v1077
      %v1083 = vld [vmem:[%s6] sm:$0x1]
      %v1084 = vld [vmem:[%s7] sm:$0x1]
      %v1085 = vsel %vm506, %v1082, 0.0
      %1086 = vadd.xlane.f32.xlu0 %v1085
      %v1087 = vpop.xlane.xlu0 %1086
      %v1088 = vrcp.pop 32.0
      %v1089 = vmul.f32 %v1087, %v1088
      %v1090 = vsub.f32 %v1082, %v1089
      %v1091 = vmul.f32 %v1090, %v1090
      %v1092 = vsel %vm506, %v1091, 0.0
      %1093 = vadd.xlane.f32.xlu0 %v1092
      %v1094 = vpop.xlane.xlu0 %1093
      %v1095 = vmul.f32 %v1094, %v1088
      %v1096 = vadd.f32 %v1095, 1e-05
      %v1097 = vrsqrt.pop %v1096
      %v1098 = vmul.f32 %v1090, %v1097
      %v1100 = vlaneseq
      %v1101 = vshrl.u32 %v1100, 7
      %v1102 = vsub.s32 0, %v1101
      %v1103 = vrot.slane %v1083, %v1102
      %v1105 = vmul.f32 %v1098, %v1103
      %v1107 = vlaneseq
      %v1108 = vshrl.u32 %v1107, 7
      %v1109 = vsub.s32 0, %v1108
      %v1110 = vrot.slane %v1084, %v1109
      %v1112 = vadd.f32 %v1105, %v1110
      %v1113 = vld [vmem:[%s8] sm:$0xf]
      %v1114 = vld [vmem:[%s8 + $0x4] sm:$0xf]
      %v1115 = vld [vmem:[%s8 + $0x8] sm:$0xf]
      %v1116 = vld [vmem:[%s8 + $0xc] sm:$0xf]
      %v1117 = vld [vmem:[%s9] sm:$0x1]
      %v1118 = vld [vmem:[%s10] sm:$0xf]
      %v1119 = vld [vmem:[%s10 + $0x4] sm:$0xf]
      %v1120 = vld [vmem:[%s10 + $0x8] sm:$0xf]
      %v1121 = vld [vmem:[%s10 + $0xc] sm:$0xf]
      %v1122 = vld [vmem:[%s10 + $0x10] sm:$0xf]
      %v1123 = vld [vmem:[%s10 + $0x14] sm:$0xf]
      %v1124 = vld [vmem:[%s10 + $0x18] sm:$0xf]
      %v1125 = vld [vmem:[%s10 + $0x1c] sm:$0xf]
      %v1126 = vld [vmem:[%s11] sm:$0x1]
      %v1127 = vpack.c.bf16 %v1112, %v1112
      %v1129 = vlaneseq
      %v1130 = vshrl.u32 %v1129, 7
      %v1131 = vsub.s32 0, %v1130
      %v1132 = vrot.slane %v1117, %v1131
      %v1138 = vunpack.c.l.b16 %v1113
      %v1139 = vunpack.c.l.b16 %v1114
      %v1140 = vunpack.c.l.b16 %v1115
      %v1141 = vunpack.c.l.b16 %v1116
      %v1142 = vpack.c.b16 %v1139, %v1138
      %v1143 = vpack.c.b16 %v1141, %v1140
      %v1147 = vsel %vm506, %v1127, 0
      %1149 = vmatprep.subr.bf16.mxu0 0
      %1150 = vmatpush1.bf16.msra.mxu0 %v1142
      %1151 = vmatprep.subr.bf16.mxu0 0
      %1152 = vmatpush1.bf16.msra.mxu0 %v1143
      %1153 = vmatprep.subr.bf16.mxu0 0
      %1154 = vmatpush1.bf16.msra.mxu0 0
      %1155 = vmatprep.subr.bf16.mxu0 0
      %1156 = vmatpush1.bf16.msra.mxu0 0
      %1157 = vmatprep.subr.bf16.mxu0 0
      %1158 = vmatpush1.bf16.msra.mxu0 0
      %1159 = vmatprep.subr.bf16.mxu0 0
      %1160 = vmatpush1.bf16.msra.mxu0 0
      %1161 = vmatprep.subr.bf16.mxu0 0
      %1162 = vmatpush1.bf16.msra.mxu0 0
      %1163 = vmatprep.subr.bf16.mxu0 0
      %1164 = vmatpush1.bf16.msra.mxu0 0
      %1165 = vmatprep.subr.bf16.mxu0 0
      %1166 = vmatpush1.bf16.msra.mxu0 0
      %1167 = vmatprep.subr.bf16.mxu0 0
      %1168 = vmatpush1.bf16.msra.mxu0 0
      %1169 = vmatprep.subr.bf16.mxu0 0
      %1170 = vmatpush1.bf16.msra.mxu0 0
      %1171 = vmatprep.subr.bf16.mxu0 0
      %1172 = vmatpush1.bf16.msra.mxu0 0
      %1173 = vmatprep.subr.bf16.mxu0 0
      %1174 = vmatpush1.bf16.msra.mxu0 0
      %1175 = vmatprep.subr.bf16.mxu0 0
      %1176 = vmatpush1.bf16.msra.mxu0 0
      %1177 = vmatprep.subr.bf16.mxu0 0
      %1178 = vmatpush1.bf16.msra.mxu0 0
      %1179 = vmatprep.subr.bf16.mxu0 0
      %1180 = vmatpush1.bf16.msra.mxu0 0
      %1181 = vmatprep.mubr.bf16.mxu0 0
      %1182 = vmatmul.mubr.bf16.gmra.mrb[0].mxu0 %v1147
      %v1183 = vpop.f32.mrb[0].mxu0
      %v1184 = vadd.f32 %v1132, %v1183
      %v1185 = vpop.f32.mrb[0].mxu0
      %v1186 = vpop.f32.mrb[0].mxu0
      %v1187 = vpop.f32.mrb[0].mxu0
      %1188 = vdwg.mxu0
      %v1189 = vmax.f32 %v1184, 0.0
      %v1190 = vpack.c.bf16 %v1189, %v1189
      %v1192 = vlaneseq
      %v1193 = vshrl.u32 %v1192, 7
      %v1194 = vsub.s32 0, %v1193
      %v1195 = vrot.slane %v1126, %v1194
      %v1205 = vunpack.c.l.b16 %v1118
      %v1206 = vunpack.c.l.b16 %v1119
      %v1207 = vunpack.c.l.b16 %v1120
      %v1208 = vunpack.c.l.b16 %v1121
      %v1209 = vunpack.c.l.b16 %v1122
      %v1210 = vunpack.c.l.b16 %v1123
      %v1211 = vunpack.c.l.b16 %v1124
      %v1212 = vunpack.c.l.b16 %v1125
      %v1213 = vpack.c.b16 %v1206, %v1205
      %v1214 = vpack.c.b16 %v1208, %v1207
      %v1215 = vpack.c.b16 %v1210, %v1209
      %v1216 = vpack.c.b16 %v1212, %v1211
      %vm1221 = vcmask 523264
      %v1223 = vsel %vm1221, %v1190, 0
      %1225 = vmatprep.subr.bf16.mxu0 0
      %1226 = vmatpush1.bf16.msra.mxu0 %v1213
      %1227 = vmatprep.subr.bf16.mxu0 0
      %1228 = vmatpush1.bf16.msra.mxu0 %v1214
      %1229 = vmatprep.subr.bf16.mxu0 0
      %1230 = vmatpush1.bf16.msra.mxu0 %v1215
      %1231 = vmatprep.subr.bf16.mxu0 0
      %1232 = vmatpush1.bf16.msra.mxu0 %v1216
      %1233 = vmatprep.subr.bf16.mxu0 0
      %1234 = vmatpush1.bf16.msra.mxu0 0
      %1235 = vmatprep.subr.bf16.mxu0 0
      %1236 = vmatpush1.bf16.msra.mxu0 0
      %1237 = vmatprep.subr.bf16.mxu0 0
      %1238 = vmatpush1.bf16.msra.mxu0 0
      %1239 = vmatprep.subr.bf16.mxu0 0
      %1240 = vmatpush1.bf16.msra.mxu0 0
      %1241 = vmatprep.subr.bf16.mxu0 0
      %1242 = vmatpush1.bf16.msra.mxu0 0
      %1243 = vmatprep.subr.bf16.mxu0 0
      %1244 = vmatpush1.bf16.msra.mxu0 0
      %1245 = vmatprep.subr.bf16.mxu0 0
      %1246 = vmatpush1.bf16.msra.mxu0 0
      %1247 = vmatprep.subr.bf16.mxu0 0
      %1248 = vmatpush1.bf16.msra.mxu0 0
      %1249 = vmatprep.subr.bf16.mxu0 0
      %1250 = vmatpush1.bf16.msra.mxu0 0
      %1251 = vmatprep.subr.bf16.mxu0 0
      %1252 = vmatpush1.bf16.msra.mxu0 0
      %1253 = vmatprep.subr.bf16.mxu0 0
      %1254 = vmatpush1.bf16.msra.mxu0 0
      %1255 = vmatprep.subr.bf16.mxu0 0
      %1256 = vmatpush1.bf16.msra.mxu0 0
      %1257 = vmatprep.mubr.bf16.mxu0 0
      %1258 = vmatmul.mubr.bf16.gmra.mrb[0].mxu0 %v1223
      %v1259 = vpop.f32.mrb[0].mxu0
      %v1260 = vadd.f32 %v1195, %v1259
      %v1261 = vpop.f32.mrb[0].mxu0
      %v1262 = vpop.f32.mrb[0].mxu0
      %v1263 = vpop.f32.mrb[0].mxu0
      %1264 = vdwg.mxu0
      %v1265 = vadd.f32 %v1112, %v1260
      %v1266 = vld [vmem:[%s12] sm:$0x1]
      %v1267 = vld [vmem:[%s13] sm:$0x1]
      %v1268 = vsel %vm506, %v1265, 0.0
      %1269 = vadd.xlane.f32.xlu0 %v1268
      %v1270 = vpop.xlane.xlu0 %1269
      %v1271 = vmul.f32 %v1270, %v1088
      %v1272 = vsub.f32 %v1265, %v1271
      %v1273 = vmul.f32 %v1272, %v1272
      %v1274 = vsel %vm506, %v1273, 0.0
      %1275 = vadd.xlane.f32.xlu0 %v1274
      %v1276 = vpop.xlane.xlu0 %1275
      %v1277 = vmul.f32 %v1276, %v1088
      %v1278 = vadd.f32 %v1277, 1e-05
      %v1279 = vrsqrt.pop %v1278
      %v1280 = vmul.f32 %v1272, %v1279
      %v1282 = vlaneseq
      %v1283 = vshrl.u32 %v1282, 7
      %v1284 = vsub.s32 0, %v1283
      %v1285 = vrot.slane %v1266, %v1284
      %v1287 = vmul.f32 %v1280, %v1285
      %v1289 = vlaneseq
      %v1290 = vshrl.u32 %v1289, 7
      %v1291 = vsub.s32 0, %v1290
      %v1292 = vrot.slane %v1267, %v1291
      %v1294 = vadd.f32 %v1287, %v1292
      %1295 = vst.msk [vmem:[%s476] sm:$0xff] %vm506, %v1294
      %p1296 = scmp.lt.s32.totalorder %s25, 1
      %s1297 = scalar_select %p1296, %s25, 1
      %s1298 = smul.addr %s1297, 8
      %s1299 = scalar_lea.vmem %s14, %s1298
      // Predicated region
      $region77: #{transformer_forward.3} parent=75 // pred_check
        %p1300 = pneg %p347
      $region78: #{transformer_forward.3} parent=75 // pred_check_branch
        %1302 = sbr.rel (%p1300) target = $region80
      $region79: #{transformer_forward.3} parent=75 // pred_region
        _
      $region80: #{transformer_forward.3} parent=75 // pred_fallthru
        _
    $region76: #{transformer_forward.3} parent=5 // pred_fallthru
      _
    %p1303 = scmp.le.s32.totalorder 2, %s20
    // Predicated region
    $region81: #{transformer_forward.3} parent=5 // pred_check
      %p1304 = pneg %p1303
    $region82: #{transformer_forward.3} parent=5 // pred_check_branch
      %1306 = sbr.rel (%p1304) target = $region84
    $region83: #{transformer_forward.3} parent=5 // pred_region
      %s1307 = ssub.s32 %s20, 2
      // Predicated region
      $region85: #{transformer_forward.3} parent=83 // pred_check
        %p1308 = pneg %p353
      $region86: #{transformer_forward.3} parent=83 // pred_check_branch
        %1310 = sbr.rel (%p1308) target = $region88
      $region87: #{transformer_forward.3} parent=83 // pred_region
        %p1311 = scmp.lt.s32.totalorder %s26, 1
        %s1312 = scalar_select %p1311, %s26, 1
        %s1313 = smul.addr %s1312, 8
        %s1314 = scalar_lea.vmem %s14, %s1313
      $region88: #{transformer_forward.3} parent=83 // pred_fallthru
        _
    $region84: #{transformer_forward.3} parent=5 // pred_fallthru
      _
  $region6: #{transformer_forward.3} parent=0 // loop_footer
    %s24 = sadd.s32 1, %s20
  $region7: #{transformer_forward.3} parent=0 // loop_footer_branch
    %19 = sbr.rel target = $region3
  $region8: #{transformer_forward.3} parent=0 // loop_exit
    _

// kernel: transformer_forward.5
$region0: #{transformer_forward.5}
  #allocation0 [shape = 'u32[]', space=smem, size = 0x4, offset = 0x4, fixed_abs, tag = 'smem constant byte address 0x4 - core index']
  #allocation1 [shape = 'u32[144,128]{1,0:T(1,128)}', space=vmem, size = 0x12000, scoped, tag = 'internal scratch']
  %s0 = inlined_call_operand.vmem [shape: f32[2,8,32], index: 0, kind: input, shape index: {}]
  %s1 = inlined_call_operand.vmem [shape: f32[2,8,32], index: 1, kind: input, shape index: {}]
  %s2 = inlined_call_operand.vmem [shape: f32[2,8,1], index: 2, kind: input, shape index: {}]
  %s3 = inlined_call_operand.vmem [shape: f32[2,1,8], index: 3, kind: input, shape index: {}]
  %s4 = inlined_call_operand.vmem [shape: bf16[32,96], index: 4, kind: input, shape index: {}]
  %s5 = inlined_call_operand.vmem [shape: f32[1,96], index: 5, kind: input, shape index: {}]
  %s6 = inlined_call_operand.vmem [shape: bf16[32,32], index: 6, kind: input, shape index: {}]
  %s7 = inlined_call_operand.vmem [shape: f32[1,32], index: 7, kind: input, shape index: {}]
  %s8 = inlined_call_operand.vmem [shape: f32[1,32], index: 8, kind: input, shape index: {}]
  %s9 = inlined_call_operand.vmem [shape: f32[1,32], index: 9, kind: input, shape index: {}]
  %s10 = inlined_call_operand.vmem [shape: bf16[32,32], index: 10, kind: input, shape index: {}]
  %s11 = inlined_call_operand.vmem [shape: f32[1,32], index: 11, kind: input, shape index: {}]
  %s12 = inlined_call_operand.vmem [shape: bf16[32,64], index: 12, kind: input, shape index: {}]
  %s13 = inlined_call_operand.vmem [shape: f32[1,64], index: 13, kind: input, shape index: {}]
  %s14 = inlined_call_operand.vmem [shape: bf16[32,32], index: 14, kind: input, shape index: {}]
  %s15 = inlined_call_operand.vmem [shape: f32[1,32], index: 15, kind: input, shape index: {}]
  %s16 = inlined_call_operand.vmem [shape: f32[1,32], index: 16, kind: input, shape index: {}]
  %s17 = inlined_call_operand.vmem [shape: f32[1,32], index: 17, kind: input, shape index: {}]
  %s18 = inlined_call_operand.vmem [shape: bf16[32,64], index: 18, kind: input, shape index: {}]
  %s19 = inlined_call_operand.vmem [shape: f32[1,64], index: 19, kind: input, shape index: {}]
  %s20 = inlined_call_operand.vmem [shape: bf16[64,32], index: 20, kind: input, shape index: {}]
  %s21 = inlined_call_operand.vmem [shape: f32[1,32], index: 21, kind: input, shape index: {}]
  %s22 = inlined_call_operand.vmem [shape: f32[1,32], index: 22, kind: input, shape index: {}]
  %s23 = inlined_call_operand.vmem [shape: f32[1,32], index: 23, kind: input, shape index: {}]
  %s24 = inlined_call_operand.hbm [shape: f32[2,8,32], index: 24, kind: output, shape index: {}]
  %s25 = sld [smem:[#allocation0]]
  $region129: #{transformer_forward.5} parent=0
    _
  %s27 = ssub.s32 1, %s25
  %s28 = scalar_select 0, %s27, %s25
  $region1: #{transformer_forward.5} parent=0
    #allocation2 [shape = 'u8[8192]{0}', space=vmem, size = 0x2000, scoped, tag = 'output window, operand 0']
    #allocation3 [shape = 's32[2]{0}', space=sflag, size = 0x8, scoped, tag = 'scoped memory for transformer_forward.5']
    %29 = vsyncpa [#allocation3], 0
    %s30 = scalar_lea.sflag [#allocation3], 1
    %31 = vsyncpa %s30, 0
    loop: start=0, step=1, limit=4
    $region2: #{transformer_forward.5} parent=1 // loop_pre_header
      _
    $region3: #{transformer_forward.5} parent=1 // loop_header
      %s33 = sphi 0, %s37
      %p34 = scmp.ge.s32.totalorder %s33, 4
      %s43 = sphi 0, %s45
      %s46 = sphi 0, %s43
      %s47 = sphi 0, %s46
      %s63 = sphi 0, %s47
      %s69 = sphi 0, %s71
      %s72 = sphi 0, %s69
      %s73 = sphi 0, %s72
      %s89 = sphi 0, %s73
      %s95 = sphi 0, %s97
      %s98 = sphi 0, %s95
      %s99 = sphi 0, %s98
      %s115 = sphi 0, %s99
      %s121 = sphi 0, %s123
      %s124 = sphi 0, %s121
      %s125 = sphi 0, %s124
      %s141 = sphi 0, %s125
      %s145 = sphi 0, %s145
      %s147 = sphi 0, %s145
      %s148 = sphi 0, %s147
      %s162 = sphi 0, %s148
      %s166 = sphi 0, %s166
      %s168 = sphi 0, %s166
      %s169 = sphi 0, %s168
      %s183 = sphi 0, %s169
      %s187 = sphi 0, %s187
      %s189 = sphi 0, %s187
      %s190 = sphi 0, %s189
      %s204 = sphi 0, %s190
      %s208 = sphi 0, %s208
      %s210 = sphi 0, %s208
      %s211 = sphi 0, %s210
      %s225 = sphi 0, %s211
      %s229 = sphi 0, %s229
      %s231 = sphi 0, %s229
      %s232 = sphi 0, %s231
      %s246 = sphi 0, %s232
      %s250 = sphi 0, %s250
      %s252 = sphi 0, %s250
      %s253 = sphi 0, %s252
      %s267 = sphi 0, %s253
      %s271 = sphi 0, %s271
      %s273 = sphi 0, %s271
      %s274 = sphi 0, %s273
      %s288 = sphi 0, %s274
      %s292 = sphi 0, %s292
      %s294 = sphi 0, %s292
      %s295 = sphi 0, %s294
      %s309 = sphi 0, %s295
      %s313 = sphi 0, %s313
      %s315 = sphi 0, %s313
      %s316 = sphi 0, %s315
      %s330 = sphi 0, %s316
      %s334 = sphi 0, %s334
      %s336 = sphi 0, %s334
      %s337 = sphi 0, %s336
      %s351 = sphi 0, %s337
      %s355 = sphi 0, %s355
      %s357 = sphi 0, %s355
      %s358 = sphi 0, %s357
      %s372 = sphi 0, %s358
      %s376 = sphi 0, %s376
      %s378 = sphi 0, %s376
      %s379 = sphi 0, %s378
      %s393 = sphi 0, %s379
      %s397 = sphi 0, %s397
      %s399 = sphi 0, %s397
      %s400 = sphi 0, %s399
      %s414 = sphi 0, %s400
      %s418 = sphi 0, %s418
      %s420 = sphi 0, %s418
      %s421 = sphi 0, %s420
      %s435 = sphi 0, %s421
      %s439 = sphi 0, %s439
      %s441 = sphi 0, %s439
      %s442 = sphi 0, %s441
      %s456 = sphi 0, %s442
      %s460 = sphi 0, %s460
      %s462 = sphi 0, %s460
      %s463 = sphi 0, %s462
      %s477 = sphi 0, %s463
      %s481 = sphi 0, %s481
      %s483 = sphi 0, %s481
      %s484 = sphi 0, %s483
      %s498 = sphi 0, %s484
      %s502 = sphi 0, %s502
      %s504 = sphi 0, %s502
      %s505 = sphi 0, %s504
      %s519 = sphi 0, %s505
      %s523 = sphi 0, %s523
      %s525 = sphi 0, %s523
      %s526 = sphi 0, %s525
      %s540 = sphi 0, %s526
      %s544 = sphi 0, %s544
      %s546 = sphi 0, %s544
      %s547 = sphi 0, %s546
      %s561 = sphi 0, %s547
      %s567 = sphi 0, %s569
      %s570 = sphi 0, %s567
      %s571 = sphi 0, %s570
      %s587 = sphi 0, %s571
    $region4: #{transformer_forward.5} parent=1 // loop_header_branch
      %36 = sbr.rel (%p34) target = $region8
    $region5: #{transformer_forward.5} parent=1 // loop_body
      %s38 = ssub.s32 %s33, 1
      %s39 = ssub.s32 %s33, 2
      %s40 = sadd.s32 %s33, 1
      %s41 = ssub.s32 %s33, %s40
      %p42 = scmp.eq.s32.totalorder %s41, 0
      %s44 = sadd.s32 %s43, 1
      %s45 = scalar_select %p42, %s43, %s44
      %p48 = pneg %p42
      %p49 = scmp.eq.s32.totalorder %s33, 1
      %p50 = por %p48, %p49
      %p51 = scmp.ne.s32.totalorder %s43, %s46
      %p52 = scmp.eq.s32.totalorder %s33, 0
      %p53 = por %p51, %p52
      %p54 = scmp.ne.s32.totalorder %s43, %s46
      %p55 = scmp.eq.s32.totalorder %s38, 1
      %p56 = por %p54, %p55
      %p57 = scmp.ne.s32.totalorder %s46, %s47
      %p58 = scmp.eq.s32.totalorder %s38, 0
      %p59 = por %p57, %p58
      %p60 = scmp.ne.s32.totalorder %s46, %s47
      %p61 = scmp.eq.s32.totalorder %s39, 1
      %p62 = por %p60, %p61
      %p64 = scmp.ne.s32.totalorder %s47, %s63
      %p65 = scmp.eq.s32.totalorder %s39, 0
      %p66 = por %p64, %p65
      %s67 = ssub.s32 %s33, %s40
      %p68 = scmp.eq.s32.totalorder %s67, 0
      %s70 = sadd.s32 %s69, 1
      %s71 = scalar_select %p68, %s69, %s70
      %p74 = pneg %p68
      %p75 = scmp.eq.s32.totalorder %s33, 1
      %p76 = por %p74, %p75
      %p77 = scmp.ne.s32.totalorder %s69, %s72
      %p78 = scmp.eq.s32.totalorder %s33, 0
      %p79 = por %p77, %p78
      %p80 = scmp.ne.s32.totalorder %s69, %s72
      %p81 = scmp.eq.s32.totalorder %s38, 1
      %p82 = por %p80, %p81
      %p83 = scmp.ne.s32.totalorder %s72, %s73
      %p84 = scmp.eq.s32.totalorder %s38, 0
      %p85 = por %p83, %p84
      %p86 = scmp.ne.s32.totalorder %s72, %s73
      %p87 = scmp.eq.s32.totalorder %s39, 1
      %p88 = por %p86, %p87
      %p90 = scmp.ne.s32.totalorder %s73, %s89
      %p91 = scmp.eq.s32.totalorder %s39, 0
      %p92 = por %p90, %p91
      %s93 = ssub.s32 %s33, %s40
      %p94 = scmp.eq.s32.totalorder %s93, 0
      %s96 = sadd.s32 %s95, 1
      %s97 = scalar_select %p94, %s95, %s96
      %p100 = pneg %p94
      %p101 = scmp.eq.s32.totalorder %s33, 1
      %p102 = por %p100, %p101
      %p103 = scmp.ne.s32.totalorder %s95, %s98
      %p104 = scmp.eq.s32.totalorder %s33, 0
      %p105 = por %p103, %p104
      %p106 = scmp.ne.s32.totalorder %s95, %s98
      %p107 = scmp.eq.s32.totalorder %s38, 1
      %p108 = por %p106, %p107
      %p109 = scmp.ne.s32.totalorder %s98, %s99
      %p110 = scmp.eq.s32.totalorder %s38, 0
      %p111 = por %p109, %p110
      %p112 = scmp.ne.s32.totalorder %s98, %s99
      %p113 = scmp.eq.s32.totalorder %s39, 1
      %p114 = por %p112, %p113
      %p116 = scmp.ne.s32.totalorder %s99, %s115
      %p117 = scmp.eq.s32.totalorder %s39, 0
      %p118 = por %p116, %p117
      %s119 = ssub.s32 %s33, %s40
      %p120 = scmp.eq.s32.totalorder %s119, 0
      %s122 = sadd.s32 %s121, 1
      %s123 = scalar_select %p120, %s121, %s122
      %p126 = pneg %p120
      %p127 = scmp.eq.s32.totalorder %s33, 1
      %p128 = por %p126, %p127
      %p129 = scmp.ne.s32.totalorder %s121, %s124
      %p130 = scmp.eq.s32.totalorder %s33, 0
      %p131 = por %p129, %p130
      %p132 = scmp.ne.s32.totalorder %s121, %s124
      %p133 = scmp.eq.s32.totalorder %s38, 1
      %p134 = por %p132, %p133
      %p135 = scmp.ne.s32.totalorder %s124, %s125
      %p136 = scmp.eq.s32.totalorder %s38, 0
      %p137 = por %p135, %p136
      %p138 = scmp.ne.s32.totalorder %s124, %s125
      %p139 = scmp.eq.s32.totalorder %s39, 1
      %p140 = por %p138, %p139
      %p142 = scmp.ne.s32.totalorder %s125, %s141
      %p143 = scmp.eq.s32.totalorder %s39, 0
      %p144 = por %p142, %p143
      %s146 = sadd.s32 %s145, 1
      %p149 = scmp.eq.s32.totalorder %s33, 1
      %p150 = scmp.ne.s32.totalorder %s145, %s147
      %p151 = scmp.eq.s32.totalorder %s33, 0
      %p152 = por %p150, %p151
      %p153 = scmp.ne.s32.totalorder %s145, %s147
      %p154 = scmp.eq.s32.totalorder %s38, 1
      %p155 = por %p153, %p154
      %p156 = scmp.ne.s32.totalorder %s147, %s148
      %p157 = scmp.eq.s32.totalorder %s38, 0
      %p158 = por %p156, %p157
      %p159 = scmp.ne.s32.totalorder %s147, %s148
      %p160 = scmp.eq.s32.totalorder %s39, 1
      %p161 = por %p159, %p160
      %p163 = scmp.ne.s32.totalorder %s148, %s162
      %p164 = scmp.eq.s32.totalorder %s39, 0
      %p165 = por %p163, %p164
      %s167 = sadd.s32 %s166, 1
      %p170 = scmp.eq.s32.totalorder %s33, 1
      %p171 = scmp.ne.s32.totalorder %s166, %s168
      %p172 = scmp.eq.s32.totalorder %s33, 0
      %p173 = por %p171, %p172
      %p174 = scmp.ne.s32.totalorder %s166, %s168
      %p175 = scmp.eq.s32.totalorder %s38, 1
      %p176 = por %p174, %p175
      %p177 = scmp.ne.s32.totalorder %s168, %s169
      %p178 = scmp.eq.s32.totalorder %s38, 0
      %p179 = por %p177, %p178
      %p180 = scmp.ne.s32.totalorder %s168, %s169
      %p181 = scmp.eq.s32.totalorder %s39, 1
      %p182 = por %p180, %p181
      %p184 = scmp.ne.s32.totalorder %s169, %s183
      %p185 = scmp.eq.s32.totalorder %s39, 0
      %p186 = por %p184, %p185
      %s188 = sadd.s32 %s187, 1
      %p191 = scmp.eq.s32.totalorder %s33, 1
      %p192 = scmp.ne.s32.totalorder %s187, %s189
      %p193 = scmp.eq.s32.totalorder %s33, 0
      %p194 = por %p192, %p193
      %p195 = scmp.ne.s32.totalorder %s187, %s189
      %p196 = scmp.eq.s32.totalorder %s38, 1
      %p197 = por %p195, %p196
      %p198 = scmp.ne.s32.totalorder %s189, %s190
      %p199 = scmp.eq.s32.totalorder %s38, 0
      %p200 = por %p198, %p199
      %p201 = scmp.ne.s32.totalorder %s189, %s190
      %p202 = scmp.eq.s32.totalorder %s39, 1
      %p203 = por %p201, %p202
      %p205 = scmp.ne.s32.totalorder %s190, %s204
      %p206 = scmp.eq.s32.totalorder %s39, 0
      %p207 = por %p205, %p206
      %s209 = sadd.s32 %s208, 1
      %p212 = scmp.eq.s32.totalorder %s33, 1
      %p213 = scmp.ne.s32.totalorder %s208, %s210
      %p214 = scmp.eq.s32.totalorder %s33, 0
      %p215 = por %p213, %p214
      %p216 = scmp.ne.s32.totalorder %s208, %s210
      %p217 = scmp.eq.s32.totalorder %s38, 1
      %p218 = por %p216, %p217
      %p219 = scmp.ne.s32.totalorder %s210, %s211
      %p220 = scmp.eq.s32.totalorder %s38, 0
      %p221 = por %p219, %p220
      %p222 = scmp.ne.s32.totalorder %s210, %s211
      %p223 = scmp.eq.s32.totalorder %s39, 1
      %p224 = por %p222, %p223
      %p226 = scmp.ne.s32.totalorder %s211, %s225
      %p227 = scmp.eq.s32.totalorder %s39, 0
      %p228 = por %p226, %p227
      %s230 = sadd.s32 %s229, 1
      %p233 = scmp.eq.s32.totalorder %s33, 1
      %p234 = scmp.ne.s32.totalorder %s229, %s231
      %p235 = scmp.eq.s32.totalorder %s33, 0
      %p236 = por %p234, %p235
      %p237 = scmp.ne.s32.totalorder %s229, %s231
      %p238 = scmp.eq.s32.totalorder %s38, 1
      %p239 = por %p237, %p238
      %p240 = scmp.ne.s32.totalorder %s231, %s232
      %p241 = scmp.eq.s32.totalorder %s38, 0
      %p242 = por %p240, %p241
      %p243 = scmp.ne.s32.totalorder %s231, %s232
      %p244 = scmp.eq.s32.totalorder %s39, 1
      %p245 = por %p243, %p244
      %p247 = scmp.ne.s32.totalorder %s232, %s246
      %p248 = scmp.eq.s32.totalorder %s39, 0
      %p249 = por %p247, %p248
      %s251 = sadd.s32 %s250, 1
      %p254 = scmp.eq.s32.totalorder %s33, 1
      %p255 = scmp.ne.s32.totalorder %s250, %s252
      %p256 = scmp.eq.s32.totalorder %s33, 0
      %p257 = por %p255, %p256
      %p258 = scmp.ne.s32.totalorder %s250, %s252
      %p259 = scmp.eq.s32.totalorder %s38, 1
      %p260 = por %p258, %p259
      %p261 = scmp.ne.s32.totalorder %s252, %s253
      %p262 = scmp.eq.s32.totalorder %s38, 0
      %p263 = por %p261, %p262
      %p264 = scmp.ne.s32.totalorder %s252, %s253
      %p265 = scmp.eq.s32.totalorder %s39, 1
      %p266 = por %p264, %p265
      %p268 = scmp.ne.s32.totalorder %s253, %s267
      %p269 = scmp.eq.s32.totalorder %s39, 0
      %p270 = por %p268, %p269
      %s272 = sadd.s32 %s271, 1
      %p275 = scmp.eq.s32.totalorder %s33, 1
      %p276 = scmp.ne.s32.totalorder %s271, %s273
      %p277 = scmp.eq.s32.totalorder %s33, 0
      %p278 = por %p276, %p277
      %p279 = scmp.ne.s32.totalorder %s271, %s273
      %p280 = scmp.eq.s32.totalorder %s38, 1
      %p281 = por %p279, %p280
      %p282 = scmp.ne.s32.totalorder %s273, %s274
      %p283 = scmp.eq.s32.totalorder %s38, 0
      %p284 = por %p282, %p283
      %p285 = scmp.ne.s32.totalorder %s273, %s274
      %p286 = scmp.eq.s32.totalorder %s39, 1
      %p287 = por %p285, %p286
      %p289 = scmp.ne.s32.totalorder %s274, %s288
      %p290 = scmp.eq.s32.totalorder %s39, 0
      %p291 = por %p289, %p290
      %s293 = sadd.s32 %s292, 1
      %p296 = scmp.eq.s32.totalorder %s33, 1
      %p297 = scmp.ne.s32.totalorder %s292, %s294
      %p298 = scmp.eq.s32.totalorder %s33, 0
      %p299 = por %p297, %p298
      %p300 = scmp.ne.s32.totalorder %s292, %s294
      %p301 = scmp.eq.s32.totalorder %s38, 1
      %p302 = por %p300, %p301
      %p303 = scmp.ne.s32.totalorder %s294, %s295
      %p304 = scmp.eq.s32.totalorder %s38, 0
      %p305 = por %p303, %p304
      %p306 = scmp.ne.s32.totalorder %s294, %s295
      %p307 = scmp.eq.s32.totalorder %s39, 1
      %p308 = por %p306, %p307
      %p310 = scmp.ne.s32.totalorder %s295, %s309
      %p311 = scmp.eq.s32.totalorder %s39, 0
      %p312 = por %p310, %p311
      %s314 = sadd.s32 %s313, 1
      %p317 = scmp.eq.s32.totalorder %s33, 1
      %p318 = scmp.ne.s32.totalorder %s313, %s315
      %p319 = scmp.eq.s32.totalorder %s33, 0
      %p320 = por %p318, %p319
      %p321 = scmp.ne.s32.totalorder %s313, %s315
      %p322 = scmp.eq.s32.totalorder %s38, 1
      %p323 = por %p321, %p322
      %p324 = scmp.ne.s32.totalorder %s315, %s316
      %p325 = scmp.eq.s32.totalorder %s38, 0
      %p326 = por %p324, %p325
      %p327 = scmp.ne.s32.totalorder %s315, %s316
      %p328 = scmp.eq.s32.totalorder %s39, 1
      %p329 = por %p327, %p328
      %p331 = scmp.ne.s32.totalorder %s316, %s330
      %p332 = scmp.eq.s32.totalorder %s39, 0
      %p333 = por %p331, %p332
      %s335 = sadd.s32 %s334, 1
      %p338 = scmp.eq.s32.totalorder %s33, 1
      %p339 = scmp.ne.s32.totalorder %s334, %s336
      %p340 = scmp.eq.s32.totalorder %s33, 0
      %p341 = por %p339, %p340
      %p342 = scmp.ne.s32.totalorder %s334, %s336
      %p343 = scmp.eq.s32.totalorder %s38, 1
      %p344 = por %p342, %p343
      %p345 = scmp.ne.s32.totalorder %s336, %s337
      %p346 = scmp.eq.s32.totalorder %s38, 0
      %p347 = por %p345, %p346
      %p348 = scmp.ne.s32.totalorder %s336, %s337
      %p349 = scmp.eq.s32.totalorder %s39, 1
      %p350 = por %p348, %p349
      %p352 = scmp.ne.s32.totalorder %s337, %s351
      %p353 = scmp.eq.s32.totalorder %s39, 0
      %p354 = por %p352, %p353
      %s356 = sadd.s32 %s355, 1
      %p359 = scmp.eq.s32.totalorder %s33, 1
      %p360 = scmp.ne.s32.totalorder %s355, %s357
      %p361 = scmp.eq.s32.totalorder %s33, 0
      %p362 = por %p360, %p361
      %p363 = scmp.ne.s32.totalorder %s355, %s357
      %p364 = scmp.eq.s32.totalorder %s38, 1
      %p365 = por %p363, %p364
      %p366 = scmp.ne.s32.totalorder %s357, %s358
      %p367 = scmp.eq.s32.totalorder %s38, 0
      %p368 = por %p366, %p367
      %p369 = scmp.ne.s32.totalorder %s357, %s358
      %p370 = scmp.eq.s32.totalorder %s39, 1
      %p371 = por %p369, %p370
      %p373 = scmp.ne.s32.totalorder %s358, %s372
      %p374 = scmp.eq.s32.totalorder %s39, 0
      %p375 = por %p373, %p374
      %s377 = sadd.s32 %s376, 1
      %p380 = scmp.eq.s32.totalorder %s33, 1
      %p381 = scmp.ne.s32.totalorder %s376, %s378
      %p382 = scmp.eq.s32.totalorder %s33, 0
      %p383 = por %p381, %p382
      %p384 = scmp.ne.s32.totalorder %s376, %s378
      %p385 = scmp.eq.s32.totalorder %s38, 1
      %p386 = por %p384, %p385
      %p387 = scmp.ne.s32.totalorder %s378, %s379
      %p388 = scmp.eq.s32.totalorder %s38, 0
      %p389 = por %p387, %p388
      %p390 = scmp.ne.s32.totalorder %s378, %s379
      %p391 = scmp.eq.s32.totalorder %s39, 1
      %p392 = por %p390, %p391
      %p394 = scmp.ne.s32.totalorder %s379, %s393
      %p395 = scmp.eq.s32.totalorder %s39, 0
      %p396 = por %p394, %p395
      %s398 = sadd.s32 %s397, 1
      %p401 = scmp.eq.s32.totalorder %s33, 1
      %p402 = scmp.ne.s32.totalorder %s397, %s399
      %p403 = scmp.eq.s32.totalorder %s33, 0
      %p404 = por %p402, %p403
      %p405 = scmp.ne.s32.totalorder %s397, %s399
      %p406 = scmp.eq.s32.totalorder %s38, 1
      %p407 = por %p405, %p406
      %p408 = scmp.ne.s32.totalorder %s399, %s400
      %p409 = scmp.eq.s32.totalorder %s38, 0
      %p410 = por %p408, %p409
      %p411 = scmp.ne.s32.totalorder %s399, %s400
      %p412 = scmp.eq.s32.totalorder %s39, 1
      %p413 = por %p411, %p412
      %p415 = scmp.ne.s32.totalorder %s400, %s414
      %p416 = scmp.eq.s32.totalorder %s39, 0
      %p417 = por %p415, %p416
      %s419 = sadd.s32 %s418, 1
      %p422 = scmp.eq.s32.totalorder %s33, 1
      %p423 = scmp.ne.s32.totalorder %s418, %s420
      %p424 = scmp.eq.s32.totalorder %s33, 0
      %p425 = por %p423, %p424
      %p426 = scmp.ne.s32.totalorder %s418, %s420
      %p427 = scmp.eq.s32.totalorder %s38, 1
      %p428 = por %p426, %p427
      %p429 = scmp.ne.s32.totalorder %s420, %s421
      %p430 = scmp.eq.s32.totalorder %s38, 0
      %p431 = por %p429, %p430
      %p432 = scmp.ne.s32.totalorder %s420, %s421
      %p433 = scmp.eq.s32.totalorder %s39, 1
      %p434 = por %p432, %p433
      %p436 = scmp.ne.s32.totalorder %s421, %s435
      %p437 = scmp.eq.s32.totalorder %s39, 0
      %p438 = por %p436, %p437
      %s440 = sadd.s32 %s439, 1
      %p443 = scmp.eq.s32.totalorder %s33, 1
      %p444 = scmp.ne.s32.totalorder %s439, %s441
      %p445 = scmp.eq.s32.totalorder %s33, 0
      %p446 = por %p444, %p445
      %p447 = scmp.ne.s32.totalorder %s439, %s441
      %p448 = scmp.eq.s32.totalorder %s38, 1
      %p449 = por %p447, %p448
      %p450 = scmp.ne.s32.totalorder %s441, %s442
      %p451 = scmp.eq.s32.totalorder %s38, 0
      %p452 = por %p450, %p451
      %p453 = scmp.ne.s32.totalorder %s441, %s442
      %p454 = scmp.eq.s32.totalorder %s39, 1
      %p455 = por %p453, %p454
      %p457 = scmp.ne.s32.totalorder %s442, %s456
      %p458 = scmp.eq.s32.totalorder %s39, 0
      %p459 = por %p457, %p458
      %s461 = sadd.s32 %s460, 1
      %p464 = scmp.eq.s32.totalorder %s33, 1
      %p465 = scmp.ne.s32.totalorder %s460, %s462
      %p466 = scmp.eq.s32.totalorder %s33, 0
      %p467 = por %p465, %p466
      %p468 = scmp.ne.s32.totalorder %s460, %s462
      %p469 = scmp.eq.s32.totalorder %s38, 1
      %p470 = por %p468, %p469
      %p471 = scmp.ne.s32.totalorder %s462, %s463
      %p472 = scmp.eq.s32.totalorder %s38, 0
      %p473 = por %p471, %p472
      %p474 = scmp.ne.s32.totalorder %s462, %s463
      %p475 = scmp.eq.s32.totalorder %s39, 1
      %p476 = por %p474, %p475
      %p478 = scmp.ne.s32.totalorder %s463, %s477
      %p479 = scmp.eq.s32.totalorder %s39, 0
      %p480 = por %p478, %p479
      %s482 = sadd.s32 %s481, 1
      %p485 = scmp.eq.s32.totalorder %s33, 1
      %p486 = scmp.ne.s32.totalorder %s481, %s483
      %p487 = scmp.eq.s32.totalorder %s33, 0
      %p488 = por %p486, %p487
      %p489 = scmp.ne.s32.totalorder %s481, %s483
      %p490 = scmp.eq.s32.totalorder %s38, 1
      %p491 = por %p489, %p490
      %p492 = scmp.ne.s32.totalorder %s483, %s484
      %p493 = scmp.eq.s32.totalorder %s38, 0
      %p494 = por %p492, %p493
      %p495 = scmp.ne.s32.totalorder %s483, %s484
      %p496 = scmp.eq.s32.totalorder %s39, 1
      %p497 = por %p495, %p496
      %p499 = scmp.ne.s32.totalorder %s484, %s498
      %p500 = scmp.eq.s32.totalorder %s39, 0
      %p501 = por %p499, %p500
      %s503 = sadd.s32 %s502, 1
      %p506 = scmp.eq.s32.totalorder %s33, 1
      %p507 = scmp.ne.s32.totalorder %s502, %s504
      %p508 = scmp.eq.s32.totalorder %s33, 0
      %p509 = por %p507, %p508
      %p510 = scmp.ne.s32.totalorder %s502, %s504
      %p511 = scmp.eq.s32.totalorder %s38, 1
      %p512 = por %p510, %p511
      %p513 = scmp.ne.s32.totalorder %s504, %s505
      %p514 = scmp.eq.s32.totalorder %s38, 0
      %p515 = por %p513, %p514
      %p516 = scmp.ne.s32.totalorder %s504, %s505
      %p517 = scmp.eq.s32.totalorder %s39, 1
      %p518 = por %p516, %p517
      %p520 = scmp.ne.s32.totalorder %s505, %s519
      %p521 = scmp.eq.s32.totalorder %s39, 0
      %p522 = por %p520, %p521
      %s524 = sadd.s32 %s523, 1
      %p527 = scmp.eq.s32.totalorder %s33, 1
      %p528 = scmp.ne.s32.totalorder %s523, %s525
      %p529 = scmp.eq.s32.totalorder %s33, 0
      %p530 = por %p528, %p529
      %p531 = scmp.ne.s32.totalorder %s523, %s525
      %p532 = scmp.eq.s32.totalorder %s38, 1
      %p533 = por %p531, %p532
      %p534 = scmp.ne.s32.totalorder %s525, %s526
      %p535 = scmp.eq.s32.totalorder %s38, 0
      %p536 = por %p534, %p535
      %p537 = scmp.ne.s32.totalorder %s525, %s526
      %p538 = scmp.eq.s32.totalorder %s39, 1
      %p539 = por %p537, %p538
      %p541 = scmp.ne.s32.totalorder %s526, %s540
      %p542 = scmp.eq.s32.totalorder %s39, 0
      %p543 = por %p541, %p542
      %s545 = sadd.s32 %s544, 1
      %p548 = scmp.eq.s32.totalorder %s33, 1
      %p549 = scmp.ne.s32.totalorder %s544, %s546
      %p550 = scmp.eq.s32.totalorder %s33, 0
      %p551 = por %p549, %p550
      %p552 = scmp.ne.s32.totalorder %s544, %s546
      %p553 = scmp.eq.s32.totalorder %s38, 1
      %p554 = por %p552, %p553
      %p555 = scmp.ne.s32.totalorder %s546, %s547
      %p556 = scmp.eq.s32.totalorder %s38, 0
      %p557 = por %p555, %p556
      %p558 = scmp.ne.s32.totalorder %s546, %s547
      %p559 = scmp.eq.s32.totalorder %s39, 1
      %p560 = por %p558, %p559
      %p562 = scmp.ne.s32.totalorder %s547, %s561
      %p563 = scmp.eq.s32.totalorder %s39, 0
      %p564 = por %p562, %p563
      %s565 = ssub.s32 %s33, %s40
      %p566 = scmp.eq.s32.totalorder %s565, 0
      %s568 = sadd.s32 %s567, 1
      %s569 = scalar_select %p566, %s567, %s568
      %p572 = pneg %p566
      %p573 = scmp.eq.s32.totalorder %s33, 1
      %p574 = por %p572, %p573
      %p575 = scmp.ne.s32.totalorder %s567, %s570
      %p576 = scmp.eq.s32.totalorder %s33, 0
      %p577 = por %p575, %p576
      %p578 = scmp.ne.s32.totalorder %s567, %s570
      %p579 = scmp.eq.s32.totalorder %s38, 1
      %p580 = por %p578, %p579
      %p581 = scmp.ne.s32.totalorder %s570, %s571
      %p582 = scmp.eq.s32.totalorder %s38, 0
      %p583 = por %p581, %p582
      %p584 = scmp.ne.s32.totalorder %s570, %s571
      %p585 = scmp.eq.s32.totalorder %s39, 1
      %p586 = por %p584, %p585
      %p588 = scmp.ne.s32.totalorder %s571, %s587
      %p589 = scmp.eq.s32.totalorder %s39, 0
      %p590 = por %p588, %p589
      %p591 = scmp.le.s32.totalorder 1, %s33
      %p592 = scmp.lt.s32.totalorder %s33, 3
      %p593 = pnand %p591, %p592
      %p594 = pneg %p593
      // Predicated region
      $region9: #{transformer_forward.5} parent=5 // pred_check
        _
      $region10: #{transformer_forward.5} parent=5 // pred_check_branch
        %596 = sbr.rel (%p593) target = $region12
      $region11: #{transformer_forward.5} parent=5 // pred_region
        %s597 = ssub.s32 %s33, 1
        // Predicated region
        $region13: #{transformer_forward.5} parent=11 // pred_check
          %p598 = pneg %p158
        $region14: #{transformer_forward.5} parent=11 // pred_check_branch
          %600 = sbr.rel (%p598) target = $region16
        $region15: #{transformer_forward.5} parent=11 // pred_region
          _
        $region16: #{transformer_forward.5} parent=11 // pred_fallthru
          _
        // Predicated region
        $region17: #{transformer_forward.5} parent=11 // pred_check
          %p601 = pneg %p179
        $region18: #{transformer_forward.5} parent=11 // pred_check_branch
          %603 = sbr.rel (%p601) target = $region20
        $region19: #{transformer_forward.5} parent=11 // pred_region
          _
        $region20: #{transformer_forward.5} parent=11 // pred_fallthru
          _
        // Predicated region
        $region21: #{transformer_forward.5} parent=11 // pred_check
          %p604 = pneg %p200
        $region22: #{transformer_forward.5} parent=11 // pred_check_branch
          %606 = sbr.rel (%p604) target = $region24
        $region23: #{transformer_forward.5} parent=11 // pred_region
          _
        $region24: #{transformer_forward.5} parent=11 // pred_fallthru
          _
        // Predicated region
        $region25: #{transformer_forward.5} parent=11 // pred_check
          %p607 = pneg %p221
        $region26: #{transformer_forward.5} parent=11 // pred_check_branch
          %609 = sbr.rel (%p607) target = $region28
        $region27: #{transformer_forward.5} parent=11 // pred_region
          _
        $region28: #{transformer_forward.5} parent=11 // pred_fallthru
          _
        // Predicated region
        $region29: #{transformer_forward.5} parent=11 // pred_check
          %p610 = pneg %p242
        $region30: #{transformer_forward.5} parent=11 // pred_check_branch
          %612 = sbr.rel (%p610) target = $region32
        $region31: #{transformer_forward.5} parent=11 // pred_region
          _
        $region32: #{transformer_forward.5} parent=11 // pred_fallthru
          _
        // Predicated region
        $region33: #{transformer_forward.5} parent=11 // pred_check
          %p613 = pneg %p263
        $region34: #{transformer_forward.5} parent=11 // pred_check_branch
          %615 = sbr.rel (%p613) target = $region36
        $region35: #{transformer_forward.5} parent=11 // pred_region
          _
        $region36: #{transformer_forward.5} parent=11 // pred_fallthru
          _
        // Predicated region
        $region37: #{transformer_forward.5} parent=11 // pred_check
          %p616 = pneg %p284
        $region38: #{transformer_forward.5} parent=11 // pred_check_branch
          %618 = sbr.rel (%p616) target = $region40
        $region39: #{transformer_forward.5} parent=11 // pred_region
          _
        $region40: #{transformer_forward.5} parent=11 // pred_fallthru
          _
        // Predicated region
        $region41: #{transformer_forward.5} parent=11 // pred_check
          %p619 = pneg %p305
        $region42: #{transformer_forward.5} parent=11 // pred_check_branch
          %621 = sbr.rel (%p619) target = $region44
        $region43: #{transformer_forward.5} parent=11 // pred_region
          _
        $region44: #{transformer_forward.5} parent=11 // pred_fallthru
          _
        // Predicated region
        $region45: #{transformer_forward.5} parent=11 // pred_check
          %p622 = pneg %p326
        $region46: #{transformer_forward.5} parent=11 // pred_check_branch
          %624 = sbr.rel (%p622) target = $region48
        $region47: #{transformer_forward.5} parent=11 // pred_region
          _
        $region48: #{transformer_forward.5} parent=11 // pred_fallthru
          _
        // Predicated region
        $region49: #{transformer_forward.5} parent=11 // pred_check
          %p625 = pneg %p347
        $region50: #{transformer_forward.5} parent=11 // pred_check_branch
          %627 = sbr.rel (%p625) target = $region52
        $region51: #{transformer_forward.5} parent=11 // pred_region
          _
        $region52: #{transformer_forward.5} parent=11 // pred_fallthru
          _
        // Predicated region
        $region53: #{transformer_forward.5} parent=11 // pred_check
          %p628 = pneg %p368
        $region54: #{transformer_forward.5} parent=11 // pred_check_branch
          %630 = sbr.rel (%p628) target = $region56
        $region55: #{transformer_forward.5} parent=11 // pred_region
          _
        $region56: #{transformer_forward.5} parent=11 // pred_fallthru
          _
        // Predicated region
        $region57: #{transformer_forward.5} parent=11 // pred_check
          %p631 = pneg %p389
        $region58: #{transformer_forward.5} parent=11 // pred_check_branch
          %633 = sbr.rel (%p631) target = $region60
        $region59: #{transformer_forward.5} parent=11 // pred_region
          _
        $region60: #{transformer_forward.5} parent=11 // pred_fallthru
          _
        // Predicated region
        $region61: #{transformer_forward.5} parent=11 // pred_check
          %p634 = pneg %p410
        $region62: #{transformer_forward.5} parent=11 // pred_check_branch
          %636 = sbr.rel (%p634) target = $region64
        $region63: #{transformer_forward.5} parent=11 // pred_region
          _
        $region64: #{transformer_forward.5} parent=11 // pred_fallthru
          _
        // Predicated region
        $region65: #{transformer_forward.5} parent=11 // pred_check
          %p637 = pneg %p431
        $region66: #{transformer_forward.5} parent=11 // pred_check_branch
          %639 = sbr.rel (%p637) target = $region68
        $region67: #{transformer_forward.5} parent=11 // pred_region
          _
        $region68: #{transformer_forward.5} parent=11 // pred_fallthru
          _
        // Predicated region
        $region69: #{transformer_forward.5} parent=11 // pred_check
          %p640 = pneg %p452
        $region70: #{transformer_forward.5} parent=11 // pred_check_branch
          %642 = sbr.rel (%p640) target = $region72
        $region71: #{transformer_forward.5} parent=11 // pred_region
          _
        $region72: #{transformer_forward.5} parent=11 // pred_fallthru
          _
        // Predicated region
        $region73: #{transformer_forward.5} parent=11 // pred_check
          %p643 = pneg %p473
        $region74: #{transformer_forward.5} parent=11 // pred_check_branch
          %645 = sbr.rel (%p643) target = $region76
        $region75: #{transformer_forward.5} parent=11 // pred_region
          _
        $region76: #{transformer_forward.5} parent=11 // pred_fallthru
          _
        // Predicated region
        $region77: #{transformer_forward.5} parent=11 // pred_check
          %p646 = pneg %p494
        $region78: #{transformer_forward.5} parent=11 // pred_check_branch
          %648 = sbr.rel (%p646) target = $region80
        $region79: #{transformer_forward.5} parent=11 // pred_region
          _
        $region80: #{transformer_forward.5} parent=11 // pred_fallthru
          _
        // Predicated region
        $region81: #{transformer_forward.5} parent=11 // pred_check
          %p649 = pneg %p515
        $region82: #{transformer_forward.5} parent=11 // pred_check_branch
          %651 = sbr.rel (%p649) target = $region84
        $region83: #{transformer_forward.5} parent=11 // pred_region
          _
        $region84: #{transformer_forward.5} parent=11 // pred_fallthru
          _
        // Predicated region
        $region85: #{transformer_forward.5} parent=11 // pred_check
          %p652 = pneg %p536
        $region86: #{transformer_forward.5} parent=11 // pred_check_branch
          %654 = sbr.rel (%p652) target = $region88
        $region87: #{transformer_forward.5} parent=11 // pred_region
          _
        $region88: #{transformer_forward.5} parent=11 // pred_fallthru
          _
        // Predicated region
        $region89: #{transformer_forward.5} parent=11 // pred_check
          %p655 = pneg %p557
        $region90: #{transformer_forward.5} parent=11 // pred_check_branch
          %657 = sbr.rel (%p655) target = $region92
        $region91: #{transformer_forward.5} parent=11 // pred_region
          _
        $region92: #{transformer_forward.5} parent=11 // pred_fallthru
          _
      $region12: #{transformer_forward.5} parent=5 // pred_fallthru
        _
      %p658 = scmp.lt.s32.totalorder %s33, 2
      // Predicated region
      $region93: #{transformer_forward.5} parent=5 // pred_check
        %p659 = pneg %p658
      $region94: #{transformer_forward.5} parent=5 // pred_check_branch
        %661 = sbr.rel (%p659) target = $region96
      $region95: #{transformer_forward.5} parent=5 // pred_region
        // Predicated region
        $region97: #{transformer_forward.5} parent=95 // pred_check
          %p662 = pneg %p53
        $region98: #{transformer_forward.5} parent=95 // pred_check_branch
          %664 = sbr.rel (%p662) target = $region100
        $region99: #{transformer_forward.5} parent=95 // pred_region
          %p665 = scmp.lt.s32.totalorder %s33, 1
          %s666 = scalar_select %p665, %s33, 1
          %s667 = smul.addr %s666, 8
          %s668 = scalar_lea.vmem %s0, %s667
        $region100: #{transformer_forward.5} parent=95 // pred_fallthru
          _
        // Predicated region
        $region101: #{transformer_forward.5} parent=95 // pred_check
          %p669 = pneg %p79
        $region102: #{transformer_forward.5} parent=95 // pred_check_branch
          %671 = sbr.rel (%p669) target = $region104
        $region103: #{transformer_forward.5} parent=95 // pred_region
          %p672 = scmp.lt.s32.totalorder %s33, 1
          %s673 = scalar_select %p672, %s33, 1
          %s674 = smul.addr %s673, 8
          %s675 = scalar_lea.vmem %s1, %s674
        $region104: #{transformer_forward.5} parent=95 // pred_fallthru
          _
        // Predicated region
        $region105: #{transformer_forward.5} parent=95 // pred_check
          %p676 = pneg %p105
        $region106: #{transformer_forward.5} parent=95 // pred_check_branch
          %678 = sbr.rel (%p676) target = $region108
        $region107: #{transformer_forward.5} parent=95 // pred_region
          %p679 = scmp.lt.s32.totalorder %s33, 1
          %s680 = scalar_select %p679, %s33, 1
          %s681 = smul.addr %s680, 8
          %s682 = scalar_lea.vmem %s2, %s681
        $region108: #{transformer_forward.5} parent=95 // pred_fallthru
          _
        // Predicated region
        $region109: #{transformer_forward.5} parent=95 // pred_check
          %p683 = pneg %p131
        $region110: #{transformer_forward.5} parent=95 // pred_check_branch
          %685 = sbr.rel (%p683) target = $region112
        $region111: #{transformer_forward.5} parent=95 // pred_region
          %p686 = scmp.lt.s32.totalorder %s33, 1
          %s687 = scalar_select %p686, %s33, 1
          %s688 = scalar_lea.vmem %s3, %s687
        $region112: #{transformer_forward.5} parent=95 // pred_fallthru
          _
      $region96: #{transformer_forward.5} parent=5 // pred_fallthru
        _
      %p689 = scmp.le.s32.totalorder 1, %s33
      %p690 = scmp.lt.s32.totalorder %s33, 3
      %p691 = pnand %p689, %p690
      %p692 = pneg %p691
      // Predicated region
      $region113: #{transformer_forward.5} parent=5 // pred_check
        _
      $region114: #{transformer_forward.5} parent=5 // pred_check_branch
        %694 = sbr.rel (%p691) target = $region116
      $region115: #{transformer_forward.5} parent=5 // pred_region
        %s695 = ssub.s32 %s33, 1
        %p696 = scmp.lt.s32.totalorder %s38, 1
        %s697 = scalar_select %p696, %s38, 1
        %s698 = smul.addr %s697, 8
        %s699 = scalar_lea.vmem %s0, %s698
        %p700 = pneg %p59
        %p701 = pneg %p56
        %p702 = scmp.lt.s32.totalorder %s38, 1
        %s703 = scalar_select %p702, %s38, 1
        %s704 = smul.addr %s703, 8
        %s705 = scalar_lea.vmem %s1, %s704
        %p706 = pneg %p85
        %p707 = pneg %p82
        %p708 = scmp.lt.s32.totalorder %s38, 1
        %s709 = scalar_select %p708, %s38, 1
        %s710 = smul.addr %s709, 8
        %s711 = scalar_lea.vmem %s2, %s710
        %p712 = pneg %p111
        %p713 = pneg %p108
        %p714 = scmp.lt.s32.totalorder %s38, 1
        %s715 = scalar_select %p714, %s38, 1
        %s716 = scalar_lea.vmem %s3, %s715
        %p717 = pneg %p137
        %p718 = pneg %p134
        %p719 = pneg %p158
        %p720 = pneg %p155
        %p721 = pneg %p179
        %p722 = pneg %p176
        %p723 = pneg %p200
        %p724 = pneg %p197
        %p725 = pneg %p221
        %p726 = pneg %p218
        %p727 = pneg %p242
        %p728 = pneg %p239
        %p729 = pneg %p263
        %p730 = pneg %p260
        %p731 = pneg %p284
        %p732 = pneg %p281
        %p733 = pneg %p305
        %p734 = pneg %p302
        %p735 = pneg %p326
        %p736 = pneg %p323
        %p737 = pneg %p347
        %p738 = pneg %p344
        %p739 = pneg %p368
        %p740 = pneg %p365
        %p741 = pneg %p389
        %p742 = pneg %p386
        %p743 = pneg %p410
        %p744 = pneg %p407
        %p745 = pneg %p431
        %p746 = pneg %p428
        %p747 = pneg %p452
        %p748 = pneg %p449
        %p749 = pneg %p473
        %p750 = pneg %p470
        %p751 = pneg %p494
        %p752 = pneg %p491
        %p753 = pneg %p515
        %p754 = pneg %p512
        %p755 = pneg %p536
        %p756 = pneg %p533
        %p757 = pneg %p557
        %p758 = pneg %p554
        %p759 = pneg %p583
        %p760 = pneg %p580
        %s761 = sand.u32 %s570, 1
        %s762 = scalar_lea.sflag [#allocation3], %s761
        %s763 = sand.u32 %s570, 1
        %s764 = smul.addr %s763, 8
        %s765 = scalar_lea.vmem [#allocation2], %s764
        %p766 = scmp.lt.s32.totalorder %s38, 1
        %s767 = scalar_select %p766, %s38, 1
        %s768 = smul.addr %s767, 8
        %s769 = scalar_lea.vmem %s0, %s768
        %p770 = scmp.lt.s32.totalorder %s38, 1
        %s771 = scalar_select %p770, %s38, 1
        %s772 = smul.addr %s771, 8
        %s773 = scalar_lea.vmem %s1, %s772
        %p774 = scmp.lt.s32.totalorder %s38, 1
        %s775 = scalar_select %p774, %s38, 1
        %s776 = smul.addr %s775, 8
        %s777 = scalar_lea.vmem %s2, %s776
        %p778 = scmp.lt.s32.totalorder %s38, 1
        %s779 = scalar_select %p778, %s38, 1
        %s780 = scalar_lea.vmem %s3, %s779
        %v782 = vld [vmem:[%s769] sm:$0xff]
        %v783 = vld [vmem:[%s773] sm:$0xff]
        %v784 = vld [vmem:[%s777] sm:$0xff]
        %v785 = vlaneseq
        %v786 = vshrl.u32 %v785, 7
        %v787 = vlaneseq
        %v788 = vand.u32 %v787, 127
        %vm789 = vcmp.le.s32.totalorder %v788, %v786
        %vm790 = vcmp.gt.f32.partialorder %v784, 0.0
        %v791 = vsel %vm790, 1, 0
        %792 = vset.pattern.permute.xlu0 0
        %793 = vperm.xlu0 %792, %v791
        %v794 = vpop.permute.xlu0 %793
        %vm795 = vcmp.eq.s32.totalorder %v794, 1
        %vm796 = vmand %vm789, %vm795
        %v797 = vsel %vm796, 0.0, -1e+09
        %v798 = vld [vmem:[%s780] sm:$0x1]
        %vm799 = vcmp.gt.f32.partialorder %v798, 0.0
        %v800 = vsel %vm799, 0.0, -1e+09
        %v801 = vpack.c.bf16 %v782, %v782
        %v802 = vld [vmem:[%s4] sm:$0xf]
        %v803 = vld [vmem:[%s4 + $0x4] sm:$0xf]
        %v804 = vld [vmem:[%s4 + $0x8] sm:$0xf]
        %v805 = vld [vmem:[%s4 + $0xc] sm:$0xf]
        %v806 = vld [vmem:[%s5] sm:$0x1]
        %v808 = vlaneseq
        %v809 = vshrl.u32 %v808, 7
        %v810 = vsub.s32 0, %v809
        %v811 = vrot.slane %v806, %v810
        %v817 = vunpack.c.l.b16 %v802
        %v818 = vunpack.c.l.b16 %v803
        %v819 = vunpack.c.l.b16 %v804
        %v820 = vunpack.c.l.b16 %v805
        %v821 = vpack.c.b16 %v818, %v817
        %v822 = vpack.c.b16 %v820, %v819
        %vm825 = vcmask 261120
        %v827 = vsel %vm825, %v801, 0
        %829 = vmatprep.subr.bf16.mxu0 0
        %830 = vmatpush1.bf16.msra.mxu0 %v821
        %831 = vmatprep.subr.bf16.mxu0 0
        %832 = vmatpush1.bf16.msra.mxu0 %v822
        %833 = vmatprep.subr.bf16.mxu0 0
        %834 = vmatpush1.bf16.msra.mxu0 0
        %835 = vmatprep.subr.bf16.mxu0 0
        %836 = vmatpush1.bf16.msra.mxu0 0
        %837 = vmatprep.subr.bf16.mxu0 0
        %838 = vmatpush1.bf16.msra.mxu0 0
        %839 = vmatprep.subr.bf16.mxu0 0
        %840 = vmatpush1.bf16.msra.mxu0 0
        %841 = vmatprep.subr.bf16.mxu0 0
        %842 = vmatpush1.bf16.msra.mxu0 0
        %843 = vmatprep.subr.bf16.mxu0 0
        %844 = vmatpush1.bf16.msra.mxu0 0
        %845 = vmatprep.subr.bf16.mxu0 0
        %846 = vmatpush1.bf16.msra.mxu0 0
        %847 = vmatprep.subr.bf16.mxu0 0
        %848 = vmatpush1.bf16.msra.mxu0 0
        %849 = vmatprep.subr.bf16.mxu0 0
        %850 = vmatpush1.bf16.msra.mxu0 0
        %851 = vmatprep.subr.bf16.mxu0 0
        %852 = vmatpush1.bf16.msra.mxu0 0
        %853 = vmatprep.subr.bf16.mxu0 0
        %854 = vmatpush1.bf16.msra.mxu0 0
        %855 = vmatprep.subr.bf16.mxu0 0
        %856 = vmatpush1.bf16.msra.mxu0 0
        %857 = vmatprep.subr.bf16.mxu0 0
        %858 = vmatpush1.bf16.msra.mxu0 0
        %859 = vmatprep.subr.bf16.mxu0 0
        %860 = vmatpush1.bf16.msra.mxu0 0
        %861 = vmatprep.mubr.bf16.mxu0 0
        %862 = vmatmul.mubr.bf16.gmra.mrb[0].mxu0 %v827
        %v863 = vpop.f32.mrb[0].mxu0
        %v864 = vadd.f32 %v811, %v863
        %v865 = vpop.f32.mrb[0].mxu0
        %v866 = vpop.f32.mrb[0].mxu0
        %v867 = vpop.f32.mrb[0].mxu0
        %868 = vdwg.mxu0
        %v869 = vld [vmem:[%s6] sm:$0xf]
        %v870 = vld [vmem:[%s6 + $0x4] sm:$0xf]
        %v871 = vld [vmem:[%s6 + $0x8] sm:$0xf]
        %v872 = vld [vmem:[%s6 + $0xc] sm:$0xf]
        %v873 = vld [vmem:[%s7] sm:$0x1]
        %v874 = vpack.c.bf16 %v864, %v864
        %876 = vrot.lane.b32.xlu0 %v874, 96
        %v877 = vpop.permute.xlu0 %876
        %vm878 = vcmask 64512
        %v880 = vsel %vm878, %v874, 0
        %v883 = vsel %vm878, %v877, 0
        %885 = vmatprep.subr.bf16.mxu0 0
        %886 = vmatpush1.bf16.xpose.msra.mxu0 %v883
        %887 = vmatprep.subr.bf16.mxu0 0
        %888 = vmatpush1.bf16.xpose.msra.mxu0 0
        %889 = vmatprep.subr.bf16.mxu0 0
        %890 = vmatpush1.bf16.xpose.msra.mxu0 0
        %891 = vmatprep.subr.bf16.mxu0 0
        %892 = vmatpush1.bf16.xpose.msra.mxu0 0
        %893 = vmatprep.subr.bf16.mxu0 0
        %894 = vmatpush1.bf16.xpose.msra.mxu0 0
        %895 = vmatprep.subr.bf16.mxu0 0
        %896 = vmatpush1.bf16.xpose.msra.mxu0 0
        %897 = vmatprep.subr.bf16.mxu0 0
        %898 = vmatpush1.bf16.xpose.msra.mxu0 0
        %899 = vmatprep.subr.bf16.mxu0 0
        %900 = vmatpush1.bf16.xpose.msra.mxu0 0
        %901 = vmatprep.subr.bf16.mxu0 0
        %902 = vmatpush1.bf16.xpose.msra.mxu0 0
        %903 = vmatprep.subr.bf16.mxu0 0
        %904 = vmatpush1.bf16.xpose.msra.mxu0 0
        %905 = vmatprep.subr.bf16.mxu0 0
        %906 = vmatpush1.bf16.xpose.msra.mxu0 0
        %907 = vmatprep.subr.bf16.mxu0 0
        %908 = vmatpush1.bf16.xpose.msra.mxu0 0
        %909 = vmatprep.subr.bf16.mxu0 0
        %910 = vmatpush1.bf16.xpose.msra.mxu0 0
        %911 = vmatprep.subr.bf16.mxu0 0
        %912 = vmatpush1.bf16.xpose.msra.mxu0 0
        %913 = vmatprep.subr.bf16.mxu0 0
        %914 = vmatpush1.bf16.xpose.msra.mxu0 0
        %915 = vmatprep.subr.bf16.mxu0 0
        %916 = vmatpush1.bf16.xpose.msra.mxu0 0
        %917 = vmatprep.mubr.bf16.mxu0 0
        %918 = vmatmul.mubr.bf16.gmra.mrb[0].mxu0 %v880
        %v919 = vpop.f32.mrb[0].mxu0
        %v920 = vadd.f32 %v797, %v919
        %v921 = vpop.f32.mrb[0].mxu0
        %v922 = vpop.f32.mrb[0].mxu0
        %v923 = vpop.f32.mrb[0].mxu0
        %924 = vdwg.mxu0
        %v925 = vsel %vm878, %v920, -inf
        %926 = vmax.xlane.f32.xlu0 %v925
        %v927 = vpop.xlane.xlu0 %926
        %v928 = vsub.f32 %v920, %v927
        %v929 = vmul.f32 %v928, 1.442695
        %v930 = vpow.pop %v929
        %v931 = vsel %vm878, %v930, 0.0
        %932 = vadd.xlane.f32.xlu0 %v931
        %v933 = vpop.xlane.xlu0 %932
        %v934 = vrcp.pop %v933
        %v935 = vmul.f32 %v930, %v934
        %v936 = vpack.c.bf16 %v935, %v935
        %937 = vrot.lane.b32.xlu0 %v874, 64
        %v938 = vpop.permute.xlu0 %937
        %v940 = vsel %vm878, %v936, 0
        %vm942 = vcmask 1043456
        %v944 = vsel %vm942, %v938, 0
        %946 = vmatprep.subr.bf16.mxu0 0
        %947 = vmatpush1.bf16.msra.mxu0 %v944
        %948 = vmatprep.subr.bf16.mxu0 0
        %949 = vmatpush1.bf16.msra.mxu0 0
        %950 = vmatprep.subr.bf16.mxu0 0
        %951 = vmatpush1.bf16.msra.mxu0 0
        %952 = vmatprep.subr.bf16.mxu0 0
        %953 = vmatpush1.bf16.msra.mxu0 0
        %954 = vmatprep.subr.bf16.mxu0 0
        %955 = vmatpush1.bf16.msra.mxu0 0
        %956 = vmatprep.subr.bf16.mxu0 0
        %957 = vmatpush1.bf16.msra.mxu0 0
        %958 = vmatprep.subr.bf16.mxu0 0
        %959 = vmatpush1.bf16.msra.mxu0 0
        %960 = vmatprep.subr.bf16.mxu0 0
        %961 = vmatpush1.bf16.msra.mxu0 0
        %962 = vmatprep.subr.bf16.mxu0 0
        %963 = vmatpush1.bf16.msra.mxu0 0
        %964 = vmatprep.subr.bf16.mxu0 0
        %965 = vmatpush1.bf16.msra.mxu0 0
        %966 = vmatprep.subr.bf16.mxu0 0
        %967 = vmatpush1.bf16.msra.mxu0 0
        %968 = vmatprep.subr.bf16.mxu0 0
        %969 = vmatpush1.bf16.msra.mxu0 0
        %970 = vmatprep.subr.bf16.mxu0 0
        %971 = vmatpush1.bf16.msra.mxu0 0
        %972 = vmatprep.subr.bf16.mxu0 0
        %973 = vmatpush1.bf16.msra.mxu0 0
        %974 = vmatprep.subr.bf16.mxu0 0
        %975 = vmatpush1.bf16.msra.mxu0 0
        %976 = vmatprep.subr.bf16.mxu0 0
        %977 = vmatpush1.bf16.msra.mxu0 0
        %978 = vmatprep.mubr.bf16.mxu0 0
        %979 = vmatmul.mubr.bf16.gmra.mrb[0].mxu0 %v940
        %v980 = vpop.f32.mrb[0].mxu0
        %v981 = vadd.f32 0.0, %v980
        %v982 = vpop.f32.mrb[0].mxu0
        %v983 = vpop.f32.mrb[0].mxu0
        %v984 = vpop.f32.mrb[0].mxu0
        %985 = vdwg.mxu0
        %986 = vrot.lane.b32.xlu0 %v874, 120
        %v987 = vpop.permute.xlu0 %986
        %988 = vrot.lane.b32.xlu0 %v874, 88
        %v989 = vpop.permute.xlu0 %988
        %v991 = vsel %vm878, %v987, 0
        %v994 = vsel %vm878, %v989, 0
        %996 = vmatprep.subr.bf16.mxu0 0
        %997 = vmatpush1.bf16.xpose.msra.mxu0 %v994
        %998 = vmatprep.subr.bf16.mxu0 0
        %999 = vmatpush1.bf16.xpose.msra.mxu0 0
        %1000 = vmatprep.subr.bf16.mxu0 0
        %1001 = vmatpush1.bf16.xpose.msra.mxu0 0
        %1002 = vmatprep.subr.bf16.mxu0 0
        %1003 = vmatpush1.bf16.xpose.msra.mxu0 0
        %1004 = vmatprep.subr.bf16.mxu0 0
        %1005 = vmatpush1.bf16.xpose.msra.mxu0 0
        %1006 = vmatprep.subr.bf16.mxu0 0
        %1007 = vmatpush1.bf16.xpose.msra.mxu0 0
        %1008 = vmatprep.subr.bf16.mxu0 0
        %1009 = vmatpush1.bf16.xpose.msra.mxu0 0
        %1010 = vmatprep.subr.bf16.mxu0 0
        %1011 = vmatpush1.bf16.xpose.msra.mxu0 0
        %1012 = vmatprep.subr.bf16.mxu0 0
        %1013 = vmatpush1.bf16.xpose.msra.mxu0 0
        %1014 = vmatprep.subr.bf16.mxu0 0
        %1015 = vmatpush1.bf16.xpose.msra.mxu0 0
        %1016 = vmatprep.subr.bf16.mxu0 0
        %1017 = vmatpush1.bf16.xpose.msra.mxu0 0
        %1018 = vmatprep.subr.bf16.mxu0 0
        %1019 = vmatpush1.bf16.xpose.msra.mxu0 0
        %1020 = vmatprep.subr.bf16.mxu0 0
        %1021 = vmatpush1.bf16.xpose.msra.mxu0 0
        %1022 = vmatprep.subr.bf16.mxu0 0
        %1023 = vmatpush1.bf16.xpose.msra.mxu0 0
        %1024 = vmatprep.subr.bf16.mxu0 0
        %1025 = vmatpush1.bf16.xpose.msra.mxu0 0
        %1026 = vmatprep.subr.bf16.mxu0 0
        %1027 = vmatpush1.bf16.xpose.msra.mxu0 0
        %1028 = vmatprep.mubr.bf16.mxu0 0
        %1029 = vmatmul.mubr.bf16.gmra.mrb[0].mxu0 %v991
        %v1030 = vpop.f32.mrb[0].mxu0
        %v1031 = vadd.f32 %v797, %v1030
        %v1032 = vpop.f32.mrb[0].mxu0
        %v1033 = vpop.f32.mrb[0].mxu0
        %v1034 = vpop.f32.mrb[0].mxu0
        %1035 = vdwg.mxu0
        %v1036 = vsel %vm878, %v1031, -inf
        %1037 = vmax.xlane.f32.xlu0 %v1036
        %v1038 = vpop.xlane.xlu0 %1037
        %v1039 = vsub.f32 %v1031, %v1038
        %v1040 = vmul.f32 %v1039, 1.442695
        %v1041 = vpow.pop %v1040
        %v1042 = vsel %vm878, %v1041, 0.0
        %1043 = vadd.xlane.f32.xlu0 %v1042
        %v1044 = vpop.xlane.xlu0 %1043
        %v1045 = vrcp.pop %v1044
        %v1046 = vmul.f32 %v1041, %v1045
        %v1047 = vpack.c.bf16 %v1046, %v1046
        %1048 = vrot.lane.b32.xlu0 %v874, 56
        %v1049 = vpop.permute.xlu0 %1048
        %v1051 = vsel %vm878, %v1047, 0
        %v1054 = vsel %vm942, %v1049, 0
        %1056 = vmatprep.subr.bf16.mxu0 0
        %1057 = vmatpush1.bf16.msra.mxu0 %v1054
        %1058 = vmatprep.subr.bf16.mxu0 0
        %1059 = vmatpush1.bf16.msra.mxu0 0
        %1060 = vmatprep.subr.bf16.mxu0 0
        %1061 = vmatpush1.bf16.msra.mxu0 0
        %1062 = vmatprep.subr.bf16.mxu0 0
        %1063 = vmatpush1.bf16.msra.mxu0 0
        %1064 = vmatprep.subr.bf16.mxu0 0
        %1065 = vmatpush1.bf16.msra.mxu0 0
        %1066 = vmatprep.subr.bf16.mxu0 0
        %1067 = vmatpush1.bf16.msra.mxu0 0
        %1068 = vmatprep.subr.bf16.mxu0 0
        %1069 = vmatpush1.bf16.msra.mxu0 0
        %1070 = vmatprep.subr.bf16.mxu0 0
        %1071 = vmatpush1.bf16.msra.mxu0 0
        %1072 = vmatprep.subr.bf16.mxu0 0
        %1073 = vmatpush1.bf16.msra.mxu0 0
        %1074 = vmatprep.subr.bf16.mxu0 0
        %1075 = vmatpush1.bf16.msra.mxu0 0
        %1076 = vmatprep.subr.bf16.mxu0 0
        %1077 = vmatpush1.bf16.msra.mxu0 0
        %1078 = vmatprep.subr.bf16.mxu0 0
        %1079 = vmatpush1.bf16.msra.mxu0 0
        %1080 = vmatprep.subr.bf16.mxu0 0
        %1081 = vmatpush1.bf16.msra.mxu0 0
        %1082 = vmatprep.subr.bf16.mxu0 0
        %1083 = vmatpush1.bf16.msra.mxu0 0
        %1084 = vmatprep.subr.bf16.mxu0 0
        %1085 = vmatpush1.bf16.msra.mxu0 0
        %1086 = vmatprep.subr.bf16.mxu0 0
        %1087 = vmatpush1.bf16.msra.mxu0 0
        %1088 = vmatprep.mubr.bf16.mxu0 0
        %1089 = vmatmul.mubr.bf16.gmra.mrb[0].mxu0 %v1051
        %v1090 = vpop.f32.mrb[0].mxu0
        %v1091 = vadd.f32 0.0, %v1090
        %v1092 = vpop.f32.mrb[0].mxu0
        %v1093 = vpop.f32.mrb[0].mxu0
        %v1094 = vpop.f32.mrb[0].mxu0
        %1095 = vdwg.mxu0
        %1096 = vrot.lane.b32.xlu0 %v874, 112
        %v1097 = vpop.permute.xlu0 %1096
        %1098 = vrot.lane.b32.xlu0 %v874, 80
        %v1099 = vpop.permute.xlu0 %1098
        %v1101 = vsel %vm878, %v1097, 0
        %v1104 = vsel %vm878, %v1099, 0
        %1106 = vmatprep.subr.bf16.mxu0 0
        %1107 = vmatpush1.bf16.xpose.msra.mxu0 %v1104
        %1108 = vmatprep.subr.bf16.mxu0 0
        %1109 = vmatpush1.bf16.xpose.msra.mxu0 0
        %1110 = vmatprep.subr.bf16.mxu0 0
        %1111 = vmatpush1.bf16.xpose.msra.mxu0 0
        %1112 = vmatprep.subr.bf16.mxu0 0
        %1113 = vmatpush1.bf16.xpose.msra.mxu0 0
        %1114 = vmatprep.subr.bf16.mxu0 0
        %1115 = vmatpush1.bf16.xpose.msra.mxu0 0
        %1116 = vmatprep.subr.bf16.mxu0 0
        %1117 = vmatpush1.bf16.xpose.msra.mxu0 0
        %1118 = vmatprep.subr.bf16.mxu0 0
        %1119 = vmatpush1.bf16.xpose.msra.mxu0 0
        %1120 = vmatprep.subr.bf16.mxu0 0
        %1121 = vmatpush1.bf16.xpose.msra.mxu0 0
        %1122 = vmatprep.subr.bf16.mxu0 0
        %1123 = vmatpush1.bf16.xpose.msra.mxu0 0
        %1124 = vmatprep.subr.bf16.mxu0 0
        %1125 = vmatpush1.bf16.xpose.msra.mxu0 0
        %1126 = vmatprep.subr.bf16.mxu0 0
        %1127 = vmatpush1.bf16.xpose.msra.mxu0 0
        %1128 = vmatprep.subr.bf16.mxu0 0
        %1129 = vmatpush1.bf16.xpose.msra.mxu0 0
        %1130 = vmatprep.subr.bf16.mxu0 0
        %1131 = vmatpush1.bf16.xpose.msra.mxu0 0
        %1132 = vmatprep.subr.bf16.mxu0 0
        %1133 = vmatpush1.bf16.xpose.msra.mxu0 0
        %1134 = vmatprep.subr.bf16.mxu0 0
        %1135 = vmatpush1.bf16.xpose.msra.mxu0 0
        %1136 = vmatprep.subr.bf16.mxu0 0
        %1137 = vmatpush1.bf16.xpose.msra.mxu0 0
        %1138 = vmatprep.mubr.bf16.mxu0 0
        %1139 = vmatmul.mubr.bf16.gmra.mrb[0].mxu0 %v1101
        %v1140 = vpop.f32.mrb[0].mxu0
        %v1141 = vadd.f32 %v797, %v1140
        %v1142 = vpop.f32.mrb[0].mxu0
        %v1143 = vpop.f32.mrb[0].mxu0
        %v1144 = vpop.f32.mrb[0].mxu0
        %1145 = vdwg.mxu0
        %v1146 = vsel %vm878, %v1141, -inf
        %1147 = vmax.xlane.f32.xlu0 %v1146
        %v1148 = vpop.xlane.xlu0 %1147
        %v1149 = vsub.f32 %v1141, %v1148
        %v1150 = vmul.f32 %v1149, 1.442695
        %v1151 = vpow.pop %v1150
        %v1152 = vsel %vm878, %v1151, 0.0
        %1153 = vadd.xlane.f32.xlu0 %v1152
        %v1154 = vpop.xlane.xlu0 %1153
        %v1155 = vrcp.pop %v1154
        %v1156 = vmul.f32 %v1151, %v1155
        %v1157 = vpack.c.bf16 %v1156, %v1156
        %1158 = vrot.lane.b32.xlu0 %v874, 48
        %v1159 = vpop.permute.xlu0 %1158
        %v1161 = vsel %vm878, %v1157, 0
        %v1164 = vsel %vm942, %v1159, 0
        %1166 = vmatprep.subr.bf16.mxu0 0
        %1167 = vmatpush1.bf16.msra.mxu0 %v1164
        %1168 = vmatprep.subr.bf16.mxu0 0
        %1169 = vmatpush1.bf16.msra.mxu0 0
        %1170 = vmatprep.subr.bf16.mxu0 0
        %1171 = vmatpush1.bf16.msra.mxu0 0
        %1172 = vmatprep.subr.bf16.mxu0 0
        %1173 = vmatpush1.bf16.msra.mxu0 0
        %1174 = vmatprep.subr.bf16.mxu0 0
        %1175 = vmatpush1.bf16.msra.mxu0 0
        %1176 = vmatprep.subr.bf16.mxu0 0
        %1177 = vmatpush1.bf16.msra.mxu0 0
        %1178 = vmatprep.subr.bf16.mxu0 0
        %1179 = vmatpush1.bf16.msra.mxu0 0
        %1180 = vmatprep.subr.bf16.mxu0 0
        %1181 = vmatpush1.bf16.msra.mxu0 0
        %1182 = vmatprep.subr.bf16.mxu0 0
        %1183 = vmatpush1.bf16.msra.mxu0 0
        %1184 = vmatprep.subr.bf16.mxu0 0
        %1185 = vmatpush1.bf16.msra.mxu0 0
        %1186 = vmatprep.subr.bf16.mxu0 0
        %1187 = vmatpush1.bf16.msra.mxu0 0
        %1188 = vmatprep.subr.bf16.mxu0 0
        %1189 = vmatpush1.bf16.msra.mxu0 0
        %1190 = vmatprep.subr.bf16.mxu0 0
        %1191 = vmatpush1.bf16.msra.mxu0 0
        %1192 = vmatprep.subr.bf16.mxu0 0
        %1193 = vmatpush1.bf16.msra.mxu0 0
        %1194 = vmatprep.subr.bf16.mxu0 0
        %1195 = vmatpush1.bf16.msra.mxu0 0
        %1196 = vmatprep.subr.bf16.mxu0 0
        %1197 = vmatpush1.bf16.msra.mxu0 0
        %1198 = vmatprep.mubr.bf16.mxu0 0
        %1199 = vmatmul.mubr.bf16.gmra.mrb[0].mxu0 %v1161
        %v1200 = vpop.f32.mrb[0].mxu0
        %v1201 = vadd.f32 0.0, %v1200
        %v1202 = vpop.f32.mrb[0].mxu0
        %v1203 = vpop.f32.mrb[0].mxu0
        %v1204 = vpop.f32.mrb[0].mxu0
        %1205 = vdwg.mxu0
        %1206 = vrot.lane.b32.xlu0 %v874, 104
        %v1207 = vpop.permute.xlu0 %1206
        %1208 = vrot.lane.b32.xlu0 %v874, 72
        %v1209 = vpop.permute.xlu0 %1208
        %v1211 = vsel %vm878, %v1207, 0
        %v1214 = vsel %vm878, %v1209, 0
        %1216 = vmatprep.subr.bf16.mxu0 0
        %1217 = vmatpush1.bf16.xpose.msra.mxu0 %v1214
        %1218 = vmatprep.subr.bf16.mxu0 0
        %1219 = vmatpush1.bf16.xpose.msra.mxu0 0
        %1220 = vmatprep.subr.bf16.mxu0 0
        %1221 = vmatpush1.bf16.xpose.msra.mxu0 0
        %1222 = vmatprep.subr.bf16.mxu0 0
        %1223 = vmatpush1.bf16.xpose.msra.mxu0 0
        %1224 = vmatprep.subr.bf16.mxu0 0
        %1225 = vmatpush1.bf16.xpose.msra.mxu0 0
        %1226 = vmatprep.subr.bf16.mxu0 0
        %1227 = vmatpush1.bf16.xpose.msra.mxu0 0
        %1228 = vmatprep.subr.bf16.mxu0 0
        %1229 = vmatpush1.bf16.xpose.msra.mxu0 0
        %1230 = vmatprep.subr.bf16.mxu0 0
        %1231 = vmatpush1.bf16.xpose.msra.mxu0 0
        %1232 = vmatprep.subr.bf16.mxu0 0
        %1233 = vmatpush1.bf16.xpose.msra.mxu0 0
        %1234 = vmatprep.subr.bf16.mxu0 0
        %1235 = vmatpush1.bf16.xpose.msra.mxu0 0
        %1236 = vmatprep.subr.bf16.mxu0 0
        %1237 = vmatpush1.bf16.xpose.msra.mxu0 0
        %1238 = vmatprep.subr.bf16.mxu0 0
        %1239 = vmatpush1.bf16.xpose.msra.mxu0 0
        %1240 = vmatprep.subr.bf16.mxu0 0
        %1241 = vmatpush1.bf16.xpose.msra.mxu0 0
        %1242 = vmatprep.subr.bf16.mxu0 0
        %1243 = vmatpush1.bf16.xpose.msra.mxu0 0
        %1244 = vmatprep.subr.bf16.mxu0 0
        %1245 = vmatpush1.bf16.xpose.msra.mxu0 0
        %1246 = vmatprep.subr.bf16.mxu0 0
        %1247 = vmatpush1.bf16.xpose.msra.mxu0 0
        %1248 = vmatprep.mubr.bf16.mxu0 0
        %1249 = vmatmul.mubr.bf16.gmra.mrb[0].mxu0 %v1211
        %v1250 = vpop.f32.mrb[0].mxu0
        %v1251 = vadd.f32 %v797, %v1250
        %v1252 = vpop.f32.mrb[0].mxu0
        %v1253 = vpop.f32.mrb[0].mxu0
        %v1254 = vpop.f32.mrb[0].mxu0
        %1255 = vdwg.mxu0
        %v1256 = vsel %vm878, %v1251, -inf
        %1257 = vmax.xlane.f32.xlu0 %v1256
        %v1258 = vpop.xlane.xlu0 %1257
        %v1259 = vsub.f32 %v1251, %v1258
        %v1260 = vmul.f32 %v1259, 1.442695
        %v1261 = vpow.pop %v1260
        %v1262 = vsel %vm878, %v1261, 0.0
        %1263 = vadd.xlane.f32.xlu0 %v1262
        %v1264 = vpop.xlane.xlu0 %1263
        %v1265 = vrcp.pop %v1264
        %v1266 = vmul.f32 %v1261, %v1265
        %v1267 = vpack.c.bf16 %v1266, %v1266
        %1268 = vrot.lane.b32.xlu0 %v874, 40
        %v1269 = vpop.permute.xlu0 %1268
        %v1271 = vsel %vm878, %v1267, 0
        %v1274 = vsel %vm942, %v1269, 0
        %1276 = vmatprep.subr.bf16.mxu0 0
        %1277 = vmatpush1.bf16.msra.mxu0 %v1274
        %1278 = vmatprep.subr.bf16.mxu0 0
        %1279 = vmatpush1.bf16.msra.mxu0 0
        %1280 = vmatprep.subr.bf16.mxu0 0
        %1281 = vmatpush1.bf16.msra.mxu0 0
        %1282 = vmatprep.subr.bf16.mxu0 0
        %1283 = vmatpush1.bf16.msra.mxu0 0
        %1284 = vmatprep.subr.bf16.mxu0 0
        %1285 = vmatpush1.bf16.msra.mxu0 0
        %1286 = vmatprep.subr.bf16.mxu0 0
        %1287 = vmatpush1.bf16.msra.mxu0 0
        %1288 = vmatprep.subr.bf16.mxu0 0
        %1289 = vmatpush1.bf16.msra.mxu0 0
        %1290 = vmatprep.subr.bf16.mxu0 0
        %1291 = vmatpush1.bf16.msra.mxu0 0
        %1292 = vmatprep.subr.bf16.mxu0 0
        %1293 = vmatpush1.bf16.msra.mxu0 0
        %1294 = vmatprep.subr.bf16.mxu0 0
        %1295 = vmatpush1.bf16.msra.mxu0 0
        %1296 = vmatprep.subr.bf16.mxu0 0
        %1297 = vmatpush1.bf16.msra.mxu0 0
        %1298 = vmatprep.subr.bf16.mxu0 0
        %1299 = vmatpush1.bf16.msra.mxu0 0
        %1300 = vmatprep.subr.bf16.mxu0 0
        %1301 = vmatpush1.bf16.msra.mxu0 0
        %1302 = vmatprep.subr.bf16.mxu0 0
        %1303 = vmatpush1.bf16.msra.mxu0 0
        %1304 = vmatprep.subr.bf16.mxu0 0
        %1305 = vmatpush1.bf16.msra.mxu0 0
        %1306 = vmatprep.subr.bf16.mxu0 0
        %1307 = vmatpush1.bf16.msra.mxu0 0
        %1308 = vmatprep.mubr.bf16.mxu0 0
        %1309 = vmatmul.mubr.bf16.gmra.mrb[0].mxu0 %v1271
        %v1310 = vpop.f32.mrb[0].mxu0
        %v1311 = vadd.f32 0.0, %v1310
        %v1312 = vpop.f32.mrb[0].mxu0
        %v1313 = vpop.f32.mrb[0].mxu0
        %v1314 = vpop.f32.mrb[0].mxu0
        %1315 = vdwg.mxu0
        %1317 = vrot.lane.b32.xlu0 %v1091, 8
        %v1318 = vpop.permute.xlu0 %1317
        %1321 = vrot.lane.b32.xlu0 %v1201, 16
        %v1322 = vpop.permute.xlu0 %1321
        %1325 = vrot.lane.b32.xlu0 %v1311, 24
        %v1326 = vpop.permute.xlu0 %1325
        %v1328 = vsel %vm878, %v981, %v1318
        %vm1329 = vcmask 130048
        %v1330 = vsel %vm1329, %v1328, %v1322
        %vm1331 = vcmask 195584
        %v1332 = vsel %vm1331, %v1330, %v1326
        %v1333 = vpack.c.bf16 %v1332, %v1332
        %v1335 = vlaneseq
        %v1336 = vshrl.u32 %v1335, 7
        %v1337 = vsub.s32 0, %v1336
        %v1338 = vrot.slane %v873, %v1337
        %v1344 = vunpack.c.l.b16 %v869
        %v1345 = vunpack.c.l.b16 %v870
        %v1346 = vunpack.c.l.b16 %v871
        %v1347 = vunpack.c.l.b16 %v872
        %v1348 = vpack.c.b16 %v1345, %v1344
        %v1349 = vpack.c.b16 %v1347, %v1346
        %v1353 = vsel %vm825, %v1333, 0
        %1355 = vmatprep.subr.bf16.mxu0 0
        %1356 = vmatpush1.bf16.msra.mxu0 %v1348
        %1357 = vmatprep.subr.bf16.mxu0 0
        %1358 = vmatpush1.bf16.msra.mxu0 %v1349
        %1359 = vmatprep.subr.bf16.mxu0 0
        %1360 = vmatpush1.bf16.msra.mxu0 0
        %1361 = vmatprep.subr.bf16.mxu0 0
        %1362 = vmatpush1.bf16.msra.mxu0 0
        %1363 = vmatprep.subr.bf16.mxu0 0
        %1364 = vmatpush1.bf16.msra.mxu0 0
        %1365 = vmatprep.subr.bf16.mxu0 0
        %1366 = vmatpush1.bf16.msra.mxu0 0
        %1367 = vmatprep.subr.bf16.mxu0 0
        %1368 = vmatpush1.bf16.msra.mxu0 0
        %1369 = vmatprep.subr.bf16.mxu0 0
        %1370 = vmatpush1.bf16.msra.mxu0 0
        %1371 = vmatprep.subr.bf16.mxu0 0
        %1372 = vmatpush1.bf16.msra.mxu0 0
        %1373 = vmatprep.subr.bf16.mxu0 0
        %1374 = vmatpush1.bf16.msra.mxu0 0
        %1375 = vmatprep.subr.bf16.mxu0 0
        %1376 = vmatpush1.bf16.msra.mxu0 0
        %1377 = vmatprep.subr.bf16.mxu0 0
        %1378 = vmatpush1.bf16.msra.mxu0 0
        %1379 = vmatprep.subr.bf16.mxu0 0
        %1380 = vmatpush1.bf16.msra.mxu0 0
        %1381 = vmatprep.subr.bf16.mxu0 0
        %1382 = vmatpush1.bf16.msra.mxu0 0
        %1383 = vmatprep.subr.bf16.mxu0 0
        %1384 = vmatpush1.bf16.msra.mxu0 0
        %1385 = vmatprep.subr.bf16.mxu0 0
        %1386 = vmatpush1.bf16.msra.mxu0 0
        %1387 = vmatprep.mubr.bf16.mxu0 0
        %1388 = vmatmul.mubr.bf16.gmra.mrb[0].mxu0 %v1353
        %v1389 = vpop.f32.mrb[0].mxu0
        %v1390 = vadd.f32 %v1338, %v1389
        %v1391 = vpop.f32.mrb[0].mxu0
        %v1392 = vpop.f32.mrb[0].mxu0
        %v1393 = vpop.f32.mrb[0].mxu0
        %1394 = vdwg.mxu0
        %v1395 = vadd.f32 %v782, %v1390
        %v1396 = vld [vmem:[%s8] sm:$0x1]
        %v1397 = vld [vmem:[%s9] sm:$0x1]
        %v1398 = vsel %vm825, %v1395, 0.0
        %1399 = vadd.xlane.f32.xlu0 %v1398
        %v1400 = vpop.xlane.xlu0 %1399
        %v1401 = vrcp.pop 32.0
        %v1402 = vmul.f32 %v1400, %v1401
        %v1403 = vsub.f32 %v1395, %v1402
        %v1404 = vmul.f32 %v1403, %v1403
        %v1405 = vsel %vm825, %v1404, 0.0
        %1406 = vadd.xlane.f32.xlu0 %v1405
        %v1407 = vpop.xlane.xlu0 %1406
        %v1408 = vmul.f32 %v1407, %v1401
        %v1409 = vadd.f32 %v1408, 1e-05
        %v1410 = vrsqrt.pop %v1409
        %v1411 = vmul.f32 %v1403, %v1410
        %v1413 = vlaneseq
        %v1414 = vshrl.u32 %v1413, 7
        %v1415 = vsub.s32 0, %v1414
        %v1416 = vrot.slane %v1396, %v1415
        %v1418 = vmul.f32 %v1411, %v1416
        %v1420 = vlaneseq
        %v1421 = vshrl.u32 %v1420, 7
        %v1422 = vsub.s32 0, %v1421
        %v1423 = vrot.slane %v1397, %v1422
        %v1425 = vadd.f32 %v1418, %v1423
        %v1426 = vpack.c.bf16 %v1425, %v1425
        %v1427 = vld [vmem:[%s10] sm:$0xf]
        %v1428 = vld [vmem:[%s10 + $0x4] sm:$0xf]
        %v1429 = vld [vmem:[%s10 + $0x8] sm:$0xf]
        %v1430 = vld [vmem:[%s10 + $0xc] sm:$0xf]
        %v1431 = vld [vmem:[%s11] sm:$0x1]
        %v1433 = vlaneseq
        %v1434 = vshrl.u32 %v1433, 7
        %v1435 = vsub.s32 0, %v1434
        %v1436 = vrot.slane %v1431, %v1435
        %v1442 = vunpack.c.l.b16 %v1427
        %v1443 = vunpack.c.l.b16 %v1428
        %v1444 = vunpack.c.l.b16 %v1429
        %v1445 = vunpack.c.l.b16 %v1430
        %v1446 = vpack.c.b16 %v1443, %v1442
        %v1447 = vpack.c.b16 %v1445, %v1444
        %v1451 = vsel %vm825, %v1426, 0
        %1453 = vmatprep.subr.bf16.mxu0 0
        %1454 = vmatpush1.bf16.msra.mxu0 %v1446
        %1455 = vmatprep.subr.bf16.mxu0 0
        %1456 = vmatpush1.bf16.msra.mxu0 %v1447
        %1457 = vmatprep.subr.bf16.mxu0 0
        %1458 = vmatpush1.bf16.msra.mxu0 0
        %1459 = vmatprep.subr.bf16.mxu0 0
        %1460 = vmatpush1.bf16.msra.mxu0 0
        %1461 = vmatprep.subr.bf16.mxu0 0
        %1462 = vmatpush1.bf16.msra.mxu0 0
        %1463 = vmatprep.subr.bf16.mxu0 0
        %1464 = vmatpush1.bf16.msra.mxu0 0
        %1465 = vmatprep.subr.bf16.mxu0 0
        %1466 = vmatpush1.bf16.msra.mxu0 0
        %1467 = vmatprep.subr.bf16.mxu0 0
        %1468 = vmatpush1.bf16.msra.mxu0 0
        %1469 = vmatprep.subr.bf16.mxu0 0
        %1470 = vmatpush1.bf16.msra.mxu0 0
        %1471 = vmatprep.subr.bf16.mxu0 0
        %1472 = vmatpush1.bf16.msra.mxu0 0
        %1473 = vmatprep.subr.bf16.mxu0 0
        %1474 = vmatpush1.bf16.msra.mxu0 0
        %1475 = vmatprep.subr.bf16.mxu0 0
        %1476 = vmatpush1.bf16.msra.mxu0 0
        %1477 = vmatprep.subr.bf16.mxu0 0
        %1478 = vmatpush1.bf16.msra.mxu0 0
        %1479 = vmatprep.subr.bf16.mxu0 0
        %1480 = vmatpush1.bf16.msra.mxu0 0
        %1481 = vmatprep.subr.bf16.mxu0 0
        %1482 = vmatpush1.bf16.msra.mxu0 0
        %1483 = vmatprep.subr.bf16.mxu0 0
        %1484 = vmatpush1.bf16.msra.mxu0 0
        %1485 = vmatprep.mubr.bf16.mxu0 0
        %1486 = vmatmul.mubr.bf16.gmra.mrb[0].mxu0 %v1451
        %v1487 = vpop.f32.mrb[0].mxu0
        %v1488 = vadd.f32 %v1436, %v1487
        %v1489 = vpop.f32.mrb[0].mxu0
        %v1490 = vpop.f32.mrb[0].mxu0
        %v1491 = vpop.f32.mrb[0].mxu0
        %1492 = vdwg.mxu0
        %v1493 = vpack.c.bf16 %v783, %v783
        %v1494 = vld [vmem:[%s12] sm:$0xf]
        %v1495 = vld [vmem:[%s12 + $0x4] sm:$0xf]
        %v1496 = vld [vmem:[%s12 + $0x8] sm:$0xf]
        %v1497 = vld [vmem:[%s12 + $0xc] sm:$0xf]
        %v1498 = vld [vmem:[%s13] sm:$0x1]
        %v1500 = vlaneseq
        %v1501 = vshrl.u32 %v1500, 7
        %v1502 = vsub.s32 0, %v1501
        %v1503 = vrot.slane %v1498, %v1502
        %v1509 = vunpack.c.l.b16 %v1494
        %v1510 = vunpack.c.l.b16 %v1495
        %v1511 = vunpack.c.l.b16 %v1496
        %v1512 = vunpack.c.l.b16 %v1497
        %v1513 = vpack.c.b16 %v1510, %v1509
        %v1514 = vpack.c.b16 %v1512, %v1511
        %v1518 = vsel %vm825, %v1493, 0
        %1520 = vmatprep.subr.bf16.mxu0 0
        %1521 = vmatpush1.bf16.msra.mxu0 %v1513
        %1522 = vmatprep.subr.bf16.mxu0 0
        %1523 = vmatpush1.bf16.msra.mxu0 %v1514
        %1524 = vmatprep.subr.bf16.mxu0 0
        %1525 = vmatpush1.bf16.msra.mxu0 0
        %1526 = vmatprep.subr.bf16.mxu0 0
        %1527 = vmatpush1.bf16.msra.mxu0 0
        %1528 = vmatprep.subr.bf16.mxu0 0
        %1529 = vmatpush1.bf16.msra.mxu0 0
        %1530 = vmatprep.subr.bf16.mxu0 0
        %1531 = vmatpush1.bf16.msra.mxu0 0
        %1532 = vmatprep.subr.bf16.mxu0 0
        %1533 = vmatpush1.bf16.msra.mxu0 0
        %1534 = vmatprep.subr.bf16.mxu0 0
        %1535 = vmatpush1.bf16.msra.mxu0 0
        %1536 = vmatprep.subr.bf16.mxu0 0
        %1537 = vmatpush1.bf16.msra.mxu0 0
        %1538 = vmatprep.subr.bf16.mxu0 0
        %1539 = vmatpush1.bf16.msra.mxu0 0
        %1540 = vmatprep.subr.bf16.mxu0 0
        %1541 = vmatpush1.bf16.msra.mxu0 0
        %1542 = vmatprep.subr.bf16.mxu0 0
        %1543 = vmatpush1.bf16.msra.mxu0 0
        %1544 = vmatprep.subr.bf16.mxu0 0
        %1545 = vmatpush1.bf16.msra.mxu0 0
        %1546 = vmatprep.subr.bf16.mxu0 0
        %1547 = vmatpush1.bf16.msra.mxu0 0
        %1548 = vmatprep.subr.bf16.mxu0 0
        %1549 = vmatpush1.bf16.msra.mxu0 0
        %1550 = vmatprep.subr.bf16.mxu0 0
        %1551 = vmatpush1.bf16.msra.mxu0 0
        %1552 = vmatprep.mubr.bf16.mxu0 0
        %1553 = vmatmul.mubr.bf16.gmra.mrb[0].mxu0 %v1518
        %v1554 = vpop.f32.mrb[0].mxu0
        %v1555 = vadd.f32 %v1503, %v1554
        %v1556 = vpop.f32.mrb[0].mxu0
        %v1557 = vpop.f32.mrb[0].mxu0
        %v1558 = vpop.f32.mrb[0].mxu0
        %1559 = vdwg.mxu0
        %v1560 = vld [vmem:[%s14] sm:$0xf]
        %v1561 = vld [vmem:[%s14 + $0x4] sm:$0xf]
        %v1562 = vld [vmem:[%s14 + $0x8] sm:$0xf]
        %v1563 = vld [vmem:[%s14 + $0xc] sm:$0xf]
        %v1564 = vld [vmem:[%s15] sm:$0x1]
        %v1565 = vpack.c.bf16 %v1488, %v1488
        %v1566 = vpack.c.bf16 %v1555, %v1555
        %v1568 = vlaneseq
        %v1569 = vshrl.u32 %v1568, 7
        %v1570 = vsub.s32 0, %v1569
        %v1571 = vrot.slane %v800, %v1570
        %v1574 = vsel %vm878, %v1565, 0
        %v1577 = vsel %vm878, %v1566, 0
        %1579 = vmatprep.subr.bf16.mxu0 0
        %1580 = vmatpush1.bf16.xpose.msra.mxu0 %v1577
        %1581 = vmatprep.subr.bf16.mxu0 0
        %1582 = vmatpush1.bf16.xpose.msra.mxu0 0
        %1583 = vmatprep.subr.bf16.mxu0 0
        %1584 = vmatpush1.bf16.xpose.msra.mxu0 0
        %1585 = vmatprep.subr.bf16.mxu0 0
        %1586 = vmatpush1.bf16.xpose.msra.mxu0 0
        %1587 = vmatprep.subr.bf16.mxu0 0
        %1588 = vmatpush1.bf16.xpose.msra.mxu0 0
        %1589 = vmatprep.subr.bf16.mxu0 0
        %1590 = vmatpush1.bf16.xpose.msra.mxu0 0
        %1591 = vmatprep.subr.bf16.mxu0 0
        %1592 = vmatpush1.bf16.xpose.msra.mxu0 0
        %1593 = vmatprep.subr.bf16.mxu0 0
        %1594 = vmatpush1.bf16.xpose.msra.mxu0 0
        %1595 = vmatprep.subr.bf16.mxu0 0
        %1596 = vmatpush1.bf16.xpose.msra.mxu0 0
        %1597 = vmatprep.subr.bf16.mxu0 0
        %1598 = vmatpush1.bf16.xpose.msra.mxu0 0
        %1599 = vmatprep.subr.bf16.mxu0 0
        %1600 = vmatpush1.bf16.xpose.msra.mxu0 0
        %1601 = vmatprep.subr.bf16.mxu0 0
        %1602 = vmatpush1.bf16.xpose.msra.mxu0 0
        %1603 = vmatprep.subr.bf16.mxu0 0
        %1604 = vmatpush1.bf16.xpose.msra.mxu0 0
        %1605 = vmatprep.subr.bf16.mxu0 0
        %1606 = vmatpush1.bf16.xpose.msra.mxu0 0
        %1607 = vmatprep.subr.bf16.mxu0 0
        %1608 = vmatpush1.bf16.xpose.msra.mxu0 0
        %1609 = vmatprep.subr.bf16.mxu0 0
        %1610 = vmatpush1.bf16.xpose.msra.mxu0 0
        %1611 = vmatprep.mubr.bf16.mxu0 0
        %1612 = vmatmul.mubr.bf16.gmra.mrb[0].mxu0 %v1574
        %v1613 = vpop.f32.mrb[0].mxu0
        %v1614 = vadd.f32 %v1571, %v1613
        %v1615 = vpop.f32.mrb[0].mxu0
        %v1616 = vpop.f32.mrb[0].mxu0
        %v1617 = vpop.f32.mrb[0].mxu0
        %1618 = vdwg.mxu0
        %v1619 = vsel %vm878, %v1614, -inf
        %1620 = vmax.xlane.f32.xlu0 %v1619
        %v1621 = vpop.xlane.xlu0 %1620
        %v1622 = vsub.f32 %v1614, %v1621
        %v1623 = vmul.f32 %v1622, 1.442695
        %v1624 = vpow.pop %v1623
        %v1625 = vsel %vm878, %v1624, 0.0
        %1626 = vadd.xlane.f32.xlu0 %v1625
        %v1627 = vpop.xlane.xlu0 %1626
        %v1628 = vrcp.pop %v1627
        %v1629 = vmul.f32 %v1624, %v1628
        %v1630 = vpack.c.bf16 %v1629, %v1629
        %1632 = vrot.lane.b32.xlu0 %v1566, 96
        %v1633 = vpop.permute.xlu0 %1632
        %v1635 = vsel %vm878, %v1630, 0
        %v1638 = vsel %vm942, %v1633, 0
        %1640 = vmatprep.subr.bf16.mxu0 0
        %1641 = vmatpush1.bf16.msra.mxu0 %v1638
        %1642 = vmatprep.subr.bf16.mxu0 0
        %1643 = vmatpush1.bf16.msra.mxu0 0
        %1644 = vmatprep.subr.bf16.mxu0 0
        %1645 = vmatpush1.bf16.msra.mxu0 0
        %1646 = vmatprep.subr.bf16.mxu0 0
        %1647 = vmatpush1.bf16.msra.mxu0 0
        %1648 = vmatprep.subr.bf16.mxu0 0
        %1649 = vmatpush1.bf16.msra.mxu0 0
        %1650 = vmatprep.subr.bf16.mxu0 0
        %1651 = vmatpush1.bf16.msra.mxu0 0
        %1652 = vmatprep.subr.bf16.mxu0 0
        %1653 = vmatpush1.bf16.msra.mxu0 0
        %1654 = vmatprep.subr.bf16.mxu0 0
        %1655 = vmatpush1.bf16.msra.mxu0 0
        %1656 = vmatprep.subr.bf16.mxu0 0
        %1657 = vmatpush1.bf16.msra.mxu0 0
        %1658 = vmatprep.subr.bf16.mxu0 0
        %1659 = vmatpush1.bf16.msra.mxu0 0
        %1660 = vmatprep.subr.bf16.mxu0 0
        %1661 = vmatpush1.bf16.msra.mxu0 0
        %1662 = vmatprep.subr.bf16.mxu0 0
        %1663 = vmatpush1.bf16.msra.mxu0 0
        %1664 = vmatprep.subr.bf16.mxu0 0
        %1665 = vmatpush1.bf16.msra.mxu0 0
        %1666 = vmatprep.subr.bf16.mxu0 0
        %1667 = vmatpush1.bf16.msra.mxu0 0
        %1668 = vmatprep.subr.bf16.mxu0 0
        %1669 = vmatpush1.bf16.msra.mxu0 0
        %1670 = vmatprep.subr.bf16.mxu0 0
        %1671 = vmatpush1.bf16.msra.mxu0 0
        %1672 = vmatprep.mubr.bf16.mxu0 0
        %1673 = vmatmul.mubr.bf16.gmra.mrb[0].mxu0 %v1635
        %v1674 = vpop.f32.mrb[0].mxu0
        %v1675 = vadd.f32 0.0, %v1674
        %v1676 = vpop.f32.mrb[0].mxu0
        %v1677 = vpop.f32.mrb[0].mxu0
        %v1678 = vpop.f32.mrb[0].mxu0
        %1679 = vdwg.mxu0
        %1681 = vrot.lane.b32.xlu0 %v1565, 120
        %v1682 = vpop.permute.xlu0 %1681
        %1683 = vrot.lane.b32.xlu0 %v1566, 120
        %v1684 = vpop.permute.xlu0 %1683
        %v1686 = vsel %vm878, %v1682, 0
        %v1689 = vsel %vm878, %v1684, 0
        %1691 = vmatprep.subr.bf16.mxu0 0
        %1692 = vmatpush1.bf16.xpose.msra.mxu0 %v1689
        %1693 = vmatprep.subr.bf16.mxu0 0
        %1694 = vmatpush1.bf16.xpose.msra.mxu0 0
        %1695 = vmatprep.subr.bf16.mxu0 0
        %1696 = vmatpush1.bf16.xpose.msra.mxu0 0
        %1697 = vmatprep.subr.bf16.mxu0 0
        %1698 = vmatpush1.bf16.xpose.msra.mxu0 0
        %1699 = vmatprep.subr.bf16.mxu0 0
        %1700 = vmatpush1.bf16.xpose.msra.mxu0 0
        %1701 = vmatprep.subr.bf16.mxu0 0
        %1702 = vmatpush1.bf16.xpose.msra.mxu0 0
        %1703 = vmatprep.subr.bf16.mxu0 0
        %1704 = vmatpush1.bf16.xpose.msra.mxu0 0
        %1705 = vmatprep.subr.bf16.mxu0 0
        %1706 = vmatpush1.bf16.xpose.msra.mxu0 0
        %1707 = vmatprep.subr.bf16.mxu0 0
        %1708 = vmatpush1.bf16.xpose.msra.mxu0 0
        %1709 = vmatprep.subr.bf16.mxu0 0
        %1710 = vmatpush1.bf16.xpose.msra.mxu0 0
        %1711 = vmatprep.subr.bf16.mxu0 0
        %1712 = vmatpush1.bf16.xpose.msra.mxu0 0
        %1713 = vmatprep.subr.bf16.mxu0 0
        %1714 = vmatpush1.bf16.xpose.msra.mxu0 0
        %1715 = vmatprep.subr.bf16.mxu0 0
        %1716 = vmatpush1.bf16.xpose.msra.mxu0 0
        %1717 = vmatprep.subr.bf16.mxu0 0
        %1718 = vmatpush1.bf16.xpose.msra.mxu0 0
        %1719 = vmatprep.subr.bf16.mxu0 0
        %1720 = vmatpush1.bf16.xpose.msra.mxu0 0
        %1721 = vmatprep.subr.bf16.mxu0 0
        %1722 = vmatpush1.bf16.xpose.msra.mxu0 0
        %1723 = vmatprep.mubr.bf16.mxu0 0
        %1724 = vmatmul.mubr.bf16.gmra.mrb[0].mxu0 %v1686
        %v1725 = vpop.f32.mrb[0].mxu0
        %v1726 = vadd.f32 %v1571, %v1725
        %v1727 = vpop.f32.mrb[0].mxu0
        %v1728 = vpop.f32.mrb[0].mxu0
        %v1729 = vpop.f32.mrb[0].mxu0
        %1730 = vdwg.mxu0
        %v1731 = vsel %vm878, %v1726, -inf
        %1732 = vmax.xlane.f32.xlu0 %v1731
        %v1733 = vpop.xlane.xlu0 %1732
        %v1734 = vsub.f32 %v1726, %v1733
        %v1735 = vmul.f32 %v1734, 1.442695
        %v1736 = vpow.pop %v1735
        %v1737 = vsel %vm878, %v1736, 0.0
        %1738 = vadd.xlane.f32.xlu0 %v1737
        %v1739 = vpop.xlane.xlu0 %1738
        %v1740 = vrcp.pop %v1739
        %v1741 = vmul.f32 %v1736, %v1740
        %v1742 = vpack.c.bf16 %v1741, %v1741
        %1743 = vrot.lane.b32.xlu0 %v1566, 88
        %v1744 = vpop.permute.xlu0 %1743
        %v1746 = vsel %vm878, %v1742, 0
        %v1749 = vsel %vm942, %v1744, 0
        %1751 = vmatprep.subr.bf16.mxu0 0
        %1752 = vmatpush1.bf16.msra.mxu0 %v1749
        %1753 = vmatprep.subr.bf16.mxu0 0
        %1754 = vmatpush1.bf16.msra.mxu0 0
        %1755 = vmatprep.subr.bf16.mxu0 0
        %1756 = vmatpush1.bf16.msra.mxu0 0
        %1757 = vmatprep.subr.bf16.mxu0 0
        %1758 = vmatpush1.bf16.msra.mxu0 0
        %1759 = vmatprep.subr.bf16.mxu0 0
        %1760 = vmatpush1.bf16.msra.mxu0 0
        %1761 = vmatprep.subr.bf16.mxu0 0
        %1762 = vmatpush1.bf16.msra.mxu0 0
        %1763 = vmatprep.subr.bf16.mxu0 0
        %1764 = vmatpush1.bf16.msra.mxu0 0
        %1765 = vmatprep.subr.bf16.mxu0 0
        %1766 = vmatpush1.bf16.msra.mxu0 0
        %1767 = vmatprep.subr.bf16.mxu0 0
        %1768 = vmatpush1.bf16.msra.mxu0 0
        %1769 = vmatprep.subr.bf16.mxu0 0
        %1770 = vmatpush1.bf16.msra.mxu0 0
        %1771 = vmatprep.subr.bf16.mxu0 0
        %1772 = vmatpush1.bf16.msra.mxu0 0
        %1773 = vmatprep.subr.bf16.mxu0 0
        %1774 = vmatpush1.bf16.msra.mxu0 0
        %1775 = vmatprep.subr.bf16.mxu0 0
        %1776 = vmatpush1.bf16.msra.mxu0 0
        %1777 = vmatprep.subr.bf16.mxu0 0
        %1778 = vmatpush1.bf16.msra.mxu0 0
        %1779 = vmatprep.subr.bf16.mxu0 0
        %1780 = vmatpush1.bf16.msra.mxu0 0
        %1781 = vmatprep.subr.bf16.mxu0 0
        %1782 = vmatpush1.bf16.msra.mxu0 0
        %1783 = vmatprep.mubr.bf16.mxu0 0
        %1784 = vmatmul.mubr.bf16.gmra.mrb[0].mxu0 %v1746
        %v1785 = vpop.f32.mrb[0].mxu0
        %v1786 = vadd.f32 0.0, %v1785
        %v1787 = vpop.f32.mrb[0].mxu0
        %v1788 = vpop.f32.mrb[0].mxu0
        %v1789 = vpop.f32.mrb[0].mxu0
        %1790 = vdwg.mxu0
        %1791 = vrot.lane.b32.xlu0 %v1565, 112
        %v1792 = vpop.permute.xlu0 %1791
        %1793 = vrot.lane.b32.xlu0 %v1566, 112
        %v1794 = vpop.permute.xlu0 %1793
        %v1796 = vsel %vm878, %v1792, 0
        %v1799 = vsel %vm878, %v1794, 0
        %1801 = vmatprep.subr.bf16.mxu0 0
        %1802 = vmatpush1.bf16.xpose.msra.mxu0 %v1799
        %1803 = vmatprep.subr.bf16.mxu0 0
        %1804 = vmatpush1.bf16.xpose.msra.mxu0 0
        %1805 = vmatprep.subr.bf16.mxu0 0
        %1806 = vmatpush1.bf16.xpose.msra.mxu0 0
        %1807 = vmatprep.subr.bf16.mxu0 0
        %1808 = vmatpush1.bf16.xpose.msra.mxu0 0
        %1809 = vmatprep.subr.bf16.mxu0 0
        %1810 = vmatpush1.bf16.xpose.msra.mxu0 0
        %1811 = vmatprep.subr.bf16.mxu0 0
        %1812 = vmatpush1.bf16.xpose.msra.mxu0 0
        %1813 = vmatprep.subr.bf16.mxu0 0
        %1814 = vmatpush1.bf16.xpose.msra.mxu0 0
        %1815 = vmatprep.subr.bf16.mxu0 0
        %1816 = vmatpush1.bf16.xpose.msra.mxu0 0
        %1817 = vmatprep.subr.bf16.mxu0 0
        %1818 = vmatpush1.bf16.xpose.msra.mxu0 0
        %1819 = vmatprep.subr.bf16.mxu0 0
        %1820 = vmatpush1.bf16.xpose.msra.mxu0 0
        %1821 = vmatprep.subr.bf16.mxu0 0
        %1822 = vmatpush1.bf16.xpose.msra.mxu0 0
        %1823 = vmatprep.subr.bf16.mxu0 0
        %1824 = vmatpush1.bf16.xpose.msra.mxu0 0
        %1825 = vmatprep.subr.bf16.mxu0 0
        %1826 = vmatpush1.bf16.xpose.msra.mxu0 0
        %1827 = vmatprep.subr.bf16.mxu0 0
        %1828 = vmatpush1.bf16.xpose.msra.mxu0 0
        %1829 = vmatprep.subr.bf16.mxu0 0
        %1830 = vmatpush1.bf16.xpose.msra.mxu0 0
        %1831 = vmatprep.subr.bf16.mxu0 0
        %1832 = vmatpush1.bf16.xpose.msra.mxu0 0
        %1833 = vmatprep.mubr.bf16.mxu0 0
        %1834 = vmatmul.mubr.bf16.gmra.mrb[0].mxu0 %v1796
        %v1835 = vpop.f32.mrb[0].mxu0
        %v1836 = vadd.f32 %v1571, %v1835
        %v1837 = vpop.f32.mrb[0].mxu0
        %v1838 = vpop.f32.mrb[0].mxu0
        %v1839 = vpop.f32.mrb[0].mxu0
        %1840 = vdwg.mxu0
        %v1841 = vsel %vm878, %v1836, -inf
        %1842 = vmax.xlane.f32.xlu0 %v1841
        %v1843 = vpop.xlane.xlu0 %1842
        %v1844 = vsub.f32 %v1836, %v1843
        %v1845 = vmul.f32 %v1844, 1.442695
        %v1846 = vpow.pop %v1845
        %v1847 = vsel %vm878, %v1846, 0.0
        %1848 = vadd.xlane.f32.xlu0 %v1847
        %v1849 = vpop.xlane.xlu0 %1848
        %v1850 = vrcp.pop %v1849
        %v1851 = vmul.f32 %v1846, %v1850
        %v1852 = vpack.c.bf16 %v1851, %v1851
        %1853 = vrot.lane.b32.xlu0 %v1566, 80
        %v1854 = vpop.permute.xlu0 %1853
        %v1856 = vsel %vm878, %v1852, 0
        %v1859 = vsel %vm942, %v1854, 0
        %1861 = vmatprep.subr.bf16.mxu0 0
        %1862 = vmatpush1.bf16.msra.mxu0 %v1859
        %1863 = vmatprep.subr.bf16.mxu0 0
        %1864 = vmatpush1.bf16.msra.mxu0 0
        %1865 = vmatprep.subr.bf16.mxu0 0
        %1866 = vmatpush1.bf16.msra.mxu0 0
        %1867 = vmatprep.subr.bf16.mxu0 0
        %1868 = vmatpush1.bf16.msra.mxu0 0
        %1869 = vmatprep.subr.bf16.mxu0 0
        %1870 = vmatpush1.bf16.msra.mxu0 0
        %1871 = vmatprep.subr.bf16.mxu0 0
        %1872 = vmatpush1.bf16.msra.mxu0 0
        %1873 = vmatprep.subr.bf16.mxu0 0
        %1874 = vmatpush1.bf16.msra.mxu0 0
        %1875 = vmatprep.subr.bf16.mxu0 0
        %1876 = vmatpush1.bf16.msra.mxu0 0
        %1877 = vmatprep.subr.bf16.mxu0 0
        %1878 = vmatpush1.bf16.msra.mxu0 0
        %1879 = vmatprep.subr.bf16.mxu0 0
        %1880 = vmatpush1.bf16.msra.mxu0 0
        %1881 = vmatprep.subr.bf16.mxu0 0
        %1882 = vmatpush1.bf16.msra.mxu0 0
        %1883 = vmatprep.subr.bf16.mxu0 0
        %1884 = vmatpush1.bf16.msra.mxu0 0
        %1885 = vmatprep.subr.bf16.mxu0 0
        %1886 = vmatpush1.bf16.msra.mxu0 0
        %1887 = vmatprep.subr.bf16.mxu0 0
        %1888 = vmatpush1.bf16.msra.mxu0 0
        %1889 = vmatprep.subr.bf16.mxu0 0
        %1890 = vmatpush1.bf16.msra.mxu0 0
        %1891 = vmatprep.subr.bf16.mxu0 0
        %1892 = vmatpush1.bf16.msra.mxu0 0
        %1893 = vmatprep.mubr.bf16.mxu0 0
        %1894 = vmatmul.mubr.bf16.gmra.mrb[0].mxu0 %v1856
        %v1895 = vpop.f32.mrb[0].mxu0
        %v1896 = vadd.f32 0.0, %v1895
        %v1897 = vpop.f32.mrb[0].mxu0
        %v1898 = vpop.f32.mrb[0].mxu0
        %v1899 = vpop.f32.mrb[0].mxu0
        %1900 = vdwg.mxu0
        %1901 = vrot.lane.b32.xlu0 %v1565, 104
        %v1902 = vpop.permute.xlu0 %1901
        %1903 = vrot.lane.b32.xlu0 %v1566, 104
        %v1904 = vpop.permute.xlu0 %1903
        %v1906 = vsel %vm878, %v1902, 0
        %v1909 = vsel %vm878, %v1904, 0
        %1911 = vmatprep.subr.bf16.mxu0 0
        %1912 = vmatpush1.bf16.xpose.msra.mxu0 %v1909
        %1913 = vmatprep.subr.bf16.mxu0 0
        %1914 = vmatpush1.bf16.xpose.msra.mxu0 0
        %1915 = vmatprep.subr.bf16.mxu0 0
        %1916 = vmatpush1.bf16.xpose.msra.mxu0 0
        %1917 = vmatprep.subr.bf16.mxu0 0
        %1918 = vmatpush1.bf16.xpose.msra.mxu0 0
        %1919 = vmatprep.subr.bf16.mxu0 0
        %1920 = vmatpush1.bf16.xpose.msra.mxu0 0
        %1921 = vmatprep.subr.bf16.mxu0 0
        %1922 = vmatpush1.bf16.xpose.msra.mxu0 0
        %1923 = vmatprep.subr.bf16.mxu0 0
        %1924 = vmatpush1.bf16.xpose.msra.mxu0 0
        %1925 = vmatprep.subr.bf16.mxu0 0
        %1926 = vmatpush1.bf16.xpose.msra.mxu0 0
        %1927 = vmatprep.subr.bf16.mxu0 0
        %1928 = vmatpush1.bf16.xpose.msra.mxu0 0
        %1929 = vmatprep.subr.bf16.mxu0 0
        %1930 = vmatpush1.bf16.xpose.msra.mxu0 0
        %1931 = vmatprep.subr.bf16.mxu0 0
        %1932 = vmatpush1.bf16.xpose.msra.mxu0 0
        %1933 = vmatprep.subr.bf16.mxu0 0
        %1934 = vmatpush1.bf16.xpose.msra.mxu0 0
        %1935 = vmatprep.subr.bf16.mxu0 0
        %1936 = vmatpush1.bf16.xpose.msra.mxu0 0
        %1937 = vmatprep.subr.bf16.mxu0 0
        %1938 = vmatpush1.bf16.xpose.msra.mxu0 0
        %1939 = vmatprep.subr.bf16.mxu0 0
        %1940 = vmatpush1.bf16.xpose.msra.mxu0 0
        %1941 = vmatprep.subr.bf16.mxu0 0
        %1942 = vmatpush1.bf16.xpose.msra.mxu0 0
        %1943 = vmatprep.mubr.bf16.mxu0 0
        %1944 = vmatmul.mubr.bf16.gmra.mrb[0].mxu0 %v1906
        %v1945 = vpop.f32.mrb[0].mxu0
        %v1946 = vadd.f32 %v1571, %v1945
        %v1947 = vpop.f32.mrb[0].mxu0
        %v1948 = vpop.f32.mrb[0].mxu0
        %v1949 = vpop.f32.mrb[0].mxu0
        %1950 = vdwg.mxu0
        %v1951 = vsel %vm878, %v1946, -inf
        %1952 = vmax.xlane.f32.xlu0 %v1951
        %v1953 = vpop.xlane.xlu0 %1952
        %v1954 = vsub.f32 %v1946, %v1953
        %v1955 = vmul.f32 %v1954, 1.442695
        %v1956 = vpow.pop %v1955
        %v1957 = vsel %vm878, %v1956, 0.0
        %1958 = vadd.xlane.f32.xlu0 %v1957
        %v1959 = vpop.xlane.xlu0 %1958
        %v1960 = vrcp.pop %v1959
        %v1961 = vmul.f32 %v1956, %v1960
        %v1962 = vpack.c.bf16 %v1961, %v1961
        %1963 = vrot.lane.b32.xlu0 %v1566, 72
        %v1964 = vpop.permute.xlu0 %1963
        %v1966 = vsel %vm878, %v1962, 0
        %v1969 = vsel %vm942, %v1964, 0
        %1971 = vmatprep.subr.bf16.mxu0 0
        %1972 = vmatpush1.bf16.msra.mxu0 %v1969
        %1973 = vmatprep.subr.bf16.mxu0 0
        %1974 = vmatpush1.bf16.msra.mxu0 0
        %1975 = vmatprep.subr.bf16.mxu0 0
        %1976 = vmatpush1.bf16.msra.mxu0 0
        %1977 = vmatprep.subr.bf16.mxu0 0
        %1978 = vmatpush1.bf16.msra.mxu0 0
        %1979 = vmatprep.subr.bf16.mxu0 0
        %1980 = vmatpush1.bf16.msra.mxu0 0
        %1981 = vmatprep.subr.bf16.mxu0 0
        %1982 = vmatpush1.bf16.msra.mxu0 0
        %1983 = vmatprep.subr.bf16.mxu0 0
        %1984 = vmatpush1.bf16.msra.mxu0 0
        %1985 = vmatprep.subr.bf16.mxu0 0
        %1986 = vmatpush1.bf16.msra.mxu0 0
        %1987 = vmatprep.subr.bf16.mxu0 0
        %1988 = vmatpush1.bf16.msra.mxu0 0
        %1989 = vmatprep.subr.bf16.mxu0 0
        %1990 = vmatpush1.bf16.msra.mxu0 0
        %1991 = vmatprep.subr.bf16.mxu0 0
        %1992 = vmatpush1.bf16.msra.mxu0 0
        %1993 = vmatprep.subr.bf16.mxu0 0
        %1994 = vmatpush1.bf16.msra.mxu0 0
        %1995 = vmatprep.subr.bf16.mxu0 0
        %1996 = vmatpush1.bf16.msra.mxu0 0
        %1997 = vmatprep.subr.bf16.mxu0 0
        %1998 = vmatpush1.bf16.msra.mxu0 0
        %1999 = vmatprep.subr.bf16.mxu0 0
        %2000 = vmatpush1.bf16.msra.mxu0 0
        %2001 = vmatprep.subr.bf16.mxu0 0
        %2002 = vmatpush1.bf16.msra.mxu0 0
        %2003 = vmatprep.mubr.bf16.mxu0 0
        %2004 = vmatmul.mubr.bf16.gmra.mrb[0].mxu0 %v1966
        %v2005 = vpop.f32.mrb[0].mxu0
        %v2006 = vadd.f32 0.0, %v2005
        %v2007 = vpop.f32.mrb[0].mxu0
        %v2008 = vpop.f32.mrb[0].mxu0
        %v2009 = vpop.f32.mrb[0].mxu0
        %2010 = vdwg.mxu0
        %2012 = vrot.lane.b32.xlu0 %v1786, 8
        %v2013 = vpop.permute.xlu0 %2012
        %2016 = vrot.lane.b32.xlu0 %v1896, 16
        %v2017 = vpop.permute.xlu0 %2016
        %2020 = vrot.lane.b32.xlu0 %v2006, 24
        %v2021 = vpop.permute.xlu0 %2020
        %v2023 = vsel %vm878, %v1675, %v2013
        %v2024 = vsel %vm1329, %v2023, %v2017
        %v2025 = vsel %vm1331, %v2024, %v2021
        %v2026 = vpack.c.bf16 %v2025, %v2025
        %v2028 = vlaneseq
        %v2029 = vshrl.u32 %v2028, 7
        %v2030 = vsub.s32 0, %v2029
        %v2031 = vrot.slane %v1564, %v2030
        %v2037 = vunpack.c.l.b16 %v1560
        %v2038 = vunpack.c.l.b16 %v1561
        %v2039 = vunpack.c.l.b16 %v1562
        %v2040 = vunpack.c.l.b16 %v1563
        %v2041 = vpack.c.b16 %v2038, %v2037
        %v2042 = vpack.c.b16 %v2040, %v2039
        %v2046 = vsel %vm825, %v2026, 0
        %2048 = vmatprep.subr.bf16.mxu0 0
        %2049 = vmatpush1.bf16.msra.mxu0 %v2041
        %2050 = vmatprep.subr.bf16.mxu0 0
        %2051 = vmatpush1.bf16.msra.mxu0 %v2042
        %2052 = vmatprep.subr.bf16.mxu0 0
        %2053 = vmatpush1.bf16.msra.mxu0 0
        %2054 = vmatprep.subr.bf16.mxu0 0
        %2055 = vmatpush1.bf16.msra.mxu0 0
        %2056 = vmatprep.subr.bf16.mxu0 0
        %2057 = vmatpush1.bf16.msra.mxu0 0
        %2058 = vmatprep.subr.bf16.mxu0 0
        %2059 = vmatpush1.bf16.msra.mxu0 0
        %2060 = vmatprep.subr.bf16.mxu0 0
        %2061 = vmatpush1.bf16.msra.mxu0 0
        %2062 = vmatprep.subr.bf16.mxu0 0
        %2063 = vmatpush1.bf16.msra.mxu0 0
        %2064 = vmatprep.subr.bf16.mxu0 0
        %2065 = vmatpush1.bf16.msra.mxu0 0
        %2066 = vmatprep.subr.bf16.mxu0 0
        %2067 = vmatpush1.bf16.msra.mxu0 0
        %2068 = vmatprep.subr.bf16.mxu0 0
        %2069 = vmatpush1.bf16.msra.mxu0 0
        %2070 = vmatprep.subr.bf16.mxu0 0
        %2071 = vmatpush1.bf16.msra.mxu0 0
        %2072 = vmatprep.subr.bf16.mxu0 0
        %2073 = vmatpush1.bf16.msra.mxu0 0
        %2074 = vmatprep.subr.bf16.mxu0 0
        %2075 = vmatpush1.bf16.msra.mxu0 0
        %2076 = vmatprep.subr.bf16.mxu0 0
        %2077 = vmatpush1.bf16.msra.mxu0 0
        %2078 = vmatprep.subr.bf16.mxu0 0
        %2079 = vmatpush1.bf16.msra.mxu0 0
        %2080 = vmatprep.mubr.bf16.mxu0 0
        %2081 = vmatmul.mubr.bf16.gmra.mrb[0].mxu0 %v2046
        %v2082 = vpop.f32.mrb[0].mxu0
        %v2083 = vadd.f32 %v2031, %v2082
        %v2084 = vpop.f32.mrb[0].mxu0
        %v2085 = vpop.f32.mrb[0].mxu0
        %v2086 = vpop.f32.mrb[0].mxu0
        %2087 = vdwg.mxu0
        %v2088 = vadd.f32 %v1425, %v2083
        %v2089 = vld [vmem:[%s16] sm:$0x1]
        %v2090 = vld [vmem:[%s17] sm:$0x1]
        %v2091 = vsel %vm825, %v2088, 0.0
        %2092 = vadd.xlane.f32.xlu0 %v2091
        %v2093 = vpop.xlane.xlu0 %2092
        %v2094 = vmul.f32 %v2093, %v1401
        %v2095 = vsub.f32 %v2088, %v2094
        %v2096 = vmul.f32 %v2095, %v2095
        %v2097 = vsel %vm825, %v2096, 0.0
        %2098 = vadd.xlane.f32.xlu0 %v2097
        %v2099 = vpop.xlane.xlu0 %2098
        %v2100 = vmul.f32 %v2099, %v1401
        %v2101 = vadd.f32 %v2100, 1e-05
        %v2102 = vrsqrt.pop %v2101
        %v2103 = vmul.f32 %v2095, %v2102
        %v2105 = vlaneseq
        %v2106 = vshrl.u32 %v2105, 7
        %v2107 = vsub.s32 0, %v2106
        %v2108 = vrot.slane %v2089, %v2107
        %v2110 = vmul.f32 %v2103, %v2108
        %v2112 = vlaneseq
        %v2113 = vshrl.u32 %v2112, 7
        %v2114 = vsub.s32 0, %v2113
        %v2115 = vrot.slane %v2090, %v2114
        %v2117 = vadd.f32 %v2110, %v2115
        %v2118 = vld [vmem:[%s18] sm:$0xf]
        %v2119 = vld [vmem:[%s18 + $0x4] sm:$0xf]
        %v2120 = vld [vmem:[%s18 + $0x8] sm:$0xf]
        %v2121 = vld [vmem:[%s18 + $0xc] sm:$0xf]
        %v2122 = vld [vmem:[%s19] sm:$0x1]
        %v2123 = vld [vmem:[%s20] sm:$0xf]
        %v2124 = vld [vmem:[%s20 + $0x4] sm:$0xf]
        %v2125 = vld [vmem:[%s20 + $0x8] sm:$0xf]
        %v2126 = vld [vmem:[%s20 + $0xc] sm:$0xf]
        %v2127 = vld [vmem:[%s20 + $0x10] sm:$0xf]
        %v2128 = vld [vmem:[%s20 + $0x14] sm:$0xf]
        %v2129 = vld [vmem:[%s20 + $0x18] sm:$0xf]
        %v2130 = vld [vmem:[%s20 + $0x1c] sm:$0xf]
        %v2131 = vld [vmem:[%s21] sm:$0x1]
        %v2132 = vpack.c.bf16 %v2117, %v2117
        %v2134 = vlaneseq
        %v2135 = vshrl.u32 %v2134, 7
        %v2136 = vsub.s32 0, %v2135
        %v2137 = vrot.slane %v2122, %v2136
        %v2143 = vunpack.c.l.b16 %v2118
        %v2144 = vunpack.c.l.b16 %v2119
        %v2145 = vunpack.c.l.b16 %v2120
        %v2146 = vunpack.c.l.b16 %v2121
        %v2147 = vpack.c.b16 %v2144, %v2143
        %v2148 = vpack.c.b16 %v2146, %v2145
        %v2152 = vsel %vm825, %v2132, 0
        %2154 = vmatprep.subr.bf16.mxu0 0
        %2155 = vmatpush1.bf16.msra.mxu0 %v2147
        %2156 = vmatprep.subr.bf16.mxu0 0
        %2157 = vmatpush1.bf16.msra.mxu0 %v2148
        %2158 = vmatprep.subr.bf16.mxu0 0
        %2159 = vmatpush1.bf16.msra.mxu0 0
        %2160 = vmatprep.subr.bf16.mxu0 0
        %2161 = vmatpush1.bf16.msra.mxu0 0
        %2162 = vmatprep.subr.bf16.mxu0 0
        %2163 = vmatpush1.bf16.msra.mxu0 0
        %2164 = vmatprep.subr.bf16.mxu0 0
        %2165 = vmatpush1.bf16.msra.mxu0 0
        %2166 = vmatprep.subr.bf16.mxu0 0
        %2167 = vmatpush1.bf16.msra.mxu0 0
        %2168 = vmatprep.subr.bf16.mxu0 0
        %2169 = vmatpush1.bf16.msra.mxu0 0
        %2170 = vmatprep.subr.bf16.mxu0 0
        %2171 = vmatpush1.bf16.msra.mxu0 0
        %2172 = vmatprep.subr.bf16.mxu0 0
        %2173 = vmatpush1.bf16.msra.mxu0 0
        %2174 = vmatprep.subr.bf16.mxu0 0
        %2175 = vmatpush1.bf16.msra.mxu0 0
        %2176 = vmatprep.subr.bf16.mxu0 0
        %2177 = vmatpush1.bf16.msra.mxu0 0
        %2178 = vmatprep.subr.bf16.mxu0 0
        %2179 = vmatpush1.bf16.msra.mxu0 0
        %2180 = vmatprep.subr.bf16.mxu0 0
        %2181 = vmatpush1.bf16.msra.mxu0 0
        %2182 = vmatprep.subr.bf16.mxu0 0
        %2183 = vmatpush1.bf16.msra.mxu0 0
        %2184 = vmatprep.subr.bf16.mxu0 0
        %2185 = vmatpush1.bf16.msra.mxu0 0
        %2186 = vmatprep.mubr.bf16.mxu0 0
        %2187 = vmatmul.mubr.bf16.gmra.mrb[0].mxu0 %v2152
        %v2188 = vpop.f32.mrb[0].mxu0
        %v2189 = vadd.f32 %v2137, %v2188
        %v2190 = vpop.f32.mrb[0].mxu0
        %v2191 = vpop.f32.mrb[0].mxu0
        %v2192 = vpop.f32.mrb[0].mxu0
        %2193 = vdwg.mxu0
        %v2194 = vmax.f32 %v2189, 0.0
        %v2195 = vpack.c.bf16 %v2194, %v2194
        %v2197 = vlaneseq
        %v2198 = vshrl.u32 %v2197, 7
        %v2199 = vsub.s32 0, %v2198
        %v2200 = vrot.slane %v2131, %v2199
        %v2210 = vunpack.c.l.b16 %v2123
        %v2211 = vunpack.c.l.b16 %v2124
        %v2212 = vunpack.c.l.b16 %v2125
        %v2213 = vunpack.c.l.b16 %v2126
        %v2214 = vunpack.c.l.b16 %v2127
        %v2215 = vunpack.c.l.b16 %v2128
        %v2216 = vunpack.c.l.b16 %v2129
        %v2217 = vunpack.c.l.b16 %v2130
        %v2218 = vpack.c.b16 %v2211, %v2210
        %v2219 = vpack.c.b16 %v2213, %v2212
        %v2220 = vpack.c.b16 %v2215, %v2214
        %v2221 = vpack.c.b16 %v2217, %v2216
        %vm2226 = vcmask 523264
        %v2228 = vsel %vm2226, %v2195, 0
        %2230 = vmatprep.subr.bf16.mxu0 0
        %2231 = vmatpush1.bf16.msra.mxu0 %v2218
        %2232 = vmatprep.subr.bf16.mxu0 0
        %2233 = vmatpush1.bf16.msra.mxu0 %v2219
        %2234 = vmatprep.subr.bf16.mxu0 0
        %2235 = vmatpush1.bf16.msra.mxu0 %v2220
        %2236 = vmatprep.subr.bf16.mxu0 0
        %2237 = vmatpush1.bf16.msra.mxu0 %v2221
        %2238 = vmatprep.subr.bf16.mxu0 0
        %2239 = vmatpush1.bf16.msra.mxu0 0
        %2240 = vmatprep.subr.bf16.mxu0 0
        %2241 = vmatpush1.bf16.msra.mxu0 0
        %2242 = vmatprep.subr.bf16.mxu0 0
        %2243 = vmatpush1.bf16.msra.mxu0 0
        %2244 = vmatprep.subr.bf16.mxu0 0
        %2245 = vmatpush1.bf16.msra.mxu0 0
        %2246 = vmatprep.subr.bf16.mxu0 0
        %2247 = vmatpush1.bf16.msra.mxu0 0
        %2248 = vmatprep.subr.bf16.mxu0 0
        %2249 = vmatpush1.bf16.msra.mxu0 0
        %2250 = vmatprep.subr.bf16.mxu0 0
        %2251 = vmatpush1.bf16.msra.mxu0 0
        %2252 = vmatprep.subr.bf16.mxu0 0
        %2253 = vmatpush1.bf16.msra.mxu0 0
        %2254 = vmatprep.subr.bf16.mxu0 0
        %2255 = vmatpush1.bf16.msra.mxu0 0
        %2256 = vmatprep.subr.bf16.mxu0 0
        %2257 = vmatpush1.bf16.msra.mxu0 0
        %2258 = vmatprep.subr.bf16.mxu0 0
        %2259 = vmatpush1.bf16.msra.mxu0 0
        %2260 = vmatprep.subr.bf16.mxu0 0
        %2261 = vmatpush1.bf16.msra.mxu0 0
        %2262 = vmatprep.mubr.bf16.mxu0 0
        %2263 = vmatmul.mubr.bf16.gmra.mrb[0].mxu0 %v2228
        %v2264 = vpop.f32.mrb[0].mxu0
        %v2265 = vadd.f32 %v2200, %v2264
        %v2266 = vpop.f32.mrb[0].mxu0
        %v2267 = vpop.f32.mrb[0].mxu0
        %v2268 = vpop.f32.mrb[0].mxu0
        %2269 = vdwg.mxu0
        %v2270 = vadd.f32 %v2117, %v2265
        %v2271 = vld [vmem:[%s22] sm:$0x1]
        %v2272 = vld [vmem:[%s23] sm:$0x1]
        %v2273 = vsel %vm825, %v2270, 0.0
        %2274 = vadd.xlane.f32.xlu0 %v2273
        %v2275 = vpop.xlane.xlu0 %2274
        %v2276 = vmul.f32 %v2275, %v1401
        %v2277 = vsub.f32 %v2270, %v2276
        %v2278 = vmul.f32 %v2277, %v2277
        %v2279 = vsel %vm825, %v2278, 0.0
        %2280 = vadd.xlane.f32.xlu0 %v2279
        %v2281 = vpop.xlane.xlu0 %2280
        %v2282 = vmul.f32 %v2281, %v1401
        %v2283 = vadd.f32 %v2282, 1e-05
        %v2284 = vrsqrt.pop %v2283
        %v2285 = vmul.f32 %v2277, %v2284
        %v2287 = vlaneseq
        %v2288 = vshrl.u32 %v2287, 7
        %v2289 = vsub.s32 0, %v2288
        %v2290 = vrot.slane %v2271, %v2289
        %v2292 = vmul.f32 %v2285, %v2290
        %v2294 = vlaneseq
        %v2295 = vshrl.u32 %v2294, 7
        %v2296 = vsub.s32 0, %v2295
        %v2297 = vrot.slane %v2272, %v2296
        %v2299 = vadd.f32 %v2292, %v2297
        %2300 = vst.msk [vmem:[%s765] sm:$0xff] %vm825, %v2299
        %s2301 = sand.u32 %s570, 1
        %s2302 = scalar_lea.sflag [#allocation3], %s2301
        %s2303 = sand.u32 %s570, 1
        %s2304 = smul.addr %s2303, 8
        %s2305 = scalar_lea.vmem [#allocation2], %s2304
        // Predicated region
        $region117: #{transformer_forward.5} parent=115 // pred_check
          %p2306 = pneg %p580
        $region118: #{transformer_forward.5} parent=115 // pred_check_branch
          %2308 = sbr.rel (%p2306) target = $region120
        $region119: #{transformer_forward.5} parent=115 // pred_region
          %s2310 = ssub.s32 128, 128
          %2311 = vsyncadd %s2302, %s2310
          %s2312 = smul.addr %s38, 128
          %s2313 = scalar_lea.hbm %s24, %s2312
          %s2315 = sshll.u32 %s2305, 4
          %s2316 = int_to_ptr.vmem [resolvable:$true] %s2315
          %2318 = dma.vmem_to_hbm [thread:$0]  %s2316, 128, %s2313, %s2302
        $region120: #{transformer_forward.5} parent=115 // pred_fallthru
          _
      $region116: #{transformer_forward.5} parent=5 // pred_fallthru
        _
      %p2319 = scmp.le.s32.totalorder 2, %s33
      // Predicated region
      $region121: #{transformer_forward.5} parent=5 // pred_check
        %p2320 = pneg %p2319
      $region122: #{transformer_forward.5} parent=5 // pred_check_branch
        %2322 = sbr.rel (%p2320) target = $region124
      $region123: #{transformer_forward.5} parent=5 // pred_region
        %s2323 = ssub.s32 %s33, 2
        // Predicated region
        $region125: #{transformer_forward.5} parent=123 // pred_check
          %p2324 = pneg %p586
        $region126: #{transformer_forward.5} parent=123 // pred_check_branch
          %2326 = sbr.rel (%p2324) target = $region128
        $region127: #{transformer_forward.5} parent=123 // pred_region
          %s2327 = sand.u32 %s571, 1
          %s2328 = scalar_lea.sflag [#allocation3], %s2327
          %s2329 = sand.u32 %s571, 1
          %s2330 = smul.addr %s2329, 8
          %s2331 = scalar_lea.vmem [#allocation2], %s2330
          %2332 = dma.done %s2328, 128
        $region128: #{transformer_forward.5} parent=123 // pred_fallthru
          _
      $region124: #{transformer_forward.5} parent=5 // pred_fallthru
        _
    $region6: #{transformer_forward.5} parent=1 // loop_footer
      %s37 = sadd.s32 1, %s33
    $region7: #{transformer_forward.5} parent=1 // loop_footer_branch
      %32 = sbr.rel target = $region3
    $region8: #{transformer_forward.5} parent=1 // loop_exit
      _
    %2333 = vsyncpa [#allocation3], 1
    %s2334 = scalar_lea.sflag [#allocation3], 1
    %2335 = vsyncpa %s2334, 1

</llo_original>
